<compile_context>
chip_gen: v6e
topology: v6e:2x2x1
jax: 0.10.0
libtpu: 0.0.40
codegen_flags: <defaults>
</compile_context>

<pallas_src>
import functools

import jax
import jax.numpy as jnp
from jax import lax
from jax.experimental import pallas as pl
from jax.experimental.pallas import tpu as pltpu

K = 7          # depthwise kernel size
PAD = 3        # depthwise padding
GN_EPS = 1e-5  # PyTorch GroupNorm default eps
INV_SQRT2 = 0.7071067811865476


def _ceil_div(a, b):
    return -(-a // b)


def bottleneck_kernel(x_ref, wdw_ref, gnw_ref, gnb_ref, w1_ref, b1_ref,
                      w2_ref, b2_ref, gamma_ref, o_ref,
                      xpad_ref, dw_ref, *, th1, th2):
    # x_ref: (H, W, C) unpadded input block; o_ref: (H, W, C)
    # xpad_ref: (H+6, Wpad, C) zero-ringed halo scratch (Wpad % 8 == 0)
    # dw_ref: (H*W, C) bf16 depthwise-conv output scratch
    H, W, C = o_ref.shape
    _, Wpad, _ = xpad_ref.shape
    xdt = xpad_ref.dtype

    # ---- build the 3-pixel halo in VMEM (no wrapper-side jnp.pad) ----
    # The halo ring is re-zeroed every grid step: the scratch persists across
    # steps and may live on either TensorCore, so no "only at b == 0" trick.
    xpad_ref[pl.ds(0, PAD), :, :] = jnp.zeros((PAD, Wpad, C), xdt)
    xpad_ref[pl.ds(PAD + H, PAD), :, :] = jnp.zeros((PAD, Wpad, C), xdt)
    xpad_ref[pl.ds(PAD, H), pl.ds(0, PAD), :] = jnp.zeros((H, PAD, C), xdt)
    rw = Wpad - (PAD + W)
    xpad_ref[pl.ds(PAD, H), pl.ds(PAD + W, rw), :] = jnp.zeros((H, rw, C), xdt)
    xpad_ref[pl.ds(PAD, H), pl.ds(PAD, W), :] = x_ref[...]

    wdw = wdw_ref[...].astype(jnp.float32)                       # (7, 7, C)

    # ---- pass 1: depthwise 7x7 over row strips + GroupNorm vector partials ----
    def dw_strip(row0, th, sum_c, sq_c):
        n = th * Wpad
        acc = jnp.zeros((n, C), jnp.float32)
        for kh in range(K):
            slab = xpad_ref[pl.ds(row0 + kh, th), :, :].astype(jnp.float32)
            slab = slab.reshape(n, C)          # free: Wpad is a multiple of 8
            acc = acc + slab * wdw[kh, 0, :]
            for kw in range(1, K):
                # result[j] = slab[j + kw]; wrap lands only in the discarded
                # padded columns (kw <= 6 <= Wpad - W).
                shifted = pltpu.roll(slab, n - kw, axis=0)       # XLU sublane roll
                acc = acc + shifted * wdw[kh, kw, :]
        valid = acc.reshape(th, Wpad, C)[:, :W, :]               # (th, W, C)
        dw_ref[pl.ds(row0 * W, th * W), :] = (
            valid.reshape(th * W, C).astype(dw_ref.dtype))
        sum_c = sum_c + jnp.sum(valid, axis=0)                   # (W, C), VALU only
        sq_c = sq_c + jnp.sum(valid * valid, axis=0)
        return sum_c, sq_c

    n1 = H // th1
    r1 = H - n1 * th1
    zero_wc = jnp.zeros((W, C), jnp.float32)

    def body1(i, carry):
        return dw_strip(i * th1, th1, *carry)

    sum_c, sq_c = lax.fori_loop(0, n1, body1, (zero_wc, zero_wc))
    if r1:
        sum_c, sq_c = dw_strip(n1 * th1, r1, sum_c, sq_c)

    # GroupNorm(num_groups=1): stats over (C,H,W) per sample; single pass
    # E[x^2]-E[x]^2 from f32 vector partials, reduced cross-lane exactly once.
    inv_n = jnp.float32(1.0 / (H * W * C))
    mean = jnp.sum(sum_c) * inv_n
    var = jnp.maximum(jnp.sum(sq_c) * inv_n - mean * mean, 0.0)
    rstd = lax.rsqrt(var + GN_EPS)

    gnw = gnw_ref[...].astype(jnp.float32)                       # (1, C)
    gnb = gnb_ref[...].astype(jnp.float32)                       # (1, C)
    scale_c = gnw * rstd                 # fold normalize + affine into 1 FMA
    shift_c = gnb - mean * scale_c
    b1 = b1_ref[...].astype(jnp.float32)                         # (1, E)
    b2 = b2_ref[...].astype(jnp.float32)                         # (1, C)
    gamma = gamma_ref[...].astype(jnp.float32)                   # (1, C)

    # ---- pass 2: GN affine + bf16 MXU MLP + exact GELU + scale + residual ----
    def mlp_strip(row0, th):
        m = th * W
        xs = dw_ref[pl.ds(row0 * W, m), :].astype(jnp.float32)   # (m, C)
        h = (xs * scale_c + shift_c).astype(jnp.bfloat16)
        y1 = jnp.dot(h, w1_ref[...], preferred_element_type=jnp.float32) + b1
        y1 = 0.5 * y1 * (1.0 + lax.erf(y1 * INV_SQRT2))          # exact GELU
        y2 = jnp.dot(y1.astype(jnp.bfloat16), w2_ref[...],
                     preferred_element_type=jnp.float32) + b2
        # residual: center of the already-resident halo scratch (no extra DMA)
        res = xpad_ref[pl.ds(row0 + PAD, th), pl.ds(PAD, W), :].astype(jnp.float32)
        out = (gamma * y2).reshape(th, W, C) + res
        o_ref[pl.ds(row0, th), :, :] = out.astype(o_ref.dtype)

    n2 = H // th2
    r2 = H - n2 * th2

    def body2(j, carry):
        mlp_strip(j * th2, th2)
        return carry

    lax.fori_loop(0, n2, body2, 0)
    if r2:
        mlp_strip(n2 * th2, r2)


def bottleneck_block(x_nchw, params):
    """x_nchw: (B, C, H, W). Returns (B, C, H, W), matching the PyTorch module."""
    B, C, H, W = x_nchw.shape
    E = params["w1"].shape[1]

    # NHWC: channels on the TPU lane axis.
    # TODO(synk): the NCHW<->NHWC transposes are still wrapper-side XLA ops;
    # folding them into the kernel needs a channels-on-sublane depthwise variant.
    x = jnp.transpose(x_nchw, (0, 2, 3, 1))

    # bf16 weights for the two 1x1-conv matmuls (f32 accumulation in-kernel).
    w1 = params["w1"].astype(jnp.bfloat16)
    w2 = params["w2"].astype(jnp.bfloat16)

    Hp = H + 2 * PAD
    Wpad = _ceil_div(W + 2 * PAD, 8) * 8            # sublane-aligned halo width

    # Strip sizes:
    #   pass 1: acc + slab + rolled temp must stay inside the 64-vreg file
    #   pass 2: M = th2*W ~ 512 rows to amortize MXU weight pushes (safe on
    #           v7x VMEM as well)
    wp_tiles = Wpad // 8
    c_tiles = _ceil_div(C, 128)
    th1 = max(1, min(H, 12 // max(1, wp_tiles * c_tiles)))
    th2 = max(1, min(H, 512 // max(W, 1)))

    isz = x.dtype.itemsize
    est = (2 * H * W * C * isz            # input block (double-buffered)
           + 2 * H * W * C * isz          # output block (double-buffered)
           + Hp * Wpad * C * isz          # in-kernel halo scratch
           + H * W * C * 2                # bf16 depthwise scratch
           + 2 * 2 * (C * E + E * C)      # bf16 1x1 weights (double-buffered)
           + 2 * th2 * W * E * 4          # pass-2 strip intermediates headroom
           + (K * K + 8) * C * 4)
    try:
        vmem_cap = int(pltpu.get_tpu_info().vmem_capacity_bytes)
    except Exception:
        vmem_cap = 64 * 1024 * 1024       # conservative (v7x per-TC VMEM)
    vmem_limit = int(min(max(int(1.5 * est), 32 * 1024 * 1024),
                         int(0.85 * vmem_cap)))

    kernel = functools.partial(bottleneck_kernel, th1=th1, th2=th2)

    out = pl.pallas_call(
        kernel,
        out_shape=jax.ShapeDtypeStruct((B, H, W, C), x.dtype),
        grid_spec=pltpu.PrefetchScalarGridSpec(
            num_scalar_prefetch=0,
            grid=(B,),
            in_specs=[
                pl.BlockSpec((None, H, W, C), lambda b: (b, 0, 0, 0)),
                pl.BlockSpec((K, K, C), lambda b: (0, 0, 0)),
                pl.BlockSpec((1, C), lambda b: (0, 0)),
                pl.BlockSpec((1, C), lambda b: (0, 0)),
                pl.BlockSpec((C, E), lambda b: (0, 0)),
                pl.BlockSpec((1, E), lambda b: (0, 0)),
                pl.BlockSpec((E, C), lambda b: (0, 0)),
                pl.BlockSpec((1, C), lambda b: (0, 0)),
                pl.BlockSpec((1, C), lambda b: (0, 0)),
            ],
            out_specs=pl.BlockSpec((None, H, W, C), lambda b: (b, 0, 0, 0)),
            scratch_shapes=[
                pltpu.VMEM((Hp, Wpad, C), x.dtype),     # zero-ringed halo copy
                pltpu.VMEM((H * W, C), jnp.bfloat16),   # depthwise output
            ],
        ),
        compiler_params=pltpu.CompilerParams(
            dimension_semantics=("parallel",),
            vmem_limit_bytes=vmem_limit,
        ),
    )(x, params["w_dw"], params["gn_w"], params["gn_b"],
      w1, params["b1"], w2, params["b2"], params["gamma"])

    return jnp.transpose(out, (0, 3, 1, 2))                      # back to NCHW


def init_params(key, in_features, out_features, expansion=4,
                layer_scaler_init_value=1e-6, dtype=jnp.float32):
    assert in_features == out_features, "residual add requires in == out features"
    C, E = in_features, out_features * expansion
    k = jax.random.split(key, 5)
    scale = 0.1
    return {
        # depthwise conv weight, PyTorch shape (C,1,7,7) stored here as (7,7,C)
        "w_dw": scale * jax.random.normal(k[0], (K, K, C), dtype),
        # GroupNorm affine (PyTorch init: weight=1, bias=0)
        "gn_w": jnp.ones((1, C), dtype),
        "gn_b": jnp.zeros((1, C), dtype),
        # 1x1 conv C -> E, PyTorch weight (E,C,1,1) stored as (C,E)
        "w1": scale * jax.random.normal(k[1], (C, E), dtype),
        "b1": scale * jax.random.normal(k[2], (1, E), dtype),
        # 1x1 conv E -> C, PyTorch weight (C,E,1,1) stored as (E,C)
        "w2": scale * jax.random.normal(k[3], (E, C), dtype),
        "b2": scale * jax.random.normal(k[4], (1, C), dtype),
        # layer scaler gamma
        "gamma": layer_scaler_init_value * jnp.ones((1, C), dtype),
    }


def reference_forward(x_nchw, params):
    """Pure-JAX (XLA) reference mirroring the PyTorch module, NCHW layout."""
    C = x_nchw.shape[1]
    # depthwise conv 7x7
    w_dw_oihw = jnp.transpose(params["w_dw"], (2, 0, 1))[:, None, :, :]   # (C,1,7,7)
    y = lax.conv_general_dilated(
        x_nchw, w_dw_oihw, window_strides=(1, 1),
        padding=((PAD, PAD), (PAD, PAD)),
        dimension_numbers=("NCHW", "OIHW", "NCHW"),
        feature_group_count=C)
    # GroupNorm(num_groups=1)
    mean = jnp.mean(y, axis=(1, 2, 3), keepdims=True)
    var = jnp.mean((y - mean) ** 2, axis=(1, 2, 3), keepdims=True)
    y = (y - mean) * lax.rsqrt(var + GN_EPS)
    y = y * params["gn_w"][0][None, :, None, None] + params["gn_b"][0][None, :, None, None]
    # 1x1 conv -> GELU (exact) -> 1x1 conv
    y = jnp.einsum("bchw,ce->behw", y, params["w1"]) + params["b1"][0][None, :, None, None]
    y = 0.5 * y * (1.0 + lax.erf(y * INV_SQRT2))
    y = jnp.einsum("behw,ec->bchw", y, params["w2"]) + params["b2"][0][None, :, None, None]
    # layer scale + residual
    y = params["gamma"][0][None, :, None, None] * y
    return y + x_nchw


if __name__ == "__main__":
    B, C, H, W = 2, 4, 16, 16
    key = jax.random.PRNGKey(0)
    kx, kp = jax.random.split(key)

    x = jax.random.normal(kx, (B, C, H, W), jnp.float32)

    # 1) module-default layer scale (1e-6): output is residual-dominated
    params = init_params(kp, in_features=C, out_features=C, expansion=4,
                         layer_scaler_init_value=1e-6)
    out = jax.block_until_ready(bottleneck_block(x, params))
    ref = jax.block_until_ready(reference_forward(x, params))
    assert out.shape == (B, C, H, W)
    assert jnp.allclose(out, ref, atol=1e-4, rtol=1e-4), "mismatch vs reference (gamma=1e-6)"

    # 2) stronger check of the GN/MLP branch with gamma=1. The kernel uses bf16
    #    matmul operands and a bf16 depthwise scratch vs the f32 reference, so
    #    tolerance is relaxed accordingly (inference-grade precision).
    params_big = init_params(kp, in_features=C, out_features=C, expansion=4,
                             layer_scaler_init_value=1.0)
    out_big = jax.block_until_ready(bottleneck_block(x, params_big))
    ref_big = jax.block_until_ready(reference_forward(x, params_big))
    assert jnp.allclose(out_big, ref_big, atol=2e-2, rtol=2e-2), "mismatch vs reference (gamma=1)"

    print("KERNEL_OK")
</pallas_src>

<mosaic_0001>
module attributes {stable_mosaic.version = 11 : i64} {
  func.func @bottleneck_kernel(%arg0: i32, %arg1: memref<1x16x16x4xf32, #tpu.memory_space<vmem>>, %arg2: memref<7x7x4xf32, #tpu.memory_space<vmem>>, %arg3: memref<1x4xf32, #tpu.memory_space<vmem>>, %arg4: memref<1x4xf32, #tpu.memory_space<vmem>>, %arg5: memref<4x16xbf16, #tpu.memory_space<vmem>>, %arg6: memref<1x16xf32, #tpu.memory_space<vmem>>, %arg7: memref<16x4xbf16, #tpu.memory_space<vmem>>, %arg8: memref<1x4xf32, #tpu.memory_space<vmem>>, %arg9: memref<1x4xf32, #tpu.memory_space<vmem>>, %arg10: memref<1x16x16x4xf32, #tpu.memory_space<vmem>>, %arg11: memref<22x24x4xf32, #tpu.memory_space<vmem>>, %arg12: memref<256x4xbf16, #tpu.memory_space<vmem>>) attributes {dimension_semantics = [#tpu.dimension_semantics<parallel>], iteration_bounds = array<i64: 2>, scalar_prefetch = 0 : i64, scratch_operands = 2 : i64, tpu.core_type = #tpu.core_type<tc>, window_params = [{transform_indices = @transform_0, window_bounds = array<i64: 1, 16, 16, 4>}, {pipeline_mode = #tpu.pipeline_mode<synchronous>, transform_indices = @transform_1, window_bounds = array<i64: 7, 7, 4>}, {pipeline_mode = #tpu.pipeline_mode<synchronous>, transform_indices = @transform_2, window_bounds = array<i64: 1, 4>}, {pipeline_mode = #tpu.pipeline_mode<synchronous>, transform_indices = @transform_3, window_bounds = array<i64: 1, 4>}, {pipeline_mode = #tpu.pipeline_mode<synchronous>, transform_indices = @transform_4, window_bounds = array<i64: 4, 16>}, {pipeline_mode = #tpu.pipeline_mode<synchronous>, transform_indices = @transform_5, window_bounds = array<i64: 1, 16>}, {pipeline_mode = #tpu.pipeline_mode<synchronous>, transform_indices = @transform_6, window_bounds = array<i64: 16, 4>}, {pipeline_mode = #tpu.pipeline_mode<synchronous>, transform_indices = @transform_7, window_bounds = array<i64: 1, 4>}, {pipeline_mode = #tpu.pipeline_mode<synchronous>, transform_indices = @transform_8, window_bounds = array<i64: 1, 4>}, {transform_indices = @transform_9, window_bounds = array<i64: 1, 16, 16, 4>}]} {
    %cst = arith.constant 0.000000e+00 : f32
    %0 = vector.broadcast %cst : f32 to vector<3x24x4xf32>
    %c0 = arith.constant 0 : index
    %c0_0 = arith.constant 0 : index
    %c0_1 = arith.constant 0 : index
    %1 = vector.load %arg11[%c0, %c0_0, %c0_1] : memref<22x24x4xf32, #tpu.memory_space<vmem>>, vector<3x24x4xf32>
    tpu.vector_store %arg11[%c0, %c0_0, %c0_1], %0 {strides = array<i32>} : memref<22x24x4xf32, #tpu.memory_space<vmem>>, vector<3x24x4xf32>,
    %cst_2 = arith.constant 0.000000e+00 : f32
    %2 = vector.broadcast %cst_2 : f32 to vector<3x24x4xf32>
    %c19 = arith.constant 19 : index
    %c0_3 = arith.constant 0 : index
    %c0_4 = arith.constant 0 : index
    %3 = vector.load %arg11[%c19, %c0_3, %c0_4] : memref<22x24x4xf32, #tpu.memory_space<vmem>>, vector<3x24x4xf32>
    tpu.vector_store %arg11[%c19, %c0_3, %c0_4], %2 {strides = array<i32>} : memref<22x24x4xf32, #tpu.memory_space<vmem>>, vector<3x24x4xf32>,
    %cst_5 = arith.constant 0.000000e+00 : f32
    %4 = vector.broadcast %cst_5 : f32 to vector<16x3x4xf32>
    %c3 = arith.constant 3 : index
    %c0_6 = arith.constant 0 : index
    %c0_7 = arith.constant 0 : index
    %5 = vector.load %arg11[%c3, %c0_6, %c0_7] : memref<22x24x4xf32, #tpu.memory_space<vmem>>, vector<16x3x4xf32>
    tpu.vector_store %arg11[%c3, %c0_6, %c0_7], %4 {strides = array<i32>} : memref<22x24x4xf32, #tpu.memory_space<vmem>>, vector<16x3x4xf32>,
    %cst_8 = arith.constant 0.000000e+00 : f32
    %6 = vector.broadcast %cst_8 : f32 to vector<16x5x4xf32>
    %c3_9 = arith.constant 3 : index
    %c19_10 = arith.constant 19 : index
    %c0_11 = arith.constant 0 : index
    %7 = vector.load %arg11[%c3_9, %c19_10, %c0_11] : memref<22x24x4xf32, #tpu.memory_space<vmem>>, vector<16x5x4xf32>
    tpu.vector_store %arg11[%c3_9, %c19_10, %c0_11], %6 {strides = array<i32>} : memref<22x24x4xf32, #tpu.memory_space<vmem>>, vector<16x5x4xf32>,
    %c0_12 = arith.constant 0 : index
    %c0_13 = arith.constant 0 : index
    %c0_14 = arith.constant 0 : index
    %c0_15 = arith.constant 0 : index
    %8 = vector.load %arg1[%c0_12, %c0_13, %c0_14, %c0_15] : memref<1x16x16x4xf32, #tpu.memory_space<vmem>>, vector<1x16x16x4xf32>
    %9 = vector.shape_cast %8 : vector<1x16x16x4xf32> to vector<16x16x4xf32>
    %c3_16 = arith.constant 3 : index
    %c3_17 = arith.constant 3 : index
    %c0_18 = arith.constant 0 : index
    %10 = vector.load %arg11[%c3_16, %c3_17, %c0_18] : memref<22x24x4xf32, #tpu.memory_space<vmem>>, vector<16x16x4xf32>
    tpu.vector_store %arg11[%c3_16, %c3_17, %c0_18], %9 {strides = array<i32>} : memref<22x24x4xf32, #tpu.memory_space<vmem>>, vector<16x16x4xf32>,
    %c0_19 = arith.constant 0 : index
    %c0_20 = arith.constant 0 : index
    %c0_21 = arith.constant 0 : index
    %11 = vector.load %arg2[%c0_19, %c0_20, %c0_21] : memref<7x7x4xf32, #tpu.memory_space<vmem>>, vector<7x7x4xf32>
    %cst_22 = arith.constant 0.000000e+00 : f32
    %12 = vector.broadcast %cst_22 : f32 to vector<16x4xf32>
    %c0_i32 = arith.constant 0 : i32
    %c4_i32 = arith.constant 4 : i32
    %13 = arith.addi %c0_i32, %c4_i32 : i32
    %c1_i32 = arith.constant 1 : i32
    %14:2 = scf.for %arg13 = %c0_i32 to %13 step %c1_i32 iter_args(%arg14 = %12, %arg15 = %12) -> (vector<16x4xf32>, vector<16x4xf32>)  : i32 {
      %c4_i32_58 = arith.constant 4 : i32
      %78 = arith.muli %arg13, %c4_i32_58 : i32
      %cst_59 = arith.constant 0.000000e+00 : f32
      %79 = vector.broadcast %cst_59 : f32 to vector<96x4xf32>
      %c0_i32_60 = arith.constant 0 : i32
      %80 = arith.addi %78, %c0_i32_60 : i32
      %81 = arith.index_cast %80 : i32 to index
      %c0_61 = arith.constant 0 : index
      %c0_62 = arith.constant 0 : index
      %82 = vector.load %arg11[%81, %c0_61, %c0_62] : memref<22x24x4xf32, #tpu.memory_space<vmem>>, vector<4x24x4xf32>
      %83 = vector.shape_cast %82 : vector<4x24x4xf32> to vector<96x4xf32>
      %84 = vector.extract_strided_slice %11 {offsets = [0, 0, 0], sizes = [1, 1, 4], strides = [1, 1, 1]} : vector<7x7x4xf32> to vector<1x1x4xf32>
      %85 = vector.shape_cast %84 : vector<1x1x4xf32> to vector<4xf32>
      %86 = vector.shape_cast %85 : vector<4xf32> to vector<1x4xf32>
      %87 = vector.broadcast %86 : vector<1x4xf32> to vector<96x4xf32>
      %88 = arith.mulf %83, %87 : vector<96x4xf32>
      %89 = arith.addf %79, %88 : vector<96x4xf32>
      %c95_i32 = arith.constant 95 : i32
      %90 = tpu.dynamic_rotate %83 by %c95_i32 dim 0 : vector<96x4xf32>, i32 -> vector<96x4xf32>
      %91 = vector.extract_strided_slice %11 {offsets = [0, 1, 0], sizes = [1, 1, 4], strides = [1, 1, 1]} : vector<7x7x4xf32> to vector<1x1x4xf32>
      %92 = vector.shape_cast %91 : vector<1x1x4xf32> to vector<4xf32>
      %93 = vector.shape_cast %92 : vector<4xf32> to vector<1x4xf32>
      %94 = vector.broadcast %93 : vector<1x4xf32> to vector<96x4xf32>
      %95 = arith.mulf %90, %94 : vector<96x4xf32>
      %96 = arith.addf %89, %95 : vector<96x4xf32>
      %c94_i32 = arith.constant 94 : i32
      %97 = tpu.dynamic_rotate %83 by %c94_i32 dim 0 : vector<96x4xf32>, i32 -> vector<96x4xf32>
      %98 = vector.extract_strided_slice %11 {offsets = [0, 2, 0], sizes = [1, 1, 4], strides = [1, 1, 1]} : vector<7x7x4xf32> to vector<1x1x4xf32>
      %99 = vector.shape_cast %98 : vector<1x1x4xf32> to vector<4xf32>
      %100 = vector.shape_cast %99 : vector<4xf32> to vector<1x4xf32>
      %101 = vector.broadcast %100 : vector<1x4xf32> to vector<96x4xf32>
      %102 = arith.mulf %97, %101 : vector<96x4xf32>
      %103 = arith.addf %96, %102 : vector<96x4xf32>
      %c93_i32 = arith.constant 93 : i32
      %104 = tpu.dynamic_rotate %83 by %c93_i32 dim 0 : vector<96x4xf32>, i32 -> vector<96x4xf32>
      %105 = vector.extract_strided_slice %11 {offsets = [0, 3, 0], sizes = [1, 1, 4], strides = [1, 1, 1]} : vector<7x7x4xf32> to vector<1x1x4xf32>
      %106 = vector.shape_cast %105 : vector<1x1x4xf32> to vector<4xf32>
      %107 = vector.shape_cast %106 : vector<4xf32> to vector<1x4xf32>
      %108 = vector.broadcast %107 : vector<1x4xf32> to vector<96x4xf32>
      %109 = arith.mulf %104, %108 : vector<96x4xf32>
      %110 = arith.addf %103, %109 : vector<96x4xf32>
      %c92_i32 = arith.constant 92 : i32
      %111 = tpu.dynamic_rotate %83 by %c92_i32 dim 0 : vector<96x4xf32>, i32 -> vector<96x4xf32>
      %112 = vector.extract_strided_slice %11 {offsets = [0, 4, 0], sizes = [1, 1, 4], strides = [1, 1, 1]} : vector<7x7x4xf32> to vector<1x1x4xf32>
      %113 = vector.shape_cast %112 : vector<1x1x4xf32> to vector<4xf32>
      %114 = vector.shape_cast %113 : vector<4xf32> to vector<1x4xf32>
      %115 = vector.broadcast %114 : vector<1x4xf32> to vector<96x4xf32>
      %116 = arith.mulf %111, %115 : vector<96x4xf32>
      %117 = arith.addf %110, %116 : vector<96x4xf32>
      %c91_i32 = arith.constant 91 : i32
      %118 = tpu.dynamic_rotate %83 by %c91_i32 dim 0 : vector<96x4xf32>, i32 -> vector<96x4xf32>
      %119 = vector.extract_strided_slice %11 {offsets = [0, 5, 0], sizes = [1, 1, 4], strides = [1, 1, 1]} : vector<7x7x4xf32> to vector<1x1x4xf32>
      %120 = vector.shape_cast %119 : vector<1x1x4xf32> to vector<4xf32>
      %121 = vector.shape_cast %120 : vector<4xf32> to vector<1x4xf32>
      %122 = vector.broadcast %121 : vector<1x4xf32> to vector<96x4xf32>
      %123 = arith.mulf %118, %122 : vector<96x4xf32>
      %124 = arith.addf %117, %123 : vector<96x4xf32>
      %c90_i32 = arith.constant 90 : i32
      %125 = tpu.dynamic_rotate %83 by %c90_i32 dim 0 : vector<96x4xf32>, i32 -> vector<96x4xf32>
      %126 = vector.extract_strided_slice %11 {offsets = [0, 6, 0], sizes = [1, 1, 4], strides = [1, 1, 1]} : vector<7x7x4xf32> to vector<1x1x4xf32>
      %127 = vector.shape_cast %126 : vector<1x1x4xf32> to vector<4xf32>
      %128 = vector.shape_cast %127 : vector<4xf32> to vector<1x4xf32>
      %129 = vector.broadcast %128 : vector<1x4xf32> to vector<96x4xf32>
      %130 = arith.mulf %125, %129 : vector<96x4xf32>
      %131 = arith.addf %124, %130 : vector<96x4xf32>
      %c1_i32_63 = arith.constant 1 : i32
      %132 = arith.addi %78, %c1_i32_63 : i32
      %133 = arith.index_cast %132 : i32 to index
      %c0_64 = arith.constant 0 : index
      %c0_65 = arith.constant 0 : index
      %134 = vector.load %arg11[%133, %c0_64, %c0_65] : memref<22x24x4xf32, #tpu.memory_space<vmem>>, vector<4x24x4xf32>
      %135 = vector.shape_cast %134 : vector<4x24x4xf32> to vector<96x4xf32>
      %136 = vector.extract_strided_slice %11 {offsets = [1, 0, 0], sizes = [1, 1, 4], strides = [1, 1, 1]} : vector<7x7x4xf32> to vector<1x1x4xf32>
      %137 = vector.shape_cast %136 : vector<1x1x4xf32> to vector<4xf32>
      %138 = vector.shape_cast %137 : vector<4xf32> to vector<1x4xf32>
      %139 = vector.broadcast %138 : vector<1x4xf32> to vector<96x4xf32>
      %140 = arith.mulf %135, %139 : vector<96x4xf32>
      %141 = arith.addf %131, %140 : vector<96x4xf32>
      %c95_i32_66 = arith.constant 95 : i32
      %142 = tpu.dynamic_rotate %135 by %c95_i32_66 dim 0 : vector<96x4xf32>, i32 -> vector<96x4xf32>
      %143 = vector.extract_strided_slice %11 {offsets = [1, 1, 0], sizes = [1, 1, 4], strides = [1, 1, 1]} : vector<7x7x4xf32> to vector<1x1x4xf32>
      %144 = vector.shape_cast %143 : vector<1x1x4xf32> to vector<4xf32>
      %145 = vector.shape_cast %144 : vector<4xf32> to vector<1x4xf32>
      %146 = vector.broadcast %145 : vector<1x4xf32> to vector<96x4xf32>
      %147 = arith.mulf %142, %146 : vector<96x4xf32>
      %148 = arith.addf %141, %147 : vector<96x4xf32>
      %c94_i32_67 = arith.constant 94 : i32
      %149 = tpu.dynamic_rotate %135 by %c94_i32_67 dim 0 : vector<96x4xf32>, i32 -> vector<96x4xf32>
      %150 = vector.extract_strided_slice %11 {offsets = [1, 2, 0], sizes = [1, 1, 4], strides = [1, 1, 1]} : vector<7x7x4xf32> to vector<1x1x4xf32>
      %151 = vector.shape_cast %150 : vector<1x1x4xf32> to vector<4xf32>
      %152 = vector.shape_cast %151 : vector<4xf32> to vector<1x4xf32>
      %153 = vector.broadcast %152 : vector<1x4xf32> to vector<96x4xf32>
      %154 = arith.mulf %149, %153 : vector<96x4xf32>
      %155 = arith.addf %148, %154 : vector<96x4xf32>
      %c93_i32_68 = arith.constant 93 : i32
      %156 = tpu.dynamic_rotate %135 by %c93_i32_68 dim 0 : vector<96x4xf32>, i32 -> vector<96x4xf32>
      %157 = vector.extract_strided_slice %11 {offsets = [1, 3, 0], sizes = [1, 1, 4], strides = [1, 1, 1]} : vector<7x7x4xf32> to vector<1x1x4xf32>
      %158 = vector.shape_cast %157 : vector<1x1x4xf32> to vector<4xf32>
      %159 = vector.shape_cast %158 : vector<4xf32> to vector<1x4xf32>
      %160 = vector.broadcast %159 : vector<1x4xf32> to vector<96x4xf32>
      %161 = arith.mulf %156, %160 : vector<96x4xf32>
      %162 = arith.addf %155, %161 : vector<96x4xf32>
      %c92_i32_69 = arith.constant 92 : i32
      %163 = tpu.dynamic_rotate %135 by %c92_i32_69 dim 0 : vector<96x4xf32>, i32 -> vector<96x4xf32>
      %164 = vector.extract_strided_slice %11 {offsets = [1, 4, 0], sizes = [1, 1, 4], strides = [1, 1, 1]} : vector<7x7x4xf32> to vector<1x1x4xf32>
      %165 = vector.shape_cast %164 : vector<1x1x4xf32> to vector<4xf32>
      %166 = vector.shape_cast %165 : vector<4xf32> to vector<1x4xf32>
      %167 = vector.broadcast %166 : vector<1x4xf32> to vector<96x4xf32>
      %168 = arith.mulf %163, %167 : vector<96x4xf32>
      %169 = arith.addf %162, %168 : vector<96x4xf32>
      %c91_i32_70 = arith.constant 91 : i32
      %170 = tpu.dynamic_rotate %135 by %c91_i32_70 dim 0 : vector<96x4xf32>, i32 -> vector<96x4xf32>
      %171 = vector.extract_strided_slice %11 {offsets = [1, 5, 0], sizes = [1, 1, 4], strides = [1, 1, 1]} : vector<7x7x4xf32> to vector<1x1x4xf32>
      %172 = vector.shape_cast %171 : vector<1x1x4xf32> to vector<4xf32>
      %173 = vector.shape_cast %172 : vector<4xf32> to vector<1x4xf32>
      %174 = vector.broadcast %173 : vector<1x4xf32> to vector<96x4xf32>
      %175 = arith.mulf %170, %174 : vector<96x4xf32>
      %176 = arith.addf %169, %175 : vector<96x4xf32>
      %c90_i32_71 = arith.constant 90 : i32
      %177 = tpu.dynamic_rotate %135 by %c90_i32_71 dim 0 : vector<96x4xf32>, i32 -> vector<96x4xf32>
      %178 = vector.extract_strided_slice %11 {offsets = [1, 6, 0], sizes = [1, 1, 4], strides = [1, 1, 1]} : vector<7x7x4xf32> to vector<1x1x4xf32>
      %179 = vector.shape_cast %178 : vector<1x1x4xf32> to vector<4xf32>
      %180 = vector.shape_cast %179 : vector<4xf32> to vector<1x4xf32>
      %181 = vector.broadcast %180 : vector<1x4xf32> to vector<96x4xf32>
      %182 = arith.mulf %177, %181 : vector<96x4xf32>
      %183 = arith.addf %176, %182 : vector<96x4xf32>
      %c2_i32 = arith.constant 2 : i32
      %184 = arith.addi %78, %c2_i32 : i32
      %185 = arith.index_cast %184 : i32 to index
      %c0_72 = arith.constant 0 : index
      %c0_73 = arith.constant 0 : index
      %186 = vector.load %arg11[%185, %c0_72, %c0_73] : memref<22x24x4xf32, #tpu.memory_space<vmem>>, vector<4x24x4xf32>
      %187 = vector.shape_cast %186 : vector<4x24x4xf32> to vector<96x4xf32>
      %188 = vector.extract_strided_slice %11 {offsets = [2, 0, 0], sizes = [1, 1, 4], strides = [1, 1, 1]} : vector<7x7x4xf32> to vector<1x1x4xf32>
      %189 = vector.shape_cast %188 : vector<1x1x4xf32> to vector<4xf32>
      %190 = vector.shape_cast %189 : vector<4xf32> to vector<1x4xf32>
      %191 = vector.broadcast %190 : vector<1x4xf32> to vector<96x4xf32>
      %192 = arith.mulf %187, %191 : vector<96x4xf32>
      %193 = arith.addf %183, %192 : vector<96x4xf32>
      %c95_i32_74 = arith.constant 95 : i32
      %194 = tpu.dynamic_rotate %187 by %c95_i32_74 dim 0 : vector<96x4xf32>, i32 -> vector<96x4xf32>
      %195 = vector.extract_strided_slice %11 {offsets = [2, 1, 0], sizes = [1, 1, 4], strides = [1, 1, 1]} : vector<7x7x4xf32> to vector<1x1x4xf32>
      %196 = vector.shape_cast %195 : vector<1x1x4xf32> to vector<4xf32>
      %197 = vector.shape_cast %196 : vector<4xf32> to vector<1x4xf32>
      %198 = vector.broadcast %197 : vector<1x4xf32> to vector<96x4xf32>
      %199 = arith.mulf %194, %198 : vector<96x4xf32>
      %200 = arith.addf %193, %199 : vector<96x4xf32>
      %c94_i32_75 = arith.constant 94 : i32
      %201 = tpu.dynamic_rotate %187 by %c94_i32_75 dim 0 : vector<96x4xf32>, i32 -> vector<96x4xf32>
      %202 = vector.extract_strided_slice %11 {offsets = [2, 2, 0], sizes = [1, 1, 4], strides = [1, 1, 1]} : vector<7x7x4xf32> to vector<1x1x4xf32>
      %203 = vector.shape_cast %202 : vector<1x1x4xf32> to vector<4xf32>
      %204 = vector.shape_cast %203 : vector<4xf32> to vector<1x4xf32>
      %205 = vector.broadcast %204 : vector<1x4xf32> to vector<96x4xf32>
      %206 = arith.mulf %201, %205 : vector<96x4xf32>
      %207 = arith.addf %200, %206 : vector<96x4xf32>
      %c93_i32_76 = arith.constant 93 : i32
      %208 = tpu.dynamic_rotate %187 by %c93_i32_76 dim 0 : vector<96x4xf32>, i32 -> vector<96x4xf32>
      %209 = vector.extract_strided_slice %11 {offsets = [2, 3, 0], sizes = [1, 1, 4], strides = [1, 1, 1]} : vector<7x7x4xf32> to vector<1x1x4xf32>
      %210 = vector.shape_cast %209 : vector<1x1x4xf32> to vector<4xf32>
      %211 = vector.shape_cast %210 : vector<4xf32> to vector<1x4xf32>
      %212 = vector.broadcast %211 : vector<1x4xf32> to vector<96x4xf32>
      %213 = arith.mulf %208, %212 : vector<96x4xf32>
      %214 = arith.addf %207, %213 : vector<96x4xf32>
      %c92_i32_77 = arith.constant 92 : i32
      %215 = tpu.dynamic_rotate %187 by %c92_i32_77 dim 0 : vector<96x4xf32>, i32 -> vector<96x4xf32>
      %216 = vector.extract_strided_slice %11 {offsets = [2, 4, 0], sizes = [1, 1, 4], strides = [1, 1, 1]} : vector<7x7x4xf32> to vector<1x1x4xf32>
      %217 = vector.shape_cast %216 : vector<1x1x4xf32> to vector<4xf32>
      %218 = vector.shape_cast %217 : vector<4xf32> to vector<1x4xf32>
      %219 = vector.broadcast %218 : vector<1x4xf32> to vector<96x4xf32>
      %220 = arith.mulf %215, %219 : vector<96x4xf32>
      %221 = arith.addf %214, %220 : vector<96x4xf32>
      %c91_i32_78 = arith.constant 91 : i32
      %222 = tpu.dynamic_rotate %187 by %c91_i32_78 dim 0 : vector<96x4xf32>, i32 -> vector<96x4xf32>
      %223 = vector.extract_strided_slice %11 {offsets = [2, 5, 0], sizes = [1, 1, 4], strides = [1, 1, 1]} : vector<7x7x4xf32> to vector<1x1x4xf32>
      %224 = vector.shape_cast %223 : vector<1x1x4xf32> to vector<4xf32>
      %225 = vector.shape_cast %224 : vector<4xf32> to vector<1x4xf32>
      %226 = vector.broadcast %225 : vector<1x4xf32> to vector<96x4xf32>
      %227 = arith.mulf %222, %226 : vector<96x4xf32>
      %228 = arith.addf %221, %227 : vector<96x4xf32>
      %c90_i32_79 = arith.constant 90 : i32
      %229 = tpu.dynamic_rotate %187 by %c90_i32_79 dim 0 : vector<96x4xf32>, i32 -> vector<96x4xf32>
      %230 = vector.extract_strided_slice %11 {offsets = [2, 6, 0], sizes = [1, 1, 4], strides = [1, 1, 1]} : vector<7x7x4xf32> to vector<1x1x4xf32>
      %231 = vector.shape_cast %230 : vector<1x1x4xf32> to vector<4xf32>
      %232 = vector.shape_cast %231 : vector<4xf32> to vector<1x4xf32>
      %233 = vector.broadcast %232 : vector<1x4xf32> to vector<96x4xf32>
      %234 = arith.mulf %229, %233 : vector<96x4xf32>
      %235 = arith.addf %228, %234 : vector<96x4xf32>
      %c3_i32_80 = arith.constant 3 : i32
      %236 = arith.addi %78, %c3_i32_80 : i32
      %237 = arith.index_cast %236 : i32 to index
      %c0_81 = arith.constant 0 : index
      %c0_82 = arith.constant 0 : index
      %238 = vector.load %arg11[%237, %c0_81, %c0_82] : memref<22x24x4xf32, #tpu.memory_space<vmem>>, vector<4x24x4xf32>
      %239 = vector.shape_cast %238 : vector<4x24x4xf32> to vector<96x4xf32>
      %240 = vector.extract_strided_slice %11 {offsets = [3, 0, 0], sizes = [1, 1, 4], strides = [1, 1, 1]} : vector<7x7x4xf32> to vector<1x1x4xf32>
      %241 = vector.shape_cast %240 : vector<1x1x4xf32> to vector<4xf32>
      %242 = vector.shape_cast %241 : vector<4xf32> to vector<1x4xf32>
      %243 = vector.broadcast %242 : vector<1x4xf32> to vector<96x4xf32>
      %244 = arith.mulf %239, %243 : vector<96x4xf32>
      %245 = arith.addf %235, %244 : vector<96x4xf32>
      %c95_i32_83 = arith.constant 95 : i32
      %246 = tpu.dynamic_rotate %239 by %c95_i32_83 dim 0 : vector<96x4xf32>, i32 -> vector<96x4xf32>
      %247 = vector.extract_strided_slice %11 {offsets = [3, 1, 0], sizes = [1, 1, 4], strides = [1, 1, 1]} : vector<7x7x4xf32> to vector<1x1x4xf32>
      %248 = vector.shape_cast %247 : vector<1x1x4xf32> to vector<4xf32>
      %249 = vector.shape_cast %248 : vector<4xf32> to vector<1x4xf32>
      %250 = vector.broadcast %249 : vector<1x4xf32> to vector<96x4xf32>
      %251 = arith.mulf %246, %250 : vector<96x4xf32>
      %252 = arith.addf %245, %251 : vector<96x4xf32>
      %c94_i32_84 = arith.constant 94 : i32
      %253 = tpu.dynamic_rotate %239 by %c94_i32_84 dim 0 : vector<96x4xf32>, i32 -> vector<96x4xf32>
      %254 = vector.extract_strided_slice %11 {offsets = [3, 2, 0], sizes = [1, 1, 4], strides = [1, 1, 1]} : vector<7x7x4xf32> to vector<1x1x4xf32>
      %255 = vector.shape_cast %254 : vector<1x1x4xf32> to vector<4xf32>
      %256 = vector.shape_cast %255 : vector<4xf32> to vector<1x4xf32>
      %257 = vector.broadcast %256 : vector<1x4xf32> to vector<96x4xf32>
      %258 = arith.mulf %253, %257 : vector<96x4xf32>
      %259 = arith.addf %252, %258 : vector<96x4xf32>
      %c93_i32_85 = arith.constant 93 : i32
      %260 = tpu.dynamic_rotate %239 by %c93_i32_85 dim 0 : vector<96x4xf32>, i32 -> vector<96x4xf32>
      %261 = vector.extract_strided_slice %11 {offsets = [3, 3, 0], sizes = [1, 1, 4], strides = [1, 1, 1]} : vector<7x7x4xf32> to vector<1x1x4xf32>
      %262 = vector.shape_cast %261 : vector<1x1x4xf32> to vector<4xf32>
      %263 = vector.shape_cast %262 : vector<4xf32> to vector<1x4xf32>
      %264 = vector.broadcast %263 : vector<1x4xf32> to vector<96x4xf32>
      %265 = arith.mulf %260, %264 : vector<96x4xf32>
      %266 = arith.addf %259, %265 : vector<96x4xf32>
      %c92_i32_86 = arith.constant 92 : i32
      %267 = tpu.dynamic_rotate %239 by %c92_i32_86 dim 0 : vector<96x4xf32>, i32 -> vector<96x4xf32>
      %268 = vector.extract_strided_slice %11 {offsets = [3, 4, 0], sizes = [1, 1, 4], strides = [1, 1, 1]} : vector<7x7x4xf32> to vector<1x1x4xf32>
      %269 = vector.shape_cast %268 : vector<1x1x4xf32> to vector<4xf32>
      %270 = vector.shape_cast %269 : vector<4xf32> to vector<1x4xf32>
      %271 = vector.broadcast %270 : vector<1x4xf32> to vector<96x4xf32>
      %272 = arith.mulf %267, %271 : vector<96x4xf32>
      %273 = arith.addf %266, %272 : vector<96x4xf32>
      %c91_i32_87 = arith.constant 91 : i32
      %274 = tpu.dynamic_rotate %239 by %c91_i32_87 dim 0 : vector<96x4xf32>, i32 -> vector<96x4xf32>
      %275 = vector.extract_strided_slice %11 {offsets = [3, 5, 0], sizes = [1, 1, 4], strides = [1, 1, 1]} : vector<7x7x4xf32> to vector<1x1x4xf32>
      %276 = vector.shape_cast %275 : vector<1x1x4xf32> to vector<4xf32>
      %277 = vector.shape_cast %276 : vector<4xf32> to vector<1x4xf32>
      %278 = vector.broadcast %277 : vector<1x4xf32> to vector<96x4xf32>
      %279 = arith.mulf %274, %278 : vector<96x4xf32>
      %280 = arith.addf %273, %279 : vector<96x4xf32>
      %c90_i32_88 = arith.constant 90 : i32
      %281 = tpu.dynamic_rotate %239 by %c90_i32_88 dim 0 : vector<96x4xf32>, i32 -> vector<96x4xf32>
      %282 = vector.extract_strided_slice %11 {offsets = [3, 6, 0], sizes = [1, 1, 4], strides = [1, 1, 1]} : vector<7x7x4xf32> to vector<1x1x4xf32>
      %283 = vector.shape_cast %282 : vector<1x1x4xf32> to vector<4xf32>
      %284 = vector.shape_cast %283 : vector<4xf32> to vector<1x4xf32>
      %285 = vector.broadcast %284 : vector<1x4xf32> to vector<96x4xf32>
      %286 = arith.mulf %281, %285 : vector<96x4xf32>
      %287 = arith.addf %280, %286 : vector<96x4xf32>
      %c4_i32_89 = arith.constant 4 : i32
      %288 = arith.addi %78, %c4_i32_89 : i32
      %289 = arith.index_cast %288 : i32 to index
      %c0_90 = arith.constant 0 : index
      %c0_91 = arith.constant 0 : index
      %290 = vector.load %arg11[%289, %c0_90, %c0_91] : memref<22x24x4xf32, #tpu.memory_space<vmem>>, vector<4x24x4xf32>
      %291 = vector.shape_cast %290 : vector<4x24x4xf32> to vector<96x4xf32>
      %292 = vector.extract_strided_slice %11 {offsets = [4, 0, 0], sizes = [1, 1, 4], strides = [1, 1, 1]} : vector<7x7x4xf32> to vector<1x1x4xf32>
      %293 = vector.shape_cast %292 : vector<1x1x4xf32> to vector<4xf32>
      %294 = vector.shape_cast %293 : vector<4xf32> to vector<1x4xf32>
      %295 = vector.broadcast %294 : vector<1x4xf32> to vector<96x4xf32>
      %296 = arith.mulf %291, %295 : vector<96x4xf32>
      %297 = arith.addf %287, %296 : vector<96x4xf32>
      %c95_i32_92 = arith.constant 95 : i32
      %298 = tpu.dynamic_rotate %291 by %c95_i32_92 dim 0 : vector<96x4xf32>, i32 -> vector<96x4xf32>
      %299 = vector.extract_strided_slice %11 {offsets = [4, 1, 0], sizes = [1, 1, 4], strides = [1, 1, 1]} : vector<7x7x4xf32> to vector<1x1x4xf32>
      %300 = vector.shape_cast %299 : vector<1x1x4xf32> to vector<4xf32>
      %301 = vector.shape_cast %300 : vector<4xf32> to vector<1x4xf32>
      %302 = vector.broadcast %301 : vector<1x4xf32> to vector<96x4xf32>
      %303 = arith.mulf %298, %302 : vector<96x4xf32>
      %304 = arith.addf %297, %303 : vector<96x4xf32>
      %c94_i32_93 = arith.constant 94 : i32
      %305 = tpu.dynamic_rotate %291 by %c94_i32_93 dim 0 : vector<96x4xf32>, i32 -> vector<96x4xf32>
      %306 = vector.extract_strided_slice %11 {offsets = [4, 2, 0], sizes = [1, 1, 4], strides = [1, 1, 1]} : vector<7x7x4xf32> to vector<1x1x4xf32>
      %307 = vector.shape_cast %306 : vector<1x1x4xf32> to vector<4xf32>
      %308 = vector.shape_cast %307 : vector<4xf32> to vector<1x4xf32>
      %309 = vector.broadcast %308 : vector<1x4xf32> to vector<96x4xf32>
      %310 = arith.mulf %305, %309 : vector<96x4xf32>
      %311 = arith.addf %304, %310 : vector<96x4xf32>
      %c93_i32_94 = arith.constant 93 : i32
      %312 = tpu.dynamic_rotate %291 by %c93_i32_94 dim 0 : vector<96x4xf32>, i32 -> vector<96x4xf32>
      %313 = vector.extract_strided_slice %11 {offsets = [4, 3, 0], sizes = [1, 1, 4], strides = [1, 1, 1]} : vector<7x7x4xf32> to vector<1x1x4xf32>
      %314 = vector.shape_cast %313 : vector<1x1x4xf32> to vector<4xf32>
      %315 = vector.shape_cast %314 : vector<4xf32> to vector<1x4xf32>
      %316 = vector.broadcast %315 : vector<1x4xf32> to vector<96x4xf32>
      %317 = arith.mulf %312, %316 : vector<96x4xf32>
      %318 = arith.addf %311, %317 : vector<96x4xf32>
      %c92_i32_95 = arith.constant 92 : i32
      %319 = tpu.dynamic_rotate %291 by %c92_i32_95 dim 0 : vector<96x4xf32>, i32 -> vector<96x4xf32>
      %320 = vector.extract_strided_slice %11 {offsets = [4, 4, 0], sizes = [1, 1, 4], strides = [1, 1, 1]} : vector<7x7x4xf32> to vector<1x1x4xf32>
      %321 = vector.shape_cast %320 : vector<1x1x4xf32> to vector<4xf32>
      %322 = vector.shape_cast %321 : vector<4xf32> to vector<1x4xf32>
      %323 = vector.broadcast %322 : vector<1x4xf32> to vector<96x4xf32>
      %324 = arith.mulf %319, %323 : vector<96x4xf32>
      %325 = arith.addf %318, %324 : vector<96x4xf32>
      %c91_i32_96 = arith.constant 91 : i32
      %326 = tpu.dynamic_rotate %291 by %c91_i32_96 dim 0 : vector<96x4xf32>, i32 -> vector<96x4xf32>
      %327 = vector.extract_strided_slice %11 {offsets = [4, 5, 0], sizes = [1, 1, 4], strides = [1, 1, 1]} : vector<7x7x4xf32> to vector<1x1x4xf32>
      %328 = vector.shape_cast %327 : vector<1x1x4xf32> to vector<4xf32>
      %329 = vector.shape_cast %328 : vector<4xf32> to vector<1x4xf32>
      %330 = vector.broadcast %329 : vector<1x4xf32> to vector<96x4xf32>
      %331 = arith.mulf %326, %330 : vector<96x4xf32>
      %332 = arith.addf %325, %331 : vector<96x4xf32>
      %c90_i32_97 = arith.constant 90 : i32
      %333 = tpu.dynamic_rotate %291 by %c90_i32_97 dim 0 : vector<96x4xf32>, i32 -> vector<96x4xf32>
      %334 = vector.extract_strided_slice %11 {offsets = [4, 6, 0], sizes = [1, 1, 4], strides = [1, 1, 1]} : vector<7x7x4xf32> to vector<1x1x4xf32>
      %335 = vector.shape_cast %334 : vector<1x1x4xf32> to vector<4xf32>
      %336 = vector.shape_cast %335 : vector<4xf32> to vector<1x4xf32>
      %337 = vector.broadcast %336 : vector<1x4xf32> to vector<96x4xf32>
      %338 = arith.mulf %333, %337 : vector<96x4xf32>
      %339 = arith.addf %332, %338 : vector<96x4xf32>
      %c5_i32 = arith.constant 5 : i32
      %340 = arith.addi %78, %c5_i32 : i32
      %341 = arith.index_cast %340 : i32 to index
      %c0_98 = arith.constant 0 : index
      %c0_99 = arith.constant 0 : index
      %342 = vector.load %arg11[%341, %c0_98, %c0_99] : memref<22x24x4xf32, #tpu.memory_space<vmem>>, vector<4x24x4xf32>
      %343 = vector.shape_cast %342 : vector<4x24x4xf32> to vector<96x4xf32>
      %344 = vector.extract_strided_slice %11 {offsets = [5, 0, 0], sizes = [1, 1, 4], strides = [1, 1, 1]} : vector<7x7x4xf32> to vector<1x1x4xf32>
      %345 = vector.shape_cast %344 : vector<1x1x4xf32> to vector<4xf32>
      %346 = vector.shape_cast %345 : vector<4xf32> to vector<1x4xf32>
      %347 = vector.broadcast %346 : vector<1x4xf32> to vector<96x4xf32>
      %348 = arith.mulf %343, %347 : vector<96x4xf32>
      %349 = arith.addf %339, %348 : vector<96x4xf32>
      %c95_i32_100 = arith.constant 95 : i32
      %350 = tpu.dynamic_rotate %343 by %c95_i32_100 dim 0 : vector<96x4xf32>, i32 -> vector<96x4xf32>
      %351 = vector.extract_strided_slice %11 {offsets = [5, 1, 0], sizes = [1, 1, 4], strides = [1, 1, 1]} : vector<7x7x4xf32> to vector<1x1x4xf32>
      %352 = vector.shape_cast %351 : vector<1x1x4xf32> to vector<4xf32>
      %353 = vector.shape_cast %352 : vector<4xf32> to vector<1x4xf32>
      %354 = vector.broadcast %353 : vector<1x4xf32> to vector<96x4xf32>
      %355 = arith.mulf %350, %354 : vector<96x4xf32>
      %356 = arith.addf %349, %355 : vector<96x4xf32>
      %c94_i32_101 = arith.constant 94 : i32
      %357 = tpu.dynamic_rotate %343 by %c94_i32_101 dim 0 : vector<96x4xf32>, i32 -> vector<96x4xf32>
      %358 = vector.extract_strided_slice %11 {offsets = [5, 2, 0], sizes = [1, 1, 4], strides = [1, 1, 1]} : vector<7x7x4xf32> to vector<1x1x4xf32>
      %359 = vector.shape_cast %358 : vector<1x1x4xf32> to vector<4xf32>
      %360 = vector.shape_cast %359 : vector<4xf32> to vector<1x4xf32>
      %361 = vector.broadcast %360 : vector<1x4xf32> to vector<96x4xf32>
      %362 = arith.mulf %357, %361 : vector<96x4xf32>
      %363 = arith.addf %356, %362 : vector<96x4xf32>
      %c93_i32_102 = arith.constant 93 : i32
      %364 = tpu.dynamic_rotate %343 by %c93_i32_102 dim 0 : vector<96x4xf32>, i32 -> vector<96x4xf32>
      %365 = vector.extract_strided_slice %11 {offsets = [5, 3, 0], sizes = [1, 1, 4], strides = [1, 1, 1]} : vector<7x7x4xf32> to vector<1x1x4xf32>
      %366 = vector.shape_cast %365 : vector<1x1x4xf32> to vector<4xf32>
      %367 = vector.shape_cast %366 : vector<4xf32> to vector<1x4xf32>
      %368 = vector.broadcast %367 : vector<1x4xf32> to vector<96x4xf32>
      %369 = arith.mulf %364, %368 : vector<96x4xf32>
      %370 = arith.addf %363, %369 : vector<96x4xf32>
      %c92_i32_103 = arith.constant 92 : i32
      %371 = tpu.dynamic_rotate %343 by %c92_i32_103 dim 0 : vector<96x4xf32>, i32 -> vector<96x4xf32>
      %372 = vector.extract_strided_slice %11 {offsets = [5, 4, 0], sizes = [1, 1, 4], strides = [1, 1, 1]} : vector<7x7x4xf32> to vector<1x1x4xf32>
      %373 = vector.shape_cast %372 : vector<1x1x4xf32> to vector<4xf32>
      %374 = vector.shape_cast %373 : vector<4xf32> to vector<1x4xf32>
      %375 = vector.broadcast %374 : vector<1x4xf32> to vector<96x4xf32>
      %376 = arith.mulf %371, %375 : vector<96x4xf32>
      %377 = arith.addf %370, %376 : vector<96x4xf32>
      %c91_i32_104 = arith.constant 91 : i32
      %378 = tpu.dynamic_rotate %343 by %c91_i32_104 dim 0 : vector<96x4xf32>, i32 -> vector<96x4xf32>
      %379 = vector.extract_strided_slice %11 {offsets = [5, 5, 0], sizes = [1, 1, 4], strides = [1, 1, 1]} : vector<7x7x4xf32> to vector<1x1x4xf32>
      %380 = vector.shape_cast %379 : vector<1x1x4xf32> to vector<4xf32>
      %381 = vector.shape_cast %380 : vector<4xf32> to vector<1x4xf32>
      %382 = vector.broadcast %381 : vector<1x4xf32> to vector<96x4xf32>
      %383 = arith.mulf %378, %382 : vector<96x4xf32>
      %384 = arith.addf %377, %383 : vector<96x4xf32>
      %c90_i32_105 = arith.constant 90 : i32
      %385 = tpu.dynamic_rotate %343 by %c90_i32_105 dim 0 : vector<96x4xf32>, i32 -> vector<96x4xf32>
      %386 = vector.extract_strided_slice %11 {offsets = [5, 6, 0], sizes = [1, 1, 4], strides = [1, 1, 1]} : vector<7x7x4xf32> to vector<1x1x4xf32>
      %387 = vector.shape_cast %386 : vector<1x1x4xf32> to vector<4xf32>
      %388 = vector.shape_cast %387 : vector<4xf32> to vector<1x4xf32>
      %389 = vector.broadcast %388 : vector<1x4xf32> to vector<96x4xf32>
      %390 = arith.mulf %385, %389 : vector<96x4xf32>
      %391 = arith.addf %384, %390 : vector<96x4xf32>
      %c6_i32 = arith.constant 6 : i32
      %392 = arith.addi %78, %c6_i32 : i32
      %393 = arith.index_cast %392 : i32 to index
      %c0_106 = arith.constant 0 : index
      %c0_107 = arith.constant 0 : index
      %394 = vector.load %arg11[%393, %c0_106, %c0_107] : memref<22x24x4xf32, #tpu.memory_space<vmem>>, vector<4x24x4xf32>
      %395 = vector.shape_cast %394 : vector<4x24x4xf32> to vector<96x4xf32>
      %396 = vector.extract_strided_slice %11 {offsets = [6, 0, 0], sizes = [1, 1, 4], strides = [1, 1, 1]} : vector<7x7x4xf32> to vector<1x1x4xf32>
      %397 = vector.shape_cast %396 : vector<1x1x4xf32> to vector<4xf32>
      %398 = vector.shape_cast %397 : vector<4xf32> to vector<1x4xf32>
      %399 = vector.broadcast %398 : vector<1x4xf32> to vector<96x4xf32>
      %400 = arith.mulf %395, %399 : vector<96x4xf32>
      %401 = arith.addf %391, %400 : vector<96x4xf32>
      %c95_i32_108 = arith.constant 95 : i32
      %402 = tpu.dynamic_rotate %395 by %c95_i32_108 dim 0 : vector<96x4xf32>, i32 -> vector<96x4xf32>
      %403 = vector.extract_strided_slice %11 {offsets = [6, 1, 0], sizes = [1, 1, 4], strides = [1, 1, 1]} : vector<7x7x4xf32> to vector<1x1x4xf32>
      %404 = vector.shape_cast %403 : vector<1x1x4xf32> to vector<4xf32>
      %405 = vector.shape_cast %404 : vector<4xf32> to vector<1x4xf32>
      %406 = vector.broadcast %405 : vector<1x4xf32> to vector<96x4xf32>
      %407 = arith.mulf %402, %406 : vector<96x4xf32>
      %408 = arith.addf %401, %407 : vector<96x4xf32>
      %c94_i32_109 = arith.constant 94 : i32
      %409 = tpu.dynamic_rotate %395 by %c94_i32_109 dim 0 : vector<96x4xf32>, i32 -> vector<96x4xf32>
      %410 = vector.extract_strided_slice %11 {offsets = [6, 2, 0], sizes = [1, 1, 4], strides = [1, 1, 1]} : vector<7x7x4xf32> to vector<1x1x4xf32>
      %411 = vector.shape_cast %410 : vector<1x1x4xf32> to vector<4xf32>
      %412 = vector.shape_cast %411 : vector<4xf32> to vector<1x4xf32>
      %413 = vector.broadcast %412 : vector<1x4xf32> to vector<96x4xf32>
      %414 = arith.mulf %409, %413 : vector<96x4xf32>
      %415 = arith.addf %408, %414 : vector<96x4xf32>
      %c93_i32_110 = arith.constant 93 : i32
      %416 = tpu.dynamic_rotate %395 by %c93_i32_110 dim 0 : vector<96x4xf32>, i32 -> vector<96x4xf32>
      %417 = vector.extract_strided_slice %11 {offsets = [6, 3, 0], sizes = [1, 1, 4], strides = [1, 1, 1]} : vector<7x7x4xf32> to vector<1x1x4xf32>
      %418 = vector.shape_cast %417 : vector<1x1x4xf32> to vector<4xf32>
      %419 = vector.shape_cast %418 : vector<4xf32> to vector<1x4xf32>
      %420 = vector.broadcast %419 : vector<1x4xf32> to vector<96x4xf32>
      %421 = arith.mulf %416, %420 : vector<96x4xf32>
      %422 = arith.addf %415, %421 : vector<96x4xf32>
      %c92_i32_111 = arith.constant 92 : i32
      %423 = tpu.dynamic_rotate %395 by %c92_i32_111 dim 0 : vector<96x4xf32>, i32 -> vector<96x4xf32>
      %424 = vector.extract_strided_slice %11 {offsets = [6, 4, 0], sizes = [1, 1, 4], strides = [1, 1, 1]} : vector<7x7x4xf32> to vector<1x1x4xf32>
      %425 = vector.shape_cast %424 : vector<1x1x4xf32> to vector<4xf32>
      %426 = vector.shape_cast %425 : vector<4xf32> to vector<1x4xf32>
      %427 = vector.broadcast %426 : vector<1x4xf32> to vector<96x4xf32>
      %428 = arith.mulf %423, %427 : vector<96x4xf32>
      %429 = arith.addf %422, %428 : vector<96x4xf32>
      %c91_i32_112 = arith.constant 91 : i32
      %430 = tpu.dynamic_rotate %395 by %c91_i32_112 dim 0 : vector<96x4xf32>, i32 -> vector<96x4xf32>
      %431 = vector.extract_strided_slice %11 {offsets = [6, 5, 0], sizes = [1, 1, 4], strides = [1, 1, 1]} : vector<7x7x4xf32> to vector<1x1x4xf32>
      %432 = vector.shape_cast %431 : vector<1x1x4xf32> to vector<4xf32>
      %433 = vector.shape_cast %432 : vector<4xf32> to vector<1x4xf32>
      %434 = vector.broadcast %433 : vector<1x4xf32> to vector<96x4xf32>
      %435 = arith.mulf %430, %434 : vector<96x4xf32>
      %436 = arith.addf %429, %435 : vector<96x4xf32>
      %c90_i32_113 = arith.constant 90 : i32
      %437 = tpu.dynamic_rotate %395 by %c90_i32_113 dim 0 : vector<96x4xf32>, i32 -> vector<96x4xf32>
      %438 = vector.extract_strided_slice %11 {offsets = [6, 6, 0], sizes = [1, 1, 4], strides = [1, 1, 1]} : vector<7x7x4xf32> to vector<1x1x4xf32>
      %439 = vector.shape_cast %438 : vector<1x1x4xf32> to vector<4xf32>
      %440 = vector.shape_cast %439 : vector<4xf32> to vector<1x4xf32>
      %441 = vector.broadcast %440 : vector<1x4xf32> to vector<96x4xf32>
      %442 = arith.mulf %437, %441 : vector<96x4xf32>
      %443 = arith.addf %436, %442 : vector<96x4xf32>
      %444 = vector.shape_cast %443 : vector<96x4xf32> to vector<4x24x4xf32>
      %445 = vector.extract_strided_slice %444 {offsets = [0, 0, 0], sizes = [4, 16, 4], strides = [1, 1, 1]} : vector<4x24x4xf32> to vector<4x16x4xf32>
      %446 = vector.shape_cast %445 : vector<4x16x4xf32> to vector<64x4xf32>
      %447 = arith.truncf %446 : vector<64x4xf32> to vector<64x4xbf16>
      %c16_i32_114 = arith.constant 16 : i32
      %448 = arith.muli %78, %c16_i32_114 : i32
      %449 = arith.index_cast %448 : i32 to index
      %c0_115 = arith.constant 0 : index
      %450 = vector.load %arg12[%449, %c0_115] : memref<256x4xbf16, #tpu.memory_space<vmem>>, vector<64x4xbf16>
      tpu.vector_store %arg12[%449, %c0_115], %447 {strides = array<i32>} : memref<256x4xbf16, #tpu.memory_space<vmem>>, vector<64x4xbf16>,
      %cst_116 = arith.constant dense<0.000000e+00> : vector<16x4xf32>
      %451 = vector.multi_reduction <add>, %445, %cst_116 [0] : vector<4x16x4xf32> to vector<16x4xf32>
      %452 = arith.addf %arg14, %451 : vector<16x4xf32>
      %453 = arith.mulf %445, %445 : vector<4x16x4xf32>
      %cst_117 = arith.constant dense<0.000000e+00> : vector<16x4xf32>
      %454 = vector.multi_reduction <add>, %453, %cst_117 [0] : vector<4x16x4xf32> to vector<16x4xf32>
      %455 = arith.addf %arg15, %454 : vector<16x4xf32>
      scf.yield %452, %455 : vector<16x4xf32>, vector<16x4xf32>
    }
    %c4_i32_23 = arith.constant 4 : i32
    %15 = vector.shape_cast %14#0 : vector<16x4xf32> to vector<1x16x4xf32>
    %cst_24 = arith.constant dense<0.000000e+00> : vector<1xf32>
    %16 = vector.multi_reduction <add>, %15, %cst_24 [1, 2] : vector<1x16x4xf32> to vector<1xf32>
    %17 = vector.shape_cast %16 : vector<1xf32> to vector<1x1x1xf32>
    %18 = vector.extract %17[0, 0, 0] : f32 from vector<1x1x1xf32>
    %cst_25 = arith.constant 9.765625E-4 : f32
    %19 = arith.mulf %18, %cst_25 : f32
    %20 = vector.shape_cast %14#1 : vector<16x4xf32> to vector<1x16x4xf32>
    %cst_26 = arith.constant dense<0.000000e+00> : vector<1xf32>
    %21 = vector.multi_reduction <add>, %20, %cst_26 [1, 2] : vector<1x16x4xf32> to vector<1xf32>
    %22 = vector.shape_cast %21 : vector<1xf32> to vector<1x1x1xf32>
    %23 = vector.extract %22[0, 0, 0] : f32 from vector<1x1x1xf32>
    %cst_27 = arith.constant 9.765625E-4 : f32
    %24 = arith.mulf %23, %cst_27 : f32
    %25 = arith.mulf %19, %19 : f32
    %26 = arith.subf %24, %25 : f32
    %cst_28 = arith.constant 0.000000e+00 : f32
    %27 = arith.maximumf %26, %cst_28 : f32
    %cst_29 = arith.constant 9.99999974E-6 : f32
    %28 = arith.addf %27, %cst_29 : f32
    %29 = math.rsqrt %28 : f32
    %c0_30 = arith.constant 0 : index
    %c0_31 = arith.constant 0 : index
    %30 = vector.load %arg3[%c0_30, %c0_31] : memref<1x4xf32, #tpu.memory_space<vmem>>, vector<1x4xf32>
    %c0_32 = arith.constant 0 : index
    %c0_33 = arith.constant 0 : index
    %31 = vector.load %arg4[%c0_32, %c0_33] : memref<1x4xf32, #tpu.memory_space<vmem>>, vector<1x4xf32>
    %32 = vector.broadcast %29 : f32 to vector<1x4xf32>
    %33 = arith.mulf %30, %32 : vector<1x4xf32>
    %34 = vector.broadcast %19 : f32 to vector<1x4xf32>
    %35 = arith.mulf %34, %33 : vector<1x4xf32>
    %36 = arith.subf %31, %35 : vector<1x4xf32>
    %c0_34 = arith.constant 0 : index
    %c0_35 = arith.constant 0 : index
    %37 = vector.load %arg6[%c0_34, %c0_35] : memref<1x16xf32, #tpu.memory_space<vmem>>, vector<1x16xf32>
    %c0_36 = arith.constant 0 : index
    %c0_37 = arith.constant 0 : index
    %38 = vector.load %arg8[%c0_36, %c0_37] : memref<1x4xf32, #tpu.memory_space<vmem>>, vector<1x4xf32>
    %c0_38 = arith.constant 0 : index
    %c0_39 = arith.constant 0 : index
    %39 = vector.load %arg9[%c0_38, %c0_39] : memref<1x4xf32, #tpu.memory_space<vmem>>, vector<1x4xf32>
    %c0_i32_40 = arith.constant 0 : i32
    %c16_i32 = arith.constant 16 : i32
    %40 = arith.muli %c0_i32_40, %c16_i32 : i32
    %c16_i32_41 = arith.constant 16 : i32
    %41 = arith.muli %40, %c16_i32_41 : i32
    %42 = arith.index_cast %41 : i32 to index
    %c0_42 = arith.constant 0 : index
    %43 = vector.load %arg12[%42, %c0_42] : memref<256x4xbf16, #tpu.memory_space<vmem>>, vector<256x4xbf16>
    %44 = arith.extf %43 : vector<256x4xbf16> to vector<256x4xf32>
    %45 = vector.broadcast %33 : vector<1x4xf32> to vector<256x4xf32>
    %46 = arith.mulf %44, %45 : vector<256x4xf32>
    %47 = vector.broadcast %36 : vector<1x4xf32> to vector<256x4xf32>
    %48 = arith.addf %46, %47 : vector<256x4xf32>
    %49 = arith.truncf %48 : vector<256x4xf32> to vector<256x4xbf16>
    %c0_43 = arith.constant 0 : index
    %c0_44 = arith.constant 0 : index
    %50 = vector.load %arg5[%c0_43, %c0_44] : memref<4x16xbf16, #tpu.memory_space<vmem>>, vector<4x16xbf16>
    %cst_45 = arith.constant dense<0.000000e+00> : vector<256x16xf32>
    %51 = tpu.matmul %49, %50, %cst_45 {dimension_numbers = #tpu.dot_dimension_numbers<[1], [0], [0], [1], [0, 0, 1, 1], [], []>} : vector<256x4xbf16>, vector<4x16xbf16>, vector<256x16xf32> -> vector<256x16xf32>
    %52 = vector.broadcast %37 : vector<1x16xf32> to vector<256x16xf32>
    %53 = arith.addf %51, %52 : vector<256x16xf32>
    %cst_46 = arith.constant 5.000000e-01 : f32
    %54 = vector.broadcast %cst_46 : f32 to vector<256x16xf32>
    %55 = arith.mulf %54, %53 : vector<256x16xf32>
    %cst_47 = arith.constant 0.707106769 : f32
    %56 = vector.broadcast %cst_47 : f32 to vector<256x16xf32>
    %57 = arith.mulf %53, %56 : vector<256x16xf32>
    %58 = math.erf %57 : vector<256x16xf32>
    %cst_48 = arith.constant 1.000000e+00 : f32
    %59 = vector.broadcast %cst_48 : f32 to vector<256x16xf32>
    %60 = arith.addf %59, %58 : vector<256x16xf32>
    %61 = arith.mulf %55, %60 : vector<256x16xf32>
    %62 = arith.truncf %61 : vector<256x16xf32> to vector<256x16xbf16>
    %c0_49 = arith.constant 0 : index
    %c0_50 = arith.constant 0 : index
    %63 = vector.load %arg7[%c0_49, %c0_50] : memref<16x4xbf16, #tpu.memory_space<vmem>>, vector<16x4xbf16>
    %cst_51 = arith.constant dense<0.000000e+00> : vector<256x4xf32>
    %64 = tpu.matmul %62, %63, %cst_51 {dimension_numbers = #tpu.dot_dimension_numbers<[1], [0], [0], [1], [0, 0, 1, 1], [], []>} : vector<256x16xbf16>, vector<16x4xbf16>, vector<256x4xf32> -> vector<256x4xf32>
    %65 = vector.broadcast %38 : vector<1x4xf32> to vector<256x4xf32>
    %66 = arith.addf %64, %65 : vector<256x4xf32>
    %c3_i32 = arith.constant 3 : i32
    %67 = arith.addi %40, %c3_i32 : i32
    %68 = arith.index_cast %67 : i32 to index
    %c3_52 = arith.constant 3 : index
    %c0_53 = arith.constant 0 : index
    %69 = vector.load %arg11[%68, %c3_52, %c0_53] : memref<22x24x4xf32, #tpu.memory_space<vmem>>, vector<16x16x4xf32>
    %70 = vector.broadcast %39 : vector<1x4xf32> to vector<256x4xf32>
    %71 = arith.mulf %70, %66 : vector<256x4xf32>
    %72 = vector.shape_cast %71 : vector<256x4xf32> to vector<16x16x4xf32>
    %73 = arith.addf %72, %69 : vector<16x16x4xf32>
    %c0_54 = arith.constant 0 : index
    %74 = arith.index_cast %40 : i32 to index
    %c0_55 = arith.constant 0 : index
    %c0_56 = arith.constant 0 : index
    %75 = vector.load %arg10[%c0_54, %74, %c0_55, %c0_56] : memref<1x16x16x4xf32, #tpu.memory_space<vmem>>, vector<1x16x16x4xf32>
    %76 = vector.shape_cast %75 : vector<1x16x16x4xf32> to vector<16x16x4xf32>
    %77 = vector.shape_cast %73 : vector<16x16x4xf32> to vector<1x16x16x4xf32>
    tpu.vector_store %arg10[%c0_54, %74, %c0_55, %c0_56], %77 {strides = array<i32>} : memref<1x16x16x4xf32, #tpu.memory_space<vmem>>, vector<1x16x16x4xf32>,
    %c1_i32_57 = arith.constant 1 : i32
    return
  }
  func.func @transform_0(%arg0: i32) -> (i32, i32, i32, i32) {
    %c0_i32 = arith.constant 0 : i32
    %c0_i32_0 = arith.constant 0 : i32
    %c0_i32_1 = arith.constant 0 : i32
    %c0_i32_2 = arith.constant 0 : i32
    return %arg0, %c0_i32, %c0_i32_0, %c0_i32_1 : i32, i32, i32, i32
  }
  func.func @transform_1(%arg0: i32) -> (i32, i32, i32) {
    %c0_i32 = arith.constant 0 : i32
    %c0_i32_0 = arith.constant 0 : i32
    %c0_i32_1 = arith.constant 0 : i32
    %c0_i32_2 = arith.constant 0 : i32
    return %c0_i32, %c0_i32_0, %c0_i32_1 : i32, i32, i32
  }
  func.func @transform_2(%arg0: i32) -> (i32, i32) {
    %c0_i32 = arith.constant 0 : i32
    %c0_i32_0 = arith.constant 0 : i32
    %c0_i32_1 = arith.constant 0 : i32
    return %c0_i32, %c0_i32_0 : i32, i32
  }
  func.func @transform_3(%arg0: i32) -> (i32, i32) {
    %c0_i32 = arith.constant 0 : i32
    %c0_i32_0 = arith.constant 0 : i32
    %c0_i32_1 = arith.constant 0 : i32
    return %c0_i32, %c0_i32_0 : i32, i32
  }
  func.func @transform_4(%arg0: i32) -> (i32, i32) {
    %c0_i32 = arith.constant 0 : i32
    %c0_i32_0 = arith.constant 0 : i32
    %c0_i32_1 = arith.constant 0 : i32
    return %c0_i32, %c0_i32_0 : i32, i32
  }
  func.func @transform_5(%arg0: i32) -> (i32, i32) {
    %c0_i32 = arith.constant 0 : i32
    %c0_i32_0 = arith.constant 0 : i32
    %c0_i32_1 = arith.constant 0 : i32
    return %c0_i32, %c0_i32_0 : i32, i32
  }
  func.func @transform_6(%arg0: i32) -> (i32, i32) {
    %c0_i32 = arith.constant 0 : i32
    %c0_i32_0 = arith.constant 0 : i32
    %c0_i32_1 = arith.constant 0 : i32
    return %c0_i32, %c0_i32_0 : i32, i32
  }
  func.func @transform_7(%arg0: i32) -> (i32, i32) {
    %c0_i32 = arith.constant 0 : i32
    %c0_i32_0 = arith.constant 0 : i32
    %c0_i32_1 = arith.constant 0 : i32
    return %c0_i32, %c0_i32_0 : i32, i32
  }
  func.func @transform_8(%arg0: i32) -> (i32, i32) {
    %c0_i32 = arith.constant 0 : i32
    %c0_i32_0 = arith.constant 0 : i32
    %c0_i32_1 = arith.constant 0 : i32
    return %c0_i32, %c0_i32_0 : i32, i32
  }
  func.func @transform_9(%arg0: i32) -> (i32, i32, i32, i32) {
    %c0_i32 = arith.constant 0 : i32
    %c0_i32_0 = arith.constant 0 : i32
    %c0_i32_1 = arith.constant 0 : i32
    %c0_i32_2 = arith.constant 0 : i32
    return %arg0, %c0_i32, %c0_i32_0, %c0_i32_1 : i32, i32, i32, i32
  }
}

</mosaic_0001>

<llo_original>
// kernel: tpu_custom_call.1
$region0: #{tpu_custom_call.1}
  #allocation0 [shape = 'u32[]', space=smem, size = 0x4, offset = 0x4, fixed_abs, tag = 'smem constant byte address 0x4 - core index']
  #allocation1 [shape = 'u32[144,128]{1,0:T(1,128)}', space=vmem, size = 0x12000, scoped, tag = 'internal scratch']
  #allocation2 [shape = 'f32[22,24,4]{2,1,0:T(8,128)}', space=vmem, size = 0x42000, scoped, tag = 'scratch operand']
  #allocation3 [shape = 'bf16[256,4]{1,0:T(8,128)(2,1)}', space=vmem, size = 0x10000, scoped, tag = 'scratch operand']
  %s0 = inlined_call_operand.vmem [shape: f32[2,16,16,4], index: 0, kind: input, shape index: {}]
  %s1 = inlined_call_operand.vmem [shape: f32[7,7,4], index: 1, kind: input, shape index: {}]
  %s2 = inlined_call_operand.vmem [shape: f32[1,4], index: 2, kind: input, shape index: {}]
  %s3 = inlined_call_operand.vmem [shape: f32[1,4], index: 3, kind: input, shape index: {}]
  %s4 = inlined_call_operand.vmem [shape: bf16[4,16], index: 4, kind: input, shape index: {}]
  %s5 = inlined_call_operand.vmem [shape: f32[1,16], index: 5, kind: input, shape index: {}]
  %s6 = inlined_call_operand.vmem [shape: bf16[16,4], index: 6, kind: input, shape index: {}]
  %s7 = inlined_call_operand.vmem [shape: f32[1,4], index: 7, kind: input, shape index: {}]
  %s8 = inlined_call_operand.vmem [shape: f32[1,4], index: 8, kind: input, shape index: {}]
  %s9 = inlined_call_operand.vmem [shape: f32[2,16,16,4], index: 9, kind: output, shape index: {}]
  %s10 = sld [smem:[#allocation0]]
  $region76: #{tpu_custom_call.1} parent=0
    _
  %s12 = ssub.s32 1, %s10
  %s13 = scalar_select 0, %s12, %s10
  loop: start=0, step=1, limit=4
  $region2: #{tpu_custom_call.1} parent=0 // loop_pre_header
    _
  $region3: #{tpu_custom_call.1} parent=0 // loop_header
    %s15 = sphi 0, %s19
    %p16 = scmp.ge.s32.totalorder %s15, 4
    %s25 = sphi 0, %s27
    %s28 = sphi 0, %s25
    %s29 = sphi 0, %s28
    %s45 = sphi 0, %s29
    %s49 = sphi 0, %s49
    %s51 = sphi 0, %s49
    %s52 = sphi 0, %s51
    %s66 = sphi 0, %s52
    %s70 = sphi 0, %s70
    %s72 = sphi 0, %s70
    %s73 = sphi 0, %s72
    %s87 = sphi 0, %s73
    %s91 = sphi 0, %s91
    %s93 = sphi 0, %s91
    %s94 = sphi 0, %s93
    %s108 = sphi 0, %s94
    %s112 = sphi 0, %s112
    %s114 = sphi 0, %s112
    %s115 = sphi 0, %s114
    %s129 = sphi 0, %s115
    %s133 = sphi 0, %s133
    %s135 = sphi 0, %s133
    %s136 = sphi 0, %s135
    %s150 = sphi 0, %s136
    %s154 = sphi 0, %s154
    %s156 = sphi 0, %s154
    %s157 = sphi 0, %s156
    %s171 = sphi 0, %s157
    %s175 = sphi 0, %s175
    %s177 = sphi 0, %s175
    %s178 = sphi 0, %s177
    %s192 = sphi 0, %s178
    %s196 = sphi 0, %s196
    %s198 = sphi 0, %s196
    %s199 = sphi 0, %s198
    %s213 = sphi 0, %s199
    %s219 = sphi 0, %s221
    %s222 = sphi 0, %s219
    %s223 = sphi 0, %s222
    %s239 = sphi 0, %s223
  $region4: #{tpu_custom_call.1} parent=0 // loop_header_branch
    %18 = sbr.rel (%p16) target = $region8
  $region5: #{tpu_custom_call.1} parent=0 // loop_body
    %s20 = ssub.s32 %s15, 1
    %s21 = ssub.s32 %s15, 2
    %s22 = sadd.s32 %s15, 1
    %s23 = ssub.s32 %s15, %s22
    %p24 = scmp.eq.s32.totalorder %s23, 0
    %s26 = sadd.s32 %s25, 1
    %s27 = scalar_select %p24, %s25, %s26
    %p30 = pneg %p24
    %p31 = scmp.eq.s32.totalorder %s15, 1
    %p32 = por %p30, %p31
    %p33 = scmp.ne.s32.totalorder %s25, %s28
    %p34 = scmp.eq.s32.totalorder %s15, 0
    %p35 = por %p33, %p34
    %p36 = scmp.ne.s32.totalorder %s25, %s28
    %p37 = scmp.eq.s32.totalorder %s20, 1
    %p38 = por %p36, %p37
    %p39 = scmp.ne.s32.totalorder %s28, %s29
    %p40 = scmp.eq.s32.totalorder %s20, 0
    %p41 = por %p39, %p40
    %p42 = scmp.ne.s32.totalorder %s28, %s29
    %p43 = scmp.eq.s32.totalorder %s21, 1
    %p44 = por %p42, %p43
    %p46 = scmp.ne.s32.totalorder %s29, %s45
    %p47 = scmp.eq.s32.totalorder %s21, 0
    %p48 = por %p46, %p47
    %s50 = sadd.s32 %s49, 1
    %p53 = scmp.eq.s32.totalorder %s15, 1
    %p54 = scmp.ne.s32.totalorder %s49, %s51
    %p55 = scmp.eq.s32.totalorder %s15, 0
    %p56 = por %p54, %p55
    %p57 = scmp.ne.s32.totalorder %s49, %s51
    %p58 = scmp.eq.s32.totalorder %s20, 1
    %p59 = por %p57, %p58
    %p60 = scmp.ne.s32.totalorder %s51, %s52
    %p61 = scmp.eq.s32.totalorder %s20, 0
    %p62 = por %p60, %p61
    %p63 = scmp.ne.s32.totalorder %s51, %s52
    %p64 = scmp.eq.s32.totalorder %s21, 1
    %p65 = por %p63, %p64
    %p67 = scmp.ne.s32.totalorder %s52, %s66
    %p68 = scmp.eq.s32.totalorder %s21, 0
    %p69 = por %p67, %p68
    %s71 = sadd.s32 %s70, 1
    %p74 = scmp.eq.s32.totalorder %s15, 1
    %p75 = scmp.ne.s32.totalorder %s70, %s72
    %p76 = scmp.eq.s32.totalorder %s15, 0
    %p77 = por %p75, %p76
    %p78 = scmp.ne.s32.totalorder %s70, %s72
    %p79 = scmp.eq.s32.totalorder %s20, 1
    %p80 = por %p78, %p79
    %p81 = scmp.ne.s32.totalorder %s72, %s73
    %p82 = scmp.eq.s32.totalorder %s20, 0
    %p83 = por %p81, %p82
    %p84 = scmp.ne.s32.totalorder %s72, %s73
    %p85 = scmp.eq.s32.totalorder %s21, 1
    %p86 = por %p84, %p85
    %p88 = scmp.ne.s32.totalorder %s73, %s87
    %p89 = scmp.eq.s32.totalorder %s21, 0
    %p90 = por %p88, %p89
    %s92 = sadd.s32 %s91, 1
    %p95 = scmp.eq.s32.totalorder %s15, 1
    %p96 = scmp.ne.s32.totalorder %s91, %s93
    %p97 = scmp.eq.s32.totalorder %s15, 0
    %p98 = por %p96, %p97
    %p99 = scmp.ne.s32.totalorder %s91, %s93
    %p100 = scmp.eq.s32.totalorder %s20, 1
    %p101 = por %p99, %p100
    %p102 = scmp.ne.s32.totalorder %s93, %s94
    %p103 = scmp.eq.s32.totalorder %s20, 0
    %p104 = por %p102, %p103
    %p105 = scmp.ne.s32.totalorder %s93, %s94
    %p106 = scmp.eq.s32.totalorder %s21, 1
    %p107 = por %p105, %p106
    %p109 = scmp.ne.s32.totalorder %s94, %s108
    %p110 = scmp.eq.s32.totalorder %s21, 0
    %p111 = por %p109, %p110
    %s113 = sadd.s32 %s112, 1
    %p116 = scmp.eq.s32.totalorder %s15, 1
    %p117 = scmp.ne.s32.totalorder %s112, %s114
    %p118 = scmp.eq.s32.totalorder %s15, 0
    %p119 = por %p117, %p118
    %p120 = scmp.ne.s32.totalorder %s112, %s114
    %p121 = scmp.eq.s32.totalorder %s20, 1
    %p122 = por %p120, %p121
    %p123 = scmp.ne.s32.totalorder %s114, %s115
    %p124 = scmp.eq.s32.totalorder %s20, 0
    %p125 = por %p123, %p124
    %p126 = scmp.ne.s32.totalorder %s114, %s115
    %p127 = scmp.eq.s32.totalorder %s21, 1
    %p128 = por %p126, %p127
    %p130 = scmp.ne.s32.totalorder %s115, %s129
    %p131 = scmp.eq.s32.totalorder %s21, 0
    %p132 = por %p130, %p131
    %s134 = sadd.s32 %s133, 1
    %p137 = scmp.eq.s32.totalorder %s15, 1
    %p138 = scmp.ne.s32.totalorder %s133, %s135
    %p139 = scmp.eq.s32.totalorder %s15, 0
    %p140 = por %p138, %p139
    %p141 = scmp.ne.s32.totalorder %s133, %s135
    %p142 = scmp.eq.s32.totalorder %s20, 1
    %p143 = por %p141, %p142
    %p144 = scmp.ne.s32.totalorder %s135, %s136
    %p145 = scmp.eq.s32.totalorder %s20, 0
    %p146 = por %p144, %p145
    %p147 = scmp.ne.s32.totalorder %s135, %s136
    %p148 = scmp.eq.s32.totalorder %s21, 1
    %p149 = por %p147, %p148
    %p151 = scmp.ne.s32.totalorder %s136, %s150
    %p152 = scmp.eq.s32.totalorder %s21, 0
    %p153 = por %p151, %p152
    %s155 = sadd.s32 %s154, 1
    %p158 = scmp.eq.s32.totalorder %s15, 1
    %p159 = scmp.ne.s32.totalorder %s154, %s156
    %p160 = scmp.eq.s32.totalorder %s15, 0
    %p161 = por %p159, %p160
    %p162 = scmp.ne.s32.totalorder %s154, %s156
    %p163 = scmp.eq.s32.totalorder %s20, 1
    %p164 = por %p162, %p163
    %p165 = scmp.ne.s32.totalorder %s156, %s157
    %p166 = scmp.eq.s32.totalorder %s20, 0
    %p167 = por %p165, %p166
    %p168 = scmp.ne.s32.totalorder %s156, %s157
    %p169 = scmp.eq.s32.totalorder %s21, 1
    %p170 = por %p168, %p169
    %p172 = scmp.ne.s32.totalorder %s157, %s171
    %p173 = scmp.eq.s32.totalorder %s21, 0
    %p174 = por %p172, %p173
    %s176 = sadd.s32 %s175, 1
    %p179 = scmp.eq.s32.totalorder %s15, 1
    %p180 = scmp.ne.s32.totalorder %s175, %s177
    %p181 = scmp.eq.s32.totalorder %s15, 0
    %p182 = por %p180, %p181
    %p183 = scmp.ne.s32.totalorder %s175, %s177
    %p184 = scmp.eq.s32.totalorder %s20, 1
    %p185 = por %p183, %p184
    %p186 = scmp.ne.s32.totalorder %s177, %s178
    %p187 = scmp.eq.s32.totalorder %s20, 0
    %p188 = por %p186, %p187
    %p189 = scmp.ne.s32.totalorder %s177, %s178
    %p190 = scmp.eq.s32.totalorder %s21, 1
    %p191 = por %p189, %p190
    %p193 = scmp.ne.s32.totalorder %s178, %s192
    %p194 = scmp.eq.s32.totalorder %s21, 0
    %p195 = por %p193, %p194
    %s197 = sadd.s32 %s196, 1
    %p200 = scmp.eq.s32.totalorder %s15, 1
    %p201 = scmp.ne.s32.totalorder %s196, %s198
    %p202 = scmp.eq.s32.totalorder %s15, 0
    %p203 = por %p201, %p202
    %p204 = scmp.ne.s32.totalorder %s196, %s198
    %p205 = scmp.eq.s32.totalorder %s20, 1
    %p206 = por %p204, %p205
    %p207 = scmp.ne.s32.totalorder %s198, %s199
    %p208 = scmp.eq.s32.totalorder %s20, 0
    %p209 = por %p207, %p208
    %p210 = scmp.ne.s32.totalorder %s198, %s199
    %p211 = scmp.eq.s32.totalorder %s21, 1
    %p212 = por %p210, %p211
    %p214 = scmp.ne.s32.totalorder %s199, %s213
    %p215 = scmp.eq.s32.totalorder %s21, 0
    %p216 = por %p214, %p215
    %s217 = ssub.s32 %s15, %s22
    %p218 = scmp.eq.s32.totalorder %s217, 0
    %s220 = sadd.s32 %s219, 1
    %s221 = scalar_select %p218, %s219, %s220
    %p224 = pneg %p218
    %p225 = scmp.eq.s32.totalorder %s15, 1
    %p226 = por %p224, %p225
    %p227 = scmp.ne.s32.totalorder %s219, %s222
    %p228 = scmp.eq.s32.totalorder %s15, 0
    %p229 = por %p227, %p228
    %p230 = scmp.ne.s32.totalorder %s219, %s222
    %p231 = scmp.eq.s32.totalorder %s20, 1
    %p232 = por %p230, %p231
    %p233 = scmp.ne.s32.totalorder %s222, %s223
    %p234 = scmp.eq.s32.totalorder %s20, 0
    %p235 = por %p233, %p234
    %p236 = scmp.ne.s32.totalorder %s222, %s223
    %p237 = scmp.eq.s32.totalorder %s21, 1
    %p238 = por %p236, %p237
    %p240 = scmp.ne.s32.totalorder %s223, %s239
    %p241 = scmp.eq.s32.totalorder %s21, 0
    %p242 = por %p240, %p241
    %p243 = scmp.le.s32.totalorder 1, %s15
    %p244 = scmp.lt.s32.totalorder %s15, 3
    %p245 = pnand %p243, %p244
    %p246 = pneg %p245
    // Predicated region
    $region9: #{tpu_custom_call.1} parent=5 // pred_check
      _
    $region10: #{tpu_custom_call.1} parent=5 // pred_check_branch
      %248 = sbr.rel (%p245) target = $region12
    $region11: #{tpu_custom_call.1} parent=5 // pred_region
      %s249 = ssub.s32 %s15, 1
      // Predicated region
      $region13: #{tpu_custom_call.1} parent=11 // pred_check
        %p250 = pneg %p62
      $region14: #{tpu_custom_call.1} parent=11 // pred_check_branch
        %252 = sbr.rel (%p250) target = $region16
      $region15: #{tpu_custom_call.1} parent=11 // pred_region
        _
      $region16: #{tpu_custom_call.1} parent=11 // pred_fallthru
        _
      // Predicated region
      $region17: #{tpu_custom_call.1} parent=11 // pred_check
        %p253 = pneg %p83
      $region18: #{tpu_custom_call.1} parent=11 // pred_check_branch
        %255 = sbr.rel (%p253) target = $region20
      $region19: #{tpu_custom_call.1} parent=11 // pred_region
        _
      $region20: #{tpu_custom_call.1} parent=11 // pred_fallthru
        _
      // Predicated region
      $region21: #{tpu_custom_call.1} parent=11 // pred_check
        %p256 = pneg %p104
      $region22: #{tpu_custom_call.1} parent=11 // pred_check_branch
        %258 = sbr.rel (%p256) target = $region24
      $region23: #{tpu_custom_call.1} parent=11 // pred_region
        _
      $region24: #{tpu_custom_call.1} parent=11 // pred_fallthru
        _
      // Predicated region
      $region25: #{tpu_custom_call.1} parent=11 // pred_check
        %p259 = pneg %p125
      $region26: #{tpu_custom_call.1} parent=11 // pred_check_branch
        %261 = sbr.rel (%p259) target = $region28
      $region27: #{tpu_custom_call.1} parent=11 // pred_region
        _
      $region28: #{tpu_custom_call.1} parent=11 // pred_fallthru
        _
      // Predicated region
      $region29: #{tpu_custom_call.1} parent=11 // pred_check
        %p262 = pneg %p146
      $region30: #{tpu_custom_call.1} parent=11 // pred_check_branch
        %264 = sbr.rel (%p262) target = $region32
      $region31: #{tpu_custom_call.1} parent=11 // pred_region
        _
      $region32: #{tpu_custom_call.1} parent=11 // pred_fallthru
        _
      // Predicated region
      $region33: #{tpu_custom_call.1} parent=11 // pred_check
        %p265 = pneg %p167
      $region34: #{tpu_custom_call.1} parent=11 // pred_check_branch
        %267 = sbr.rel (%p265) target = $region36
      $region35: #{tpu_custom_call.1} parent=11 // pred_region
        _
      $region36: #{tpu_custom_call.1} parent=11 // pred_fallthru
        _
      // Predicated region
      $region37: #{tpu_custom_call.1} parent=11 // pred_check
        %p268 = pneg %p188
      $region38: #{tpu_custom_call.1} parent=11 // pred_check_branch
        %270 = sbr.rel (%p268) target = $region40
      $region39: #{tpu_custom_call.1} parent=11 // pred_region
        _
      $region40: #{tpu_custom_call.1} parent=11 // pred_fallthru
        _
      // Predicated region
      $region41: #{tpu_custom_call.1} parent=11 // pred_check
        %p271 = pneg %p209
      $region42: #{tpu_custom_call.1} parent=11 // pred_check_branch
        %273 = sbr.rel (%p271) target = $region44
      $region43: #{tpu_custom_call.1} parent=11 // pred_region
        _
      $region44: #{tpu_custom_call.1} parent=11 // pred_fallthru
        _
    $region12: #{tpu_custom_call.1} parent=5 // pred_fallthru
      _
    %p274 = scmp.lt.s32.totalorder %s15, 2
    // Predicated region
    $region45: #{tpu_custom_call.1} parent=5 // pred_check
      %p275 = pneg %p274
    $region46: #{tpu_custom_call.1} parent=5 // pred_check_branch
      %277 = sbr.rel (%p275) target = $region48
    $region47: #{tpu_custom_call.1} parent=5 // pred_region
      // Predicated region
      $region49: #{tpu_custom_call.1} parent=47 // pred_check
        %p278 = pneg %p35
      $region50: #{tpu_custom_call.1} parent=47 // pred_check_branch
        %280 = sbr.rel (%p278) target = $region52
      $region51: #{tpu_custom_call.1} parent=47 // pred_region
        %p281 = scmp.lt.s32.totalorder %s15, 1
        %s282 = scalar_select %p281, %s15, 1
        %s283 = smul.addr %s282, 32
        %s284 = smul.addr %s283, 8
        %s285 = scalar_lea.vmem %s0, %s284
      $region52: #{tpu_custom_call.1} parent=47 // pred_fallthru
        _
    $region48: #{tpu_custom_call.1} parent=5 // pred_fallthru
      _
    %p286 = scmp.le.s32.totalorder 1, %s15
    %p287 = scmp.lt.s32.totalorder %s15, 3
    %p288 = pnand %p286, %p287
    %p289 = pneg %p288
    // Predicated region
    $region53: #{tpu_custom_call.1} parent=5 // pred_check
      _
    $region54: #{tpu_custom_call.1} parent=5 // pred_check_branch
      %291 = sbr.rel (%p288) target = $region56
    $region55: #{tpu_custom_call.1} parent=5 // pred_region
      %s292 = ssub.s32 %s15, 1
      %p293 = scmp.lt.s32.totalorder %s20, 1
      %s294 = scalar_select %p293, %s20, 1
      %s295 = smul.addr %s294, 32
      %s296 = smul.addr %s295, 8
      %s297 = scalar_lea.vmem %s0, %s296
      %p298 = pneg %p41
      %p299 = pneg %p38
      %p300 = pneg %p62
      %p301 = pneg %p59
      %p302 = pneg %p83
      %p303 = pneg %p80
      %p304 = pneg %p104
      %p305 = pneg %p101
      %p306 = pneg %p125
      %p307 = pneg %p122
      %p308 = pneg %p146
      %p309 = pneg %p143
      %p310 = pneg %p167
      %p311 = pneg %p164
      %p312 = pneg %p188
      %p313 = pneg %p185
      %p314 = pneg %p209
      %p315 = pneg %p206
      %p316 = pneg %p235
      %p317 = pneg %p232
      %p318 = scmp.lt.s32.totalorder %s20, 1
      %s319 = scalar_select %p318, %s20, 1
      %s320 = smul.addr %s319, 32
      %s321 = smul.addr %s320, 8
      %s322 = scalar_lea.vmem %s9, %s321
      %p323 = scmp.lt.s32.totalorder %s20, 1
      %s324 = scalar_select %p323, %s20, 1
      %s325 = smul.addr %s324, 32
      %s326 = smul.addr %s325, 8
      %s327 = scalar_lea.vmem %s0, %s326
      %p328 = scmp.lt.s32.totalorder %s20, 1
      %s329 = scalar_select %p328, %s20, 1
      %s330 = smul.addr %s329, 32
      %s331 = smul.addr %s330, 8
      %s332 = scalar_lea.vmem %s9, %s331
      %vm334 = vcmask 31744
      %335 = vst.msk [vmem:[#allocation2] sm:$0xff] %vm334, 0.0
      %336 = vst.msk [vmem:[#allocation2 + $0x8] sm:$0xff] %vm334, 0.0
      %337 = vst.msk [vmem:[#allocation2 + $0x10] sm:$0xff] %vm334, 0.0
      %338 = vst.msk [vmem:[#allocation2 + $0x18] sm:$0xff] %vm334, 0.0
      %339 = vst.msk [vmem:[#allocation2 + $0x20] sm:$0xff] %vm334, 0.0
      %340 = vst.msk [vmem:[#allocation2 + $0x28] sm:$0xff] %vm334, 0.0
      %341 = vst.msk [vmem:[#allocation2 + $0x30] sm:$0xff] %vm334, 0.0
      %342 = vst.msk [vmem:[#allocation2 + $0x38] sm:$0xff] %vm334, 0.0
      %343 = vst.msk [vmem:[#allocation2 + $0x40] sm:$0xff] %vm334, 0.0
      %s344 = scalar_lea.vmem [#allocation2], 456
      %345 = vst.msk [vmem:[%s344] sm:$0xff] %vm334, 0.0
      %346 = vst.msk [vmem:[%s344 + $0x8] sm:$0xff] %vm334, 0.0
      %347 = vst.msk [vmem:[%s344 + $0x10] sm:$0xff] %vm334, 0.0
      %348 = vst.msk [vmem:[%s344 + $0x18] sm:$0xff] %vm334, 0.0
      %349 = vst.msk [vmem:[%s344 + $0x20] sm:$0xff] %vm334, 0.0
      %350 = vst.msk [vmem:[%s344 + $0x28] sm:$0xff] %vm334, 0.0
      %351 = vst.msk [vmem:[%s344 + $0x30] sm:$0xff] %vm334, 0.0
      %352 = vst.msk [vmem:[%s344 + $0x38] sm:$0xff] %vm334, 0.0
      %353 = vst.msk [vmem:[%s344 + $0x40] sm:$0xff] %vm334, 0.0
      %s354 = scalar_lea.vmem [#allocation2], 72
      %vm355 = vcmask 26624
      %356 = vst.msk [vmem:[%s354] sm:$0x7] %vm355, 0.0
      %357 = vst.msk [vmem:[%s354 + $0x18] sm:$0x7] %vm355, 0.0
      %358 = vst.msk [vmem:[%s354 + $0x30] sm:$0x7] %vm355, 0.0
      %359 = vst.msk [vmem:[%s354 + $0x48] sm:$0x7] %vm355, 0.0
      %360 = vst.msk [vmem:[%s354 + $0x60] sm:$0x7] %vm355, 0.0
      %361 = vst.msk [vmem:[%s354 + $0x78] sm:$0x7] %vm355, 0.0
      %362 = vst.msk [vmem:[%s354 + $0x90] sm:$0x7] %vm355, 0.0
      %363 = vst.msk [vmem:[%s354 + $0xa8] sm:$0x7] %vm355, 0.0
      %364 = vst.msk [vmem:[%s354 + $0xc0] sm:$0x7] %vm355, 0.0
      %365 = vst.msk [vmem:[%s354 + $0xd8] sm:$0x7] %vm355, 0.0
      %366 = vst.msk [vmem:[%s354 + $0xf0] sm:$0x7] %vm355, 0.0
      %367 = vst.msk [vmem:[%s354 + $0x108] sm:$0x7] %vm355, 0.0
      %368 = vst.msk [vmem:[%s354 + $0x120] sm:$0x7] %vm355, 0.0
      %369 = vst.msk [vmem:[%s354 + $0x138] sm:$0x7] %vm355, 0.0
      %370 = vst.msk [vmem:[%s354 + $0x150] sm:$0x7] %vm355, 0.0
      %371 = vst.msk [vmem:[%s354 + $0x168] sm:$0x7] %vm355, 0.0
      %vm372 = vcmask 28672
      %373 = vst.msk [vmem:[%s354 + $0x13] sm:$0x1f] %vm372, 0.0
      %374 = vst.msk [vmem:[%s354 + $0x2b] sm:$0x1f] %vm372, 0.0
      %375 = vst.msk [vmem:[%s354 + $0x43] sm:$0x1f] %vm372, 0.0
      %376 = vst.msk [vmem:[%s354 + $0x5b] sm:$0x1f] %vm372, 0.0
      %377 = vst.msk [vmem:[%s354 + $0x73] sm:$0x1f] %vm372, 0.0
      %378 = vst.msk [vmem:[%s354 + $0x8b] sm:$0x1f] %vm372, 0.0
      %379 = vst.msk [vmem:[%s354 + $0xa3] sm:$0x1f] %vm372, 0.0
      %380 = vst.msk [vmem:[%s354 + $0xbb] sm:$0x1f] %vm372, 0.0
      %381 = vst.msk [vmem:[%s354 + $0xd3] sm:$0x1f] %vm372, 0.0
      %382 = vst.msk [vmem:[%s354 + $0xeb] sm:$0x1f] %vm372, 0.0
      %383 = vst.msk [vmem:[%s354 + $0x103] sm:$0x1f] %vm372, 0.0
      %384 = vst.msk [vmem:[%s354 + $0x11b] sm:$0x1f] %vm372, 0.0
      %385 = vst.msk [vmem:[%s354 + $0x133] sm:$0x1f] %vm372, 0.0
      %386 = vst.msk [vmem:[%s354 + $0x14b] sm:$0x1f] %vm372, 0.0
      %387 = vst.msk [vmem:[%s354 + $0x163] sm:$0x1f] %vm372, 0.0
      %388 = vst.msk [vmem:[%s354 + $0x17b] sm:$0x1f] %vm372, 0.0
      %v389 = vld [vmem:[%s327] sm:$0xff]
      %v390 = vld [vmem:[%s327 + $0x8] sm:$0xff]
      %v391 = vld [vmem:[%s327 + $0x10] sm:$0xff]
      %v392 = vld [vmem:[%s327 + $0x18] sm:$0xff]
      %v393 = vld [vmem:[%s327 + $0x20] sm:$0xff]
      %v394 = vld [vmem:[%s327 + $0x28] sm:$0xff]
      %v395 = vld [vmem:[%s327 + $0x30] sm:$0xff]
      %v396 = vld [vmem:[%s327 + $0x38] sm:$0xff]
      %v397 = vld [vmem:[%s327 + $0x40] sm:$0xff]
      %v398 = vld [vmem:[%s327 + $0x48] sm:$0xff]
      %v399 = vld [vmem:[%s327 + $0x50] sm:$0xff]
      %v400 = vld [vmem:[%s327 + $0x58] sm:$0xff]
      %v401 = vld [vmem:[%s327 + $0x60] sm:$0xff]
      %v402 = vld [vmem:[%s327 + $0x68] sm:$0xff]
      %v403 = vld [vmem:[%s327 + $0x70] sm:$0xff]
      %v404 = vld [vmem:[%s327 + $0x78] sm:$0xff]
      %v405 = vld [vmem:[%s327 + $0x80] sm:$0xff]
      %v406 = vld [vmem:[%s327 + $0x88] sm:$0xff]
      %v407 = vld [vmem:[%s327 + $0x90] sm:$0xff]
      %v408 = vld [vmem:[%s327 + $0x98] sm:$0xff]
      %v409 = vld [vmem:[%s327 + $0xa0] sm:$0xff]
      %v410 = vld [vmem:[%s327 + $0xa8] sm:$0xff]
      %v411 = vld [vmem:[%s327 + $0xb0] sm:$0xff]
      %v412 = vld [vmem:[%s327 + $0xb8] sm:$0xff]
      %v413 = vld [vmem:[%s327 + $0xc0] sm:$0xff]
      %v414 = vld [vmem:[%s327 + $0xc8] sm:$0xff]
      %v415 = vld [vmem:[%s327 + $0xd0] sm:$0xff]
      %v416 = vld [vmem:[%s327 + $0xd8] sm:$0xff]
      %v417 = vld [vmem:[%s327 + $0xe0] sm:$0xff]
      %v418 = vld [vmem:[%s327 + $0xe8] sm:$0xff]
      %v419 = vld [vmem:[%s327 + $0xf0] sm:$0xff]
      %v420 = vld [vmem:[%s327 + $0xf8] sm:$0xff]
      %421 = vst.msk [vmem:[%s354 + $0x3] sm:$0xff] %vm334, %v389
      %422 = vst.msk [vmem:[%s354 + $0xb] sm:$0xff] %vm334, %v390
      %423 = vst.msk [vmem:[%s354 + $0x1b] sm:$0xff] %vm334, %v391
      %424 = vst.msk [vmem:[%s354 + $0x23] sm:$0xff] %vm334, %v392
      %425 = vst.msk [vmem:[%s354 + $0x33] sm:$0xff] %vm334, %v393
      %426 = vst.msk [vmem:[%s354 + $0x3b] sm:$0xff] %vm334, %v394
      %427 = vst.msk [vmem:[%s354 + $0x4b] sm:$0xff] %vm334, %v395
      %428 = vst.msk [vmem:[%s354 + $0x53] sm:$0xff] %vm334, %v396
      %429 = vst.msk [vmem:[%s354 + $0x63] sm:$0xff] %vm334, %v397
      %430 = vst.msk [vmem:[%s354 + $0x6b] sm:$0xff] %vm334, %v398
      %431 = vst.msk [vmem:[%s354 + $0x7b] sm:$0xff] %vm334, %v399
      %432 = vst.msk [vmem:[%s354 + $0x83] sm:$0xff] %vm334, %v400
      %433 = vst.msk [vmem:[%s354 + $0x93] sm:$0xff] %vm334, %v401
      %434 = vst.msk [vmem:[%s354 + $0x9b] sm:$0xff] %vm334, %v402
      %435 = vst.msk [vmem:[%s354 + $0xab] sm:$0xff] %vm334, %v403
      %436 = vst.msk [vmem:[%s354 + $0xb3] sm:$0xff] %vm334, %v404
      %437 = vst.msk [vmem:[%s354 + $0xc3] sm:$0xff] %vm334, %v405
      %438 = vst.msk [vmem:[%s354 + $0xcb] sm:$0xff] %vm334, %v406
      %439 = vst.msk [vmem:[%s354 + $0xdb] sm:$0xff] %vm334, %v407
      %440 = vst.msk [vmem:[%s354 + $0xe3] sm:$0xff] %vm334, %v408
      %441 = vst.msk [vmem:[%s354 + $0xf3] sm:$0xff] %vm334, %v409
      %442 = vst.msk [vmem:[%s354 + $0xfb] sm:$0xff] %vm334, %v410
      %443 = vst.msk [vmem:[%s354 + $0x10b] sm:$0xff] %vm334, %v411
      %444 = vst.msk [vmem:[%s354 + $0x113] sm:$0xff] %vm334, %v412
      %445 = vst.msk [vmem:[%s354 + $0x123] sm:$0xff] %vm334, %v413
      %446 = vst.msk [vmem:[%s354 + $0x12b] sm:$0xff] %vm334, %v414
      %447 = vst.msk [vmem:[%s354 + $0x13b] sm:$0xff] %vm334, %v415
      %448 = vst.msk [vmem:[%s354 + $0x143] sm:$0xff] %vm334, %v416
      %449 = vst.msk [vmem:[%s354 + $0x153] sm:$0xff] %vm334, %v417
      %450 = vst.msk [vmem:[%s354 + $0x15b] sm:$0xff] %vm334, %v418
      %451 = vst.msk [vmem:[%s354 + $0x16b] sm:$0xff] %vm334, %v419
      %452 = vst.msk [vmem:[%s354 + $0x173] sm:$0xff] %vm334, %v420
      %v453 = vld [vmem:[%s1] sm:$0x7f]
      %v454 = vld [vmem:[%s1 + $0x8] sm:$0x7f]
      %v455 = vld [vmem:[%s1 + $0x10] sm:$0x7f]
      %v456 = vld [vmem:[%s1 + $0x18] sm:$0x7f]
      %v457 = vld [vmem:[%s1 + $0x20] sm:$0x7f]
      %v458 = vld [vmem:[%s1 + $0x28] sm:$0x7f]
      %v459 = vld [vmem:[%s1 + $0x30] sm:$0x7f]
      loop: start=0, step=1, limit=4
      $region57: #{tpu_custom_call.1} parent=55 // loop_pre_header
        _
      $region58: #{tpu_custom_call.1} parent=55 // loop_header
        %s461 = sphi 0, %s465
        %p462 = scmp.ge.s32.totalorder %s461, 4
        %v466 = vphi 0.0, %v2463
        %v467 = vphi 0.0, %v2464
        %v468 = vphi 0.0, %v2487
        %v469 = vphi 0.0, %v2488
      $region59: #{tpu_custom_call.1} parent=55 // loop_header_branch
        %464 = sbr.rel (%p462) target = $region63
      $region60: #{tpu_custom_call.1} parent=55 // loop_body
        %s470 = smul.u32 %s461, 4
        %s471 = smul.u32 %s470, 24
        %s472 = scalar_lea.vmem [#allocation2], %s471
        %v473 = vld [vmem:[%s472] sm:$0xff]
        %v474 = vld [vmem:[%s472 + $0x8] sm:$0xff]
        %v475 = vld [vmem:[%s472 + $0x10] sm:$0xff]
        %v476 = vld [vmem:[%s472 + $0x18] sm:$0xff]
        %v477 = vld [vmem:[%s472 + $0x20] sm:$0xff]
        %v478 = vld [vmem:[%s472 + $0x28] sm:$0xff]
        %v479 = vld [vmem:[%s472 + $0x30] sm:$0xff]
        %v480 = vld [vmem:[%s472 + $0x38] sm:$0xff]
        %v481 = vld [vmem:[%s472 + $0x40] sm:$0xff]
        %v482 = vld [vmem:[%s472 + $0x48] sm:$0xff]
        %v483 = vld [vmem:[%s472 + $0x50] sm:$0xff]
        %v484 = vld [vmem:[%s472 + $0x58] sm:$0xff]
        %v485 = vlaneseq
        %v486 = vshrl.u32 %v485, 7
        %v487 = vsub.s32 0, %v486
        %v488 = vrot.slane %v453, %v487
        %v489 = vmul.f32 %v473, %v488
        %v490 = vmul.f32 %v474, %v488
        %v491 = vmul.f32 %v476, %v488
        %v492 = vmul.f32 %v477, %v488
        %v493 = vmul.f32 %v479, %v488
        %v494 = vmul.f32 %v480, %v488
        %v495 = vmul.f32 %v482, %v488
        %v496 = vmul.f32 %v483, %v488
        %v497 = vadd.f32 %v489, 0.0
        %v498 = vadd.f32 %v490, 0.0
        %v499 = vadd.f32 %v491, 0.0
        %v500 = vadd.f32 %v492, 0.0
        %v501 = vadd.f32 %v493, 0.0
        %v502 = vadd.f32 %v494, 0.0
        %v503 = vadd.f32 %v495, 0.0
        %v504 = vadd.f32 %v496, 0.0
        %v505 = vrot.slane %v473, 1
        %v506 = vrot.slane %v474, 1
        %v507 = vrot.slane %v475, 1
        %v508 = vrot.slane %v476, 1
        %v509 = vrot.slane %v477, 1
        %v510 = vrot.slane %v478, 1
        %v511 = vrot.slane %v479, 1
        %v512 = vrot.slane %v480, 1
        %v513 = vrot.slane %v481, 1
        %v514 = vrot.slane %v482, 1
        %v515 = vrot.slane %v483, 1
        %v516 = vrot.slane %v484, 1
        %v517 = vlaneseq
        %v518 = vshrl.u32 %v517, 7
        %vm519 = vcmp.lt.s32.totalorder %v518, 7
        %v520 = vsel %vm519, %v515, %v516
        %v521 = vsel %vm519, %v514, %v515
        %v522 = vsel %vm519, %v512, %v513
        %v523 = vsel %vm519, %v511, %v512
        %v524 = vsel %vm519, %v509, %v510
        %v525 = vsel %vm519, %v508, %v509
        %v526 = vsel %vm519, %v506, %v507
        %v527 = vsel %vm519, %v505, %v506
        %v528 = vlaneseq
        %v529 = vshrl.u32 %v528, 7
        %v530 = vsub.s32 1, %v529
        %v531 = vrot.slane %v453, %v530
        %v532 = vmul.f32 %v527, %v531
        %v533 = vmul.f32 %v526, %v531
        %v534 = vmul.f32 %v525, %v531
        %v535 = vmul.f32 %v524, %v531
        %v536 = vmul.f32 %v523, %v531
        %v537 = vmul.f32 %v522, %v531
        %v538 = vmul.f32 %v521, %v531
        %v539 = vmul.f32 %v520, %v531
        %v540 = vadd.f32 %v497, %v532
        %v541 = vadd.f32 %v498, %v533
        %v542 = vadd.f32 %v499, %v534
        %v543 = vadd.f32 %v500, %v535
        %v544 = vadd.f32 %v501, %v536
        %v545 = vadd.f32 %v502, %v537
        %v546 = vadd.f32 %v503, %v538
        %v547 = vadd.f32 %v504, %v539
        %v548 = vrot.slane %v473, 2
        %v549 = vrot.slane %v474, 2
        %v550 = vrot.slane %v475, 2
        %v551 = vrot.slane %v476, 2
        %v552 = vrot.slane %v477, 2
        %v553 = vrot.slane %v478, 2
        %v554 = vrot.slane %v479, 2
        %v555 = vrot.slane %v480, 2
        %v556 = vrot.slane %v481, 2
        %v557 = vrot.slane %v482, 2
        %v558 = vrot.slane %v483, 2
        %v559 = vrot.slane %v484, 2
        %vm560 = vcmp.lt.s32.totalorder %v518, 6
        %v561 = vsel %vm560, %v558, %v559
        %v562 = vsel %vm560, %v557, %v558
        %v563 = vsel %vm560, %v555, %v556
        %v564 = vsel %vm560, %v554, %v555
        %v565 = vsel %vm560, %v552, %v553
        %v566 = vsel %vm560, %v551, %v552
        %v567 = vsel %vm560, %v549, %v550
        %v568 = vsel %vm560, %v548, %v549
        %v569 = vlaneseq
        %v570 = vshrl.u32 %v569, 7
        %v571 = vsub.s32 2, %v570
        %v572 = vrot.slane %v453, %v571
        %v573 = vmul.f32 %v568, %v572
        %v574 = vmul.f32 %v567, %v572
        %v575 = vmul.f32 %v566, %v572
        %v576 = vmul.f32 %v565, %v572
        %v577 = vmul.f32 %v564, %v572
        %v578 = vmul.f32 %v563, %v572
        %v579 = vmul.f32 %v562, %v572
        %v580 = vmul.f32 %v561, %v572
        %v581 = vadd.f32 %v540, %v573
        %v582 = vadd.f32 %v541, %v574
        %v583 = vadd.f32 %v542, %v575
        %v584 = vadd.f32 %v543, %v576
        %v585 = vadd.f32 %v544, %v577
        %v586 = vadd.f32 %v545, %v578
        %v587 = vadd.f32 %v546, %v579
        %v588 = vadd.f32 %v547, %v580
        %v589 = vrot.slane %v473, 3
        %v590 = vrot.slane %v474, 3
        %v591 = vrot.slane %v475, 3
        %v592 = vrot.slane %v476, 3
        %v593 = vrot.slane %v477, 3
        %v594 = vrot.slane %v478, 3
        %v595 = vrot.slane %v479, 3
        %v596 = vrot.slane %v480, 3
        %v597 = vrot.slane %v481, 3
        %v598 = vrot.slane %v482, 3
        %v599 = vrot.slane %v483, 3
        %v600 = vrot.slane %v484, 3
        %vm601 = vcmp.lt.s32.totalorder %v518, 5
        %v602 = vsel %vm601, %v599, %v600
        %v603 = vsel %vm601, %v598, %v599
        %v604 = vsel %vm601, %v596, %v597
        %v605 = vsel %vm601, %v595, %v596
        %v606 = vsel %vm601, %v593, %v594
        %v607 = vsel %vm601, %v592, %v593
        %v608 = vsel %vm601, %v590, %v591
        %v609 = vsel %vm601, %v589, %v590
        %v610 = vlaneseq
        %v611 = vshrl.u32 %v610, 7
        %v612 = vsub.s32 3, %v611
        %v613 = vrot.slane %v453, %v612
        %v614 = vmul.f32 %v609, %v613
        %v615 = vmul.f32 %v608, %v613
        %v616 = vmul.f32 %v607, %v613
        %v617 = vmul.f32 %v606, %v613
        %v618 = vmul.f32 %v605, %v613
        %v619 = vmul.f32 %v604, %v613
        %v620 = vmul.f32 %v603, %v613
        %v621 = vmul.f32 %v602, %v613
        %v622 = vadd.f32 %v581, %v614
        %v623 = vadd.f32 %v582, %v615
        %v624 = vadd.f32 %v583, %v616
        %v625 = vadd.f32 %v584, %v617
        %v626 = vadd.f32 %v585, %v618
        %v627 = vadd.f32 %v586, %v619
        %v628 = vadd.f32 %v587, %v620
        %v629 = vadd.f32 %v588, %v621
        %v630 = vrot.slane %v473, 4
        %v631 = vrot.slane %v474, 4
        %v632 = vrot.slane %v475, 4
        %v633 = vrot.slane %v476, 4
        %v634 = vrot.slane %v477, 4
        %v635 = vrot.slane %v478, 4
        %v636 = vrot.slane %v479, 4
        %v637 = vrot.slane %v480, 4
        %v638 = vrot.slane %v481, 4
        %v639 = vrot.slane %v482, 4
        %v640 = vrot.slane %v483, 4
        %v641 = vrot.slane %v484, 4
        %vm642 = vcmp.lt.s32.totalorder %v518, 4
        %v643 = vsel %vm642, %v640, %v641
        %v644 = vsel %vm642, %v639, %v640
        %v645 = vsel %vm642, %v637, %v638
        %v646 = vsel %vm642, %v636, %v637
        %v647 = vsel %vm642, %v634, %v635
        %v648 = vsel %vm642, %v633, %v634
        %v649 = vsel %vm642, %v631, %v632
        %v650 = vsel %vm642, %v630, %v631
        %v651 = vlaneseq
        %v652 = vshrl.u32 %v651, 7
        %v653 = vsub.s32 4, %v652
        %v654 = vrot.slane %v453, %v653
        %v655 = vmul.f32 %v650, %v654
        %v656 = vmul.f32 %v649, %v654
        %v657 = vmul.f32 %v648, %v654
        %v658 = vmul.f32 %v647, %v654
        %v659 = vmul.f32 %v646, %v654
        %v660 = vmul.f32 %v645, %v654
        %v661 = vmul.f32 %v644, %v654
        %v662 = vmul.f32 %v643, %v654
        %v663 = vadd.f32 %v622, %v655
        %v664 = vadd.f32 %v623, %v656
        %v665 = vadd.f32 %v624, %v657
        %v666 = vadd.f32 %v625, %v658
        %v667 = vadd.f32 %v626, %v659
        %v668 = vadd.f32 %v627, %v660
        %v669 = vadd.f32 %v628, %v661
        %v670 = vadd.f32 %v629, %v662
        %v671 = vrot.slane %v473, 5
        %v672 = vrot.slane %v474, 5
        %v673 = vrot.slane %v475, 5
        %v674 = vrot.slane %v476, 5
        %v675 = vrot.slane %v477, 5
        %v676 = vrot.slane %v478, 5
        %v677 = vrot.slane %v479, 5
        %v678 = vrot.slane %v480, 5
        %v679 = vrot.slane %v481, 5
        %v680 = vrot.slane %v482, 5
        %v681 = vrot.slane %v483, 5
        %v682 = vrot.slane %v484, 5
        %vm683 = vcmp.lt.s32.totalorder %v518, 3
        %v684 = vsel %vm683, %v681, %v682
        %v685 = vsel %vm683, %v680, %v681
        %v686 = vsel %vm683, %v678, %v679
        %v687 = vsel %vm683, %v677, %v678
        %v688 = vsel %vm683, %v675, %v676
        %v689 = vsel %vm683, %v674, %v675
        %v690 = vsel %vm683, %v672, %v673
        %v691 = vsel %vm683, %v671, %v672
        %v692 = vlaneseq
        %v693 = vshrl.u32 %v692, 7
        %v694 = vsub.s32 5, %v693
        %v695 = vrot.slane %v453, %v694
        %v696 = vmul.f32 %v691, %v695
        %v697 = vmul.f32 %v690, %v695
        %v698 = vmul.f32 %v689, %v695
        %v699 = vmul.f32 %v688, %v695
        %v700 = vmul.f32 %v687, %v695
        %v701 = vmul.f32 %v686, %v695
        %v702 = vmul.f32 %v685, %v695
        %v703 = vmul.f32 %v684, %v695
        %v704 = vadd.f32 %v663, %v696
        %v705 = vadd.f32 %v664, %v697
        %v706 = vadd.f32 %v665, %v698
        %v707 = vadd.f32 %v666, %v699
        %v708 = vadd.f32 %v667, %v700
        %v709 = vadd.f32 %v668, %v701
        %v710 = vadd.f32 %v669, %v702
        %v711 = vadd.f32 %v670, %v703
        %v712 = vrot.slane %v473, 6
        %v713 = vrot.slane %v474, 6
        %v714 = vrot.slane %v475, 6
        %v715 = vrot.slane %v476, 6
        %v716 = vrot.slane %v477, 6
        %v717 = vrot.slane %v478, 6
        %v718 = vrot.slane %v479, 6
        %v719 = vrot.slane %v480, 6
        %v720 = vrot.slane %v481, 6
        %v721 = vrot.slane %v482, 6
        %v722 = vrot.slane %v483, 6
        %v723 = vrot.slane %v484, 6
        %vm724 = vcmp.lt.s32.totalorder %v518, 2
        %v725 = vsel %vm724, %v722, %v723
        %v726 = vsel %vm724, %v721, %v722
        %v727 = vsel %vm724, %v719, %v720
        %v728 = vsel %vm724, %v718, %v719
        %v729 = vsel %vm724, %v716, %v717
        %v730 = vsel %vm724, %v715, %v716
        %v731 = vsel %vm724, %v713, %v714
        %v732 = vsel %vm724, %v712, %v713
        %v733 = vlaneseq
        %v734 = vshrl.u32 %v733, 7
        %v735 = vsub.s32 6, %v734
        %v736 = vrot.slane %v453, %v735
        %v737 = vmul.f32 %v732, %v736
        %v738 = vmul.f32 %v731, %v736
        %v739 = vmul.f32 %v730, %v736
        %v740 = vmul.f32 %v729, %v736
        %v741 = vmul.f32 %v728, %v736
        %v742 = vmul.f32 %v727, %v736
        %v743 = vmul.f32 %v726, %v736
        %v744 = vmul.f32 %v725, %v736
        %v745 = vadd.f32 %v704, %v737
        %v746 = vadd.f32 %v705, %v738
        %v747 = vadd.f32 %v706, %v739
        %v748 = vadd.f32 %v707, %v740
        %v749 = vadd.f32 %v708, %v741
        %v750 = vadd.f32 %v709, %v742
        %v751 = vadd.f32 %v710, %v743
        %v752 = vadd.f32 %v711, %v744
        %s753 = sadd.s32 %s470, 1
        %s754 = smul.u32 %s753, 24
        %s755 = scalar_lea.vmem [#allocation2], %s754
        %v756 = vld [vmem:[%s755] sm:$0xff]
        %v757 = vld [vmem:[%s755 + $0x8] sm:$0xff]
        %v758 = vld [vmem:[%s755 + $0x10] sm:$0xff]
        %v759 = vld [vmem:[%s755 + $0x18] sm:$0xff]
        %v760 = vld [vmem:[%s755 + $0x20] sm:$0xff]
        %v761 = vld [vmem:[%s755 + $0x28] sm:$0xff]
        %v762 = vld [vmem:[%s755 + $0x30] sm:$0xff]
        %v763 = vld [vmem:[%s755 + $0x38] sm:$0xff]
        %v764 = vld [vmem:[%s755 + $0x40] sm:$0xff]
        %v765 = vld [vmem:[%s755 + $0x48] sm:$0xff]
        %v766 = vld [vmem:[%s755 + $0x50] sm:$0xff]
        %v767 = vld [vmem:[%s755 + $0x58] sm:$0xff]
        %v768 = vlaneseq
        %v769 = vshrl.u32 %v768, 7
        %v770 = vsub.s32 0, %v769
        %v771 = vrot.slane %v454, %v770
        %v772 = vmul.f32 %v756, %v771
        %v773 = vmul.f32 %v757, %v771
        %v774 = vmul.f32 %v759, %v771
        %v775 = vmul.f32 %v760, %v771
        %v776 = vmul.f32 %v762, %v771
        %v777 = vmul.f32 %v763, %v771
        %v778 = vmul.f32 %v765, %v771
        %v779 = vmul.f32 %v766, %v771
        %v780 = vadd.f32 %v745, %v772
        %v781 = vadd.f32 %v746, %v773
        %v782 = vadd.f32 %v747, %v774
        %v783 = vadd.f32 %v748, %v775
        %v784 = vadd.f32 %v749, %v776
        %v785 = vadd.f32 %v750, %v777
        %v786 = vadd.f32 %v751, %v778
        %v787 = vadd.f32 %v752, %v779
        %v788 = vrot.slane %v756, 1
        %v789 = vrot.slane %v757, 1
        %v790 = vrot.slane %v758, 1
        %v791 = vrot.slane %v759, 1
        %v792 = vrot.slane %v760, 1
        %v793 = vrot.slane %v761, 1
        %v794 = vrot.slane %v762, 1
        %v795 = vrot.slane %v763, 1
        %v796 = vrot.slane %v764, 1
        %v797 = vrot.slane %v765, 1
        %v798 = vrot.slane %v766, 1
        %v799 = vrot.slane %v767, 1
        %v800 = vsel %vm519, %v798, %v799
        %v801 = vsel %vm519, %v797, %v798
        %v802 = vsel %vm519, %v795, %v796
        %v803 = vsel %vm519, %v794, %v795
        %v804 = vsel %vm519, %v792, %v793
        %v805 = vsel %vm519, %v791, %v792
        %v806 = vsel %vm519, %v789, %v790
        %v807 = vsel %vm519, %v788, %v789
        %v808 = vlaneseq
        %v809 = vshrl.u32 %v808, 7
        %v810 = vsub.s32 1, %v809
        %v811 = vrot.slane %v454, %v810
        %v812 = vmul.f32 %v807, %v811
        %v813 = vmul.f32 %v806, %v811
        %v814 = vmul.f32 %v805, %v811
        %v815 = vmul.f32 %v804, %v811
        %v816 = vmul.f32 %v803, %v811
        %v817 = vmul.f32 %v802, %v811
        %v818 = vmul.f32 %v801, %v811
        %v819 = vmul.f32 %v800, %v811
        %v820 = vadd.f32 %v780, %v812
        %v821 = vadd.f32 %v781, %v813
        %v822 = vadd.f32 %v782, %v814
        %v823 = vadd.f32 %v783, %v815
        %v824 = vadd.f32 %v784, %v816
        %v825 = vadd.f32 %v785, %v817
        %v826 = vadd.f32 %v786, %v818
        %v827 = vadd.f32 %v787, %v819
        %v828 = vrot.slane %v756, 2
        %v829 = vrot.slane %v757, 2
        %v830 = vrot.slane %v758, 2
        %v831 = vrot.slane %v759, 2
        %v832 = vrot.slane %v760, 2
        %v833 = vrot.slane %v761, 2
        %v834 = vrot.slane %v762, 2
        %v835 = vrot.slane %v763, 2
        %v836 = vrot.slane %v764, 2
        %v837 = vrot.slane %v765, 2
        %v838 = vrot.slane %v766, 2
        %v839 = vrot.slane %v767, 2
        %v840 = vsel %vm560, %v838, %v839
        %v841 = vsel %vm560, %v837, %v838
        %v842 = vsel %vm560, %v835, %v836
        %v843 = vsel %vm560, %v834, %v835
        %v844 = vsel %vm560, %v832, %v833
        %v845 = vsel %vm560, %v831, %v832
        %v846 = vsel %vm560, %v829, %v830
        %v847 = vsel %vm560, %v828, %v829
        %v848 = vlaneseq
        %v849 = vshrl.u32 %v848, 7
        %v850 = vsub.s32 2, %v849
        %v851 = vrot.slane %v454, %v850
        %v852 = vmul.f32 %v847, %v851
        %v853 = vmul.f32 %v846, %v851
        %v854 = vmul.f32 %v845, %v851
        %v855 = vmul.f32 %v844, %v851
        %v856 = vmul.f32 %v843, %v851
        %v857 = vmul.f32 %v842, %v851
        %v858 = vmul.f32 %v841, %v851
        %v859 = vmul.f32 %v840, %v851
        %v860 = vadd.f32 %v820, %v852
        %v861 = vadd.f32 %v821, %v853
        %v862 = vadd.f32 %v822, %v854
        %v863 = vadd.f32 %v823, %v855
        %v864 = vadd.f32 %v824, %v856
        %v865 = vadd.f32 %v825, %v857
        %v866 = vadd.f32 %v826, %v858
        %v867 = vadd.f32 %v827, %v859
        %v868 = vrot.slane %v756, 3
        %v869 = vrot.slane %v757, 3
        %v870 = vrot.slane %v758, 3
        %v871 = vrot.slane %v759, 3
        %v872 = vrot.slane %v760, 3
        %v873 = vrot.slane %v761, 3
        %v874 = vrot.slane %v762, 3
        %v875 = vrot.slane %v763, 3
        %v876 = vrot.slane %v764, 3
        %v877 = vrot.slane %v765, 3
        %v878 = vrot.slane %v766, 3
        %v879 = vrot.slane %v767, 3
        %v880 = vsel %vm601, %v878, %v879
        %v881 = vsel %vm601, %v877, %v878
        %v882 = vsel %vm601, %v875, %v876
        %v883 = vsel %vm601, %v874, %v875
        %v884 = vsel %vm601, %v872, %v873
        %v885 = vsel %vm601, %v871, %v872
        %v886 = vsel %vm601, %v869, %v870
        %v887 = vsel %vm601, %v868, %v869
        %v888 = vlaneseq
        %v889 = vshrl.u32 %v888, 7
        %v890 = vsub.s32 3, %v889
        %v891 = vrot.slane %v454, %v890
        %v892 = vmul.f32 %v887, %v891
        %v893 = vmul.f32 %v886, %v891
        %v894 = vmul.f32 %v885, %v891
        %v895 = vmul.f32 %v884, %v891
        %v896 = vmul.f32 %v883, %v891
        %v897 = vmul.f32 %v882, %v891
        %v898 = vmul.f32 %v881, %v891
        %v899 = vmul.f32 %v880, %v891
        %v900 = vadd.f32 %v860, %v892
        %v901 = vadd.f32 %v861, %v893
        %v902 = vadd.f32 %v862, %v894
        %v903 = vadd.f32 %v863, %v895
        %v904 = vadd.f32 %v864, %v896
        %v905 = vadd.f32 %v865, %v897
        %v906 = vadd.f32 %v866, %v898
        %v907 = vadd.f32 %v867, %v899
        %v908 = vrot.slane %v756, 4
        %v909 = vrot.slane %v757, 4
        %v910 = vrot.slane %v758, 4
        %v911 = vrot.slane %v759, 4
        %v912 = vrot.slane %v760, 4
        %v913 = vrot.slane %v761, 4
        %v914 = vrot.slane %v762, 4
        %v915 = vrot.slane %v763, 4
        %v916 = vrot.slane %v764, 4
        %v917 = vrot.slane %v765, 4
        %v918 = vrot.slane %v766, 4
        %v919 = vrot.slane %v767, 4
        %v920 = vsel %vm642, %v918, %v919
        %v921 = vsel %vm642, %v917, %v918
        %v922 = vsel %vm642, %v915, %v916
        %v923 = vsel %vm642, %v914, %v915
        %v924 = vsel %vm642, %v912, %v913
        %v925 = vsel %vm642, %v911, %v912
        %v926 = vsel %vm642, %v909, %v910
        %v927 = vsel %vm642, %v908, %v909
        %v928 = vlaneseq
        %v929 = vshrl.u32 %v928, 7
        %v930 = vsub.s32 4, %v929
        %v931 = vrot.slane %v454, %v930
        %v932 = vmul.f32 %v927, %v931
        %v933 = vmul.f32 %v926, %v931
        %v934 = vmul.f32 %v925, %v931
        %v935 = vmul.f32 %v924, %v931
        %v936 = vmul.f32 %v923, %v931
        %v937 = vmul.f32 %v922, %v931
        %v938 = vmul.f32 %v921, %v931
        %v939 = vmul.f32 %v920, %v931
        %v940 = vadd.f32 %v900, %v932
        %v941 = vadd.f32 %v901, %v933
        %v942 = vadd.f32 %v902, %v934
        %v943 = vadd.f32 %v903, %v935
        %v944 = vadd.f32 %v904, %v936
        %v945 = vadd.f32 %v905, %v937
        %v946 = vadd.f32 %v906, %v938
        %v947 = vadd.f32 %v907, %v939
        %v948 = vrot.slane %v756, 5
        %v949 = vrot.slane %v757, 5
        %v950 = vrot.slane %v758, 5
        %v951 = vrot.slane %v759, 5
        %v952 = vrot.slane %v760, 5
        %v953 = vrot.slane %v761, 5
        %v954 = vrot.slane %v762, 5
        %v955 = vrot.slane %v763, 5
        %v956 = vrot.slane %v764, 5
        %v957 = vrot.slane %v765, 5
        %v958 = vrot.slane %v766, 5
        %v959 = vrot.slane %v767, 5
        %v960 = vsel %vm683, %v958, %v959
        %v961 = vsel %vm683, %v957, %v958
        %v962 = vsel %vm683, %v955, %v956
        %v963 = vsel %vm683, %v954, %v955
        %v964 = vsel %vm683, %v952, %v953
        %v965 = vsel %vm683, %v951, %v952
        %v966 = vsel %vm683, %v949, %v950
        %v967 = vsel %vm683, %v948, %v949
        %v968 = vlaneseq
        %v969 = vshrl.u32 %v968, 7
        %v970 = vsub.s32 5, %v969
        %v971 = vrot.slane %v454, %v970
        %v972 = vmul.f32 %v967, %v971
        %v973 = vmul.f32 %v966, %v971
        %v974 = vmul.f32 %v965, %v971
        %v975 = vmul.f32 %v964, %v971
        %v976 = vmul.f32 %v963, %v971
        %v977 = vmul.f32 %v962, %v971
        %v978 = vmul.f32 %v961, %v971
        %v979 = vmul.f32 %v960, %v971
        %v980 = vadd.f32 %v940, %v972
        %v981 = vadd.f32 %v941, %v973
        %v982 = vadd.f32 %v942, %v974
        %v983 = vadd.f32 %v943, %v975
        %v984 = vadd.f32 %v944, %v976
        %v985 = vadd.f32 %v945, %v977
        %v986 = vadd.f32 %v946, %v978
        %v987 = vadd.f32 %v947, %v979
        %v988 = vrot.slane %v756, 6
        %v989 = vrot.slane %v757, 6
        %v990 = vrot.slane %v758, 6
        %v991 = vrot.slane %v759, 6
        %v992 = vrot.slane %v760, 6
        %v993 = vrot.slane %v761, 6
        %v994 = vrot.slane %v762, 6
        %v995 = vrot.slane %v763, 6
        %v996 = vrot.slane %v764, 6
        %v997 = vrot.slane %v765, 6
        %v998 = vrot.slane %v766, 6
        %v999 = vrot.slane %v767, 6
        %v1000 = vsel %vm724, %v998, %v999
        %v1001 = vsel %vm724, %v997, %v998
        %v1002 = vsel %vm724, %v995, %v996
        %v1003 = vsel %vm724, %v994, %v995
        %v1004 = vsel %vm724, %v992, %v993
        %v1005 = vsel %vm724, %v991, %v992
        %v1006 = vsel %vm724, %v989, %v990
        %v1007 = vsel %vm724, %v988, %v989
        %v1008 = vlaneseq
        %v1009 = vshrl.u32 %v1008, 7
        %v1010 = vsub.s32 6, %v1009
        %v1011 = vrot.slane %v454, %v1010
        %v1012 = vmul.f32 %v1007, %v1011
        %v1013 = vmul.f32 %v1006, %v1011
        %v1014 = vmul.f32 %v1005, %v1011
        %v1015 = vmul.f32 %v1004, %v1011
        %v1016 = vmul.f32 %v1003, %v1011
        %v1017 = vmul.f32 %v1002, %v1011
        %v1018 = vmul.f32 %v1001, %v1011
        %v1019 = vmul.f32 %v1000, %v1011
        %v1020 = vadd.f32 %v980, %v1012
        %v1021 = vadd.f32 %v981, %v1013
        %v1022 = vadd.f32 %v982, %v1014
        %v1023 = vadd.f32 %v983, %v1015
        %v1024 = vadd.f32 %v984, %v1016
        %v1025 = vadd.f32 %v985, %v1017
        %v1026 = vadd.f32 %v986, %v1018
        %v1027 = vadd.f32 %v987, %v1019
        %s1028 = sadd.s32 %s470, 2
        %s1029 = smul.u32 %s1028, 24
        %s1030 = scalar_lea.vmem [#allocation2], %s1029
        %v1031 = vld [vmem:[%s1030] sm:$0xff]
        %v1032 = vld [vmem:[%s1030 + $0x8] sm:$0xff]
        %v1033 = vld [vmem:[%s1030 + $0x10] sm:$0xff]
        %v1034 = vld [vmem:[%s1030 + $0x18] sm:$0xff]
        %v1035 = vld [vmem:[%s1030 + $0x20] sm:$0xff]
        %v1036 = vld [vmem:[%s1030 + $0x28] sm:$0xff]
        %v1037 = vld [vmem:[%s1030 + $0x30] sm:$0xff]
        %v1038 = vld [vmem:[%s1030 + $0x38] sm:$0xff]
        %v1039 = vld [vmem:[%s1030 + $0x40] sm:$0xff]
        %v1040 = vld [vmem:[%s1030 + $0x48] sm:$0xff]
        %v1041 = vld [vmem:[%s1030 + $0x50] sm:$0xff]
        %v1042 = vld [vmem:[%s1030 + $0x58] sm:$0xff]
        %v1043 = vlaneseq
        %v1044 = vshrl.u32 %v1043, 7
        %v1045 = vsub.s32 0, %v1044
        %v1046 = vrot.slane %v455, %v1045
        %v1047 = vmul.f32 %v1031, %v1046
        %v1048 = vmul.f32 %v1032, %v1046
        %v1049 = vmul.f32 %v1034, %v1046
        %v1050 = vmul.f32 %v1035, %v1046
        %v1051 = vmul.f32 %v1037, %v1046
        %v1052 = vmul.f32 %v1038, %v1046
        %v1053 = vmul.f32 %v1040, %v1046
        %v1054 = vmul.f32 %v1041, %v1046
        %v1055 = vadd.f32 %v1020, %v1047
        %v1056 = vadd.f32 %v1021, %v1048
        %v1057 = vadd.f32 %v1022, %v1049
        %v1058 = vadd.f32 %v1023, %v1050
        %v1059 = vadd.f32 %v1024, %v1051
        %v1060 = vadd.f32 %v1025, %v1052
        %v1061 = vadd.f32 %v1026, %v1053
        %v1062 = vadd.f32 %v1027, %v1054
        %v1063 = vrot.slane %v1031, 1
        %v1064 = vrot.slane %v1032, 1
        %v1065 = vrot.slane %v1033, 1
        %v1066 = vrot.slane %v1034, 1
        %v1067 = vrot.slane %v1035, 1
        %v1068 = vrot.slane %v1036, 1
        %v1069 = vrot.slane %v1037, 1
        %v1070 = vrot.slane %v1038, 1
        %v1071 = vrot.slane %v1039, 1
        %v1072 = vrot.slane %v1040, 1
        %v1073 = vrot.slane %v1041, 1
        %v1074 = vrot.slane %v1042, 1
        %v1075 = vsel %vm519, %v1073, %v1074
        %v1076 = vsel %vm519, %v1072, %v1073
        %v1077 = vsel %vm519, %v1070, %v1071
        %v1078 = vsel %vm519, %v1069, %v1070
        %v1079 = vsel %vm519, %v1067, %v1068
        %v1080 = vsel %vm519, %v1066, %v1067
        %v1081 = vsel %vm519, %v1064, %v1065
        %v1082 = vsel %vm519, %v1063, %v1064
        %v1083 = vlaneseq
        %v1084 = vshrl.u32 %v1083, 7
        %v1085 = vsub.s32 1, %v1084
        %v1086 = vrot.slane %v455, %v1085
        %v1087 = vmul.f32 %v1082, %v1086
        %v1088 = vmul.f32 %v1081, %v1086
        %v1089 = vmul.f32 %v1080, %v1086
        %v1090 = vmul.f32 %v1079, %v1086
        %v1091 = vmul.f32 %v1078, %v1086
        %v1092 = vmul.f32 %v1077, %v1086
        %v1093 = vmul.f32 %v1076, %v1086
        %v1094 = vmul.f32 %v1075, %v1086
        %v1095 = vadd.f32 %v1055, %v1087
        %v1096 = vadd.f32 %v1056, %v1088
        %v1097 = vadd.f32 %v1057, %v1089
        %v1098 = vadd.f32 %v1058, %v1090
        %v1099 = vadd.f32 %v1059, %v1091
        %v1100 = vadd.f32 %v1060, %v1092
        %v1101 = vadd.f32 %v1061, %v1093
        %v1102 = vadd.f32 %v1062, %v1094
        %v1103 = vrot.slane %v1031, 2
        %v1104 = vrot.slane %v1032, 2
        %v1105 = vrot.slane %v1033, 2
        %v1106 = vrot.slane %v1034, 2
        %v1107 = vrot.slane %v1035, 2
        %v1108 = vrot.slane %v1036, 2
        %v1109 = vrot.slane %v1037, 2
        %v1110 = vrot.slane %v1038, 2
        %v1111 = vrot.slane %v1039, 2
        %v1112 = vrot.slane %v1040, 2
        %v1113 = vrot.slane %v1041, 2
        %v1114 = vrot.slane %v1042, 2
        %v1115 = vsel %vm560, %v1113, %v1114
        %v1116 = vsel %vm560, %v1112, %v1113
        %v1117 = vsel %vm560, %v1110, %v1111
        %v1118 = vsel %vm560, %v1109, %v1110
        %v1119 = vsel %vm560, %v1107, %v1108
        %v1120 = vsel %vm560, %v1106, %v1107
        %v1121 = vsel %vm560, %v1104, %v1105
        %v1122 = vsel %vm560, %v1103, %v1104
        %v1123 = vlaneseq
        %v1124 = vshrl.u32 %v1123, 7
        %v1125 = vsub.s32 2, %v1124
        %v1126 = vrot.slane %v455, %v1125
        %v1127 = vmul.f32 %v1122, %v1126
        %v1128 = vmul.f32 %v1121, %v1126
        %v1129 = vmul.f32 %v1120, %v1126
        %v1130 = vmul.f32 %v1119, %v1126
        %v1131 = vmul.f32 %v1118, %v1126
        %v1132 = vmul.f32 %v1117, %v1126
        %v1133 = vmul.f32 %v1116, %v1126
        %v1134 = vmul.f32 %v1115, %v1126
        %v1135 = vadd.f32 %v1095, %v1127
        %v1136 = vadd.f32 %v1096, %v1128
        %v1137 = vadd.f32 %v1097, %v1129
        %v1138 = vadd.f32 %v1098, %v1130
        %v1139 = vadd.f32 %v1099, %v1131
        %v1140 = vadd.f32 %v1100, %v1132
        %v1141 = vadd.f32 %v1101, %v1133
        %v1142 = vadd.f32 %v1102, %v1134
        %v1143 = vrot.slane %v1031, 3
        %v1144 = vrot.slane %v1032, 3
        %v1145 = vrot.slane %v1033, 3
        %v1146 = vrot.slane %v1034, 3
        %v1147 = vrot.slane %v1035, 3
        %v1148 = vrot.slane %v1036, 3
        %v1149 = vrot.slane %v1037, 3
        %v1150 = vrot.slane %v1038, 3
        %v1151 = vrot.slane %v1039, 3
        %v1152 = vrot.slane %v1040, 3
        %v1153 = vrot.slane %v1041, 3
        %v1154 = vrot.slane %v1042, 3
        %v1155 = vsel %vm601, %v1153, %v1154
        %v1156 = vsel %vm601, %v1152, %v1153
        %v1157 = vsel %vm601, %v1150, %v1151
        %v1158 = vsel %vm601, %v1149, %v1150
        %v1159 = vsel %vm601, %v1147, %v1148
        %v1160 = vsel %vm601, %v1146, %v1147
        %v1161 = vsel %vm601, %v1144, %v1145
        %v1162 = vsel %vm601, %v1143, %v1144
        %v1163 = vlaneseq
        %v1164 = vshrl.u32 %v1163, 7
        %v1165 = vsub.s32 3, %v1164
        %v1166 = vrot.slane %v455, %v1165
        %v1167 = vmul.f32 %v1162, %v1166
        %v1168 = vmul.f32 %v1161, %v1166
        %v1169 = vmul.f32 %v1160, %v1166
        %v1170 = vmul.f32 %v1159, %v1166
        %v1171 = vmul.f32 %v1158, %v1166
        %v1172 = vmul.f32 %v1157, %v1166
        %v1173 = vmul.f32 %v1156, %v1166
        %v1174 = vmul.f32 %v1155, %v1166
        %v1175 = vadd.f32 %v1135, %v1167
        %v1176 = vadd.f32 %v1136, %v1168
        %v1177 = vadd.f32 %v1137, %v1169
        %v1178 = vadd.f32 %v1138, %v1170
        %v1179 = vadd.f32 %v1139, %v1171
        %v1180 = vadd.f32 %v1140, %v1172
        %v1181 = vadd.f32 %v1141, %v1173
        %v1182 = vadd.f32 %v1142, %v1174
        %v1183 = vrot.slane %v1031, 4
        %v1184 = vrot.slane %v1032, 4
        %v1185 = vrot.slane %v1033, 4
        %v1186 = vrot.slane %v1034, 4
        %v1187 = vrot.slane %v1035, 4
        %v1188 = vrot.slane %v1036, 4
        %v1189 = vrot.slane %v1037, 4
        %v1190 = vrot.slane %v1038, 4
        %v1191 = vrot.slane %v1039, 4
        %v1192 = vrot.slane %v1040, 4
        %v1193 = vrot.slane %v1041, 4
        %v1194 = vrot.slane %v1042, 4
        %v1195 = vsel %vm642, %v1193, %v1194
        %v1196 = vsel %vm642, %v1192, %v1193
        %v1197 = vsel %vm642, %v1190, %v1191
        %v1198 = vsel %vm642, %v1189, %v1190
        %v1199 = vsel %vm642, %v1187, %v1188
        %v1200 = vsel %vm642, %v1186, %v1187
        %v1201 = vsel %vm642, %v1184, %v1185
        %v1202 = vsel %vm642, %v1183, %v1184
        %v1203 = vlaneseq
        %v1204 = vshrl.u32 %v1203, 7
        %v1205 = vsub.s32 4, %v1204
        %v1206 = vrot.slane %v455, %v1205
        %v1207 = vmul.f32 %v1202, %v1206
        %v1208 = vmul.f32 %v1201, %v1206
        %v1209 = vmul.f32 %v1200, %v1206
        %v1210 = vmul.f32 %v1199, %v1206
        %v1211 = vmul.f32 %v1198, %v1206
        %v1212 = vmul.f32 %v1197, %v1206
        %v1213 = vmul.f32 %v1196, %v1206
        %v1214 = vmul.f32 %v1195, %v1206
        %v1215 = vadd.f32 %v1175, %v1207
        %v1216 = vadd.f32 %v1176, %v1208
        %v1217 = vadd.f32 %v1177, %v1209
        %v1218 = vadd.f32 %v1178, %v1210
        %v1219 = vadd.f32 %v1179, %v1211
        %v1220 = vadd.f32 %v1180, %v1212
        %v1221 = vadd.f32 %v1181, %v1213
        %v1222 = vadd.f32 %v1182, %v1214
        %v1223 = vrot.slane %v1031, 5
        %v1224 = vrot.slane %v1032, 5
        %v1225 = vrot.slane %v1033, 5
        %v1226 = vrot.slane %v1034, 5
        %v1227 = vrot.slane %v1035, 5
        %v1228 = vrot.slane %v1036, 5
        %v1229 = vrot.slane %v1037, 5
        %v1230 = vrot.slane %v1038, 5
        %v1231 = vrot.slane %v1039, 5
        %v1232 = vrot.slane %v1040, 5
        %v1233 = vrot.slane %v1041, 5
        %v1234 = vrot.slane %v1042, 5
        %v1235 = vsel %vm683, %v1233, %v1234
        %v1236 = vsel %vm683, %v1232, %v1233
        %v1237 = vsel %vm683, %v1230, %v1231
        %v1238 = vsel %vm683, %v1229, %v1230
        %v1239 = vsel %vm683, %v1227, %v1228
        %v1240 = vsel %vm683, %v1226, %v1227
        %v1241 = vsel %vm683, %v1224, %v1225
        %v1242 = vsel %vm683, %v1223, %v1224
        %v1243 = vlaneseq
        %v1244 = vshrl.u32 %v1243, 7
        %v1245 = vsub.s32 5, %v1244
        %v1246 = vrot.slane %v455, %v1245
        %v1247 = vmul.f32 %v1242, %v1246
        %v1248 = vmul.f32 %v1241, %v1246
        %v1249 = vmul.f32 %v1240, %v1246
        %v1250 = vmul.f32 %v1239, %v1246
        %v1251 = vmul.f32 %v1238, %v1246
        %v1252 = vmul.f32 %v1237, %v1246
        %v1253 = vmul.f32 %v1236, %v1246
        %v1254 = vmul.f32 %v1235, %v1246
        %v1255 = vadd.f32 %v1215, %v1247
        %v1256 = vadd.f32 %v1216, %v1248
        %v1257 = vadd.f32 %v1217, %v1249
        %v1258 = vadd.f32 %v1218, %v1250
        %v1259 = vadd.f32 %v1219, %v1251
        %v1260 = vadd.f32 %v1220, %v1252
        %v1261 = vadd.f32 %v1221, %v1253
        %v1262 = vadd.f32 %v1222, %v1254
        %v1263 = vrot.slane %v1031, 6
        %v1264 = vrot.slane %v1032, 6
        %v1265 = vrot.slane %v1033, 6
        %v1266 = vrot.slane %v1034, 6
        %v1267 = vrot.slane %v1035, 6
        %v1268 = vrot.slane %v1036, 6
        %v1269 = vrot.slane %v1037, 6
        %v1270 = vrot.slane %v1038, 6
        %v1271 = vrot.slane %v1039, 6
        %v1272 = vrot.slane %v1040, 6
        %v1273 = vrot.slane %v1041, 6
        %v1274 = vrot.slane %v1042, 6
        %v1275 = vsel %vm724, %v1273, %v1274
        %v1276 = vsel %vm724, %v1272, %v1273
        %v1277 = vsel %vm724, %v1270, %v1271
        %v1278 = vsel %vm724, %v1269, %v1270
        %v1279 = vsel %vm724, %v1267, %v1268
        %v1280 = vsel %vm724, %v1266, %v1267
        %v1281 = vsel %vm724, %v1264, %v1265
        %v1282 = vsel %vm724, %v1263, %v1264
        %v1283 = vlaneseq
        %v1284 = vshrl.u32 %v1283, 7
        %v1285 = vsub.s32 6, %v1284
        %v1286 = vrot.slane %v455, %v1285
        %v1287 = vmul.f32 %v1282, %v1286
        %v1288 = vmul.f32 %v1281, %v1286
        %v1289 = vmul.f32 %v1280, %v1286
        %v1290 = vmul.f32 %v1279, %v1286
        %v1291 = vmul.f32 %v1278, %v1286
        %v1292 = vmul.f32 %v1277, %v1286
        %v1293 = vmul.f32 %v1276, %v1286
        %v1294 = vmul.f32 %v1275, %v1286
        %v1295 = vadd.f32 %v1255, %v1287
        %v1296 = vadd.f32 %v1256, %v1288
        %v1297 = vadd.f32 %v1257, %v1289
        %v1298 = vadd.f32 %v1258, %v1290
        %v1299 = vadd.f32 %v1259, %v1291
        %v1300 = vadd.f32 %v1260, %v1292
        %v1301 = vadd.f32 %v1261, %v1293
        %v1302 = vadd.f32 %v1262, %v1294
        %s1303 = sadd.s32 %s470, 3
        %s1304 = smul.u32 %s1303, 24
        %s1305 = scalar_lea.vmem [#allocation2], %s1304
        %v1306 = vld [vmem:[%s1305] sm:$0xff]
        %v1307 = vld [vmem:[%s1305 + $0x8] sm:$0xff]
        %v1308 = vld [vmem:[%s1305 + $0x10] sm:$0xff]
        %v1309 = vld [vmem:[%s1305 + $0x18] sm:$0xff]
        %v1310 = vld [vmem:[%s1305 + $0x20] sm:$0xff]
        %v1311 = vld [vmem:[%s1305 + $0x28] sm:$0xff]
        %v1312 = vld [vmem:[%s1305 + $0x30] sm:$0xff]
        %v1313 = vld [vmem:[%s1305 + $0x38] sm:$0xff]
        %v1314 = vld [vmem:[%s1305 + $0x40] sm:$0xff]
        %v1315 = vld [vmem:[%s1305 + $0x48] sm:$0xff]
        %v1316 = vld [vmem:[%s1305 + $0x50] sm:$0xff]
        %v1317 = vld [vmem:[%s1305 + $0x58] sm:$0xff]
        %v1318 = vlaneseq
        %v1319 = vshrl.u32 %v1318, 7
        %v1320 = vsub.s32 0, %v1319
        %v1321 = vrot.slane %v456, %v1320
        %v1322 = vmul.f32 %v1306, %v1321
        %v1323 = vmul.f32 %v1307, %v1321
        %v1324 = vmul.f32 %v1309, %v1321
        %v1325 = vmul.f32 %v1310, %v1321
        %v1326 = vmul.f32 %v1312, %v1321
        %v1327 = vmul.f32 %v1313, %v1321
        %v1328 = vmul.f32 %v1315, %v1321
        %v1329 = vmul.f32 %v1316, %v1321
        %v1330 = vadd.f32 %v1295, %v1322
        %v1331 = vadd.f32 %v1296, %v1323
        %v1332 = vadd.f32 %v1297, %v1324
        %v1333 = vadd.f32 %v1298, %v1325
        %v1334 = vadd.f32 %v1299, %v1326
        %v1335 = vadd.f32 %v1300, %v1327
        %v1336 = vadd.f32 %v1301, %v1328
        %v1337 = vadd.f32 %v1302, %v1329
        %v1338 = vrot.slane %v1306, 1
        %v1339 = vrot.slane %v1307, 1
        %v1340 = vrot.slane %v1308, 1
        %v1341 = vrot.slane %v1309, 1
        %v1342 = vrot.slane %v1310, 1
        %v1343 = vrot.slane %v1311, 1
        %v1344 = vrot.slane %v1312, 1
        %v1345 = vrot.slane %v1313, 1
        %v1346 = vrot.slane %v1314, 1
        %v1347 = vrot.slane %v1315, 1
        %v1348 = vrot.slane %v1316, 1
        %v1349 = vrot.slane %v1317, 1
        %v1350 = vsel %vm519, %v1348, %v1349
        %v1351 = vsel %vm519, %v1347, %v1348
        %v1352 = vsel %vm519, %v1345, %v1346
        %v1353 = vsel %vm519, %v1344, %v1345
        %v1354 = vsel %vm519, %v1342, %v1343
        %v1355 = vsel %vm519, %v1341, %v1342
        %v1356 = vsel %vm519, %v1339, %v1340
        %v1357 = vsel %vm519, %v1338, %v1339
        %v1358 = vlaneseq
        %v1359 = vshrl.u32 %v1358, 7
        %v1360 = vsub.s32 1, %v1359
        %v1361 = vrot.slane %v456, %v1360
        %v1362 = vmul.f32 %v1357, %v1361
        %v1363 = vmul.f32 %v1356, %v1361
        %v1364 = vmul.f32 %v1355, %v1361
        %v1365 = vmul.f32 %v1354, %v1361
        %v1366 = vmul.f32 %v1353, %v1361
        %v1367 = vmul.f32 %v1352, %v1361
        %v1368 = vmul.f32 %v1351, %v1361
        %v1369 = vmul.f32 %v1350, %v1361
        %v1370 = vadd.f32 %v1330, %v1362
        %v1371 = vadd.f32 %v1331, %v1363
        %v1372 = vadd.f32 %v1332, %v1364
        %v1373 = vadd.f32 %v1333, %v1365
        %v1374 = vadd.f32 %v1334, %v1366
        %v1375 = vadd.f32 %v1335, %v1367
        %v1376 = vadd.f32 %v1336, %v1368
        %v1377 = vadd.f32 %v1337, %v1369
        %v1378 = vrot.slane %v1306, 2
        %v1379 = vrot.slane %v1307, 2
        %v1380 = vrot.slane %v1308, 2
        %v1381 = vrot.slane %v1309, 2
        %v1382 = vrot.slane %v1310, 2
        %v1383 = vrot.slane %v1311, 2
        %v1384 = vrot.slane %v1312, 2
        %v1385 = vrot.slane %v1313, 2
        %v1386 = vrot.slane %v1314, 2
        %v1387 = vrot.slane %v1315, 2
        %v1388 = vrot.slane %v1316, 2
        %v1389 = vrot.slane %v1317, 2
        %v1390 = vsel %vm560, %v1388, %v1389
        %v1391 = vsel %vm560, %v1387, %v1388
        %v1392 = vsel %vm560, %v1385, %v1386
        %v1393 = vsel %vm560, %v1384, %v1385
        %v1394 = vsel %vm560, %v1382, %v1383
        %v1395 = vsel %vm560, %v1381, %v1382
        %v1396 = vsel %vm560, %v1379, %v1380
        %v1397 = vsel %vm560, %v1378, %v1379
        %v1398 = vlaneseq
        %v1399 = vshrl.u32 %v1398, 7
        %v1400 = vsub.s32 2, %v1399
        %v1401 = vrot.slane %v456, %v1400
        %v1402 = vmul.f32 %v1397, %v1401
        %v1403 = vmul.f32 %v1396, %v1401
        %v1404 = vmul.f32 %v1395, %v1401
        %v1405 = vmul.f32 %v1394, %v1401
        %v1406 = vmul.f32 %v1393, %v1401
        %v1407 = vmul.f32 %v1392, %v1401
        %v1408 = vmul.f32 %v1391, %v1401
        %v1409 = vmul.f32 %v1390, %v1401
        %v1410 = vadd.f32 %v1370, %v1402
        %v1411 = vadd.f32 %v1371, %v1403
        %v1412 = vadd.f32 %v1372, %v1404
        %v1413 = vadd.f32 %v1373, %v1405
        %v1414 = vadd.f32 %v1374, %v1406
        %v1415 = vadd.f32 %v1375, %v1407
        %v1416 = vadd.f32 %v1376, %v1408
        %v1417 = vadd.f32 %v1377, %v1409
        %v1418 = vrot.slane %v1306, 3
        %v1419 = vrot.slane %v1307, 3
        %v1420 = vrot.slane %v1308, 3
        %v1421 = vrot.slane %v1309, 3
        %v1422 = vrot.slane %v1310, 3
        %v1423 = vrot.slane %v1311, 3
        %v1424 = vrot.slane %v1312, 3
        %v1425 = vrot.slane %v1313, 3
        %v1426 = vrot.slane %v1314, 3
        %v1427 = vrot.slane %v1315, 3
        %v1428 = vrot.slane %v1316, 3
        %v1429 = vrot.slane %v1317, 3
        %v1430 = vsel %vm601, %v1428, %v1429
        %v1431 = vsel %vm601, %v1427, %v1428
        %v1432 = vsel %vm601, %v1425, %v1426
        %v1433 = vsel %vm601, %v1424, %v1425
        %v1434 = vsel %vm601, %v1422, %v1423
        %v1435 = vsel %vm601, %v1421, %v1422
        %v1436 = vsel %vm601, %v1419, %v1420
        %v1437 = vsel %vm601, %v1418, %v1419
        %v1438 = vlaneseq
        %v1439 = vshrl.u32 %v1438, 7
        %v1440 = vsub.s32 3, %v1439
        %v1441 = vrot.slane %v456, %v1440
        %v1442 = vmul.f32 %v1437, %v1441
        %v1443 = vmul.f32 %v1436, %v1441
        %v1444 = vmul.f32 %v1435, %v1441
        %v1445 = vmul.f32 %v1434, %v1441
        %v1446 = vmul.f32 %v1433, %v1441
        %v1447 = vmul.f32 %v1432, %v1441
        %v1448 = vmul.f32 %v1431, %v1441
        %v1449 = vmul.f32 %v1430, %v1441
        %v1450 = vadd.f32 %v1410, %v1442
        %v1451 = vadd.f32 %v1411, %v1443
        %v1452 = vadd.f32 %v1412, %v1444
        %v1453 = vadd.f32 %v1413, %v1445
        %v1454 = vadd.f32 %v1414, %v1446
        %v1455 = vadd.f32 %v1415, %v1447
        %v1456 = vadd.f32 %v1416, %v1448
        %v1457 = vadd.f32 %v1417, %v1449
        %v1458 = vrot.slane %v1306, 4
        %v1459 = vrot.slane %v1307, 4
        %v1460 = vrot.slane %v1308, 4
        %v1461 = vrot.slane %v1309, 4
        %v1462 = vrot.slane %v1310, 4
        %v1463 = vrot.slane %v1311, 4
        %v1464 = vrot.slane %v1312, 4
        %v1465 = vrot.slane %v1313, 4
        %v1466 = vrot.slane %v1314, 4
        %v1467 = vrot.slane %v1315, 4
        %v1468 = vrot.slane %v1316, 4
        %v1469 = vrot.slane %v1317, 4
        %v1470 = vsel %vm642, %v1468, %v1469
        %v1471 = vsel %vm642, %v1467, %v1468
        %v1472 = vsel %vm642, %v1465, %v1466
        %v1473 = vsel %vm642, %v1464, %v1465
        %v1474 = vsel %vm642, %v1462, %v1463
        %v1475 = vsel %vm642, %v1461, %v1462
        %v1476 = vsel %vm642, %v1459, %v1460
        %v1477 = vsel %vm642, %v1458, %v1459
        %v1478 = vlaneseq
        %v1479 = vshrl.u32 %v1478, 7
        %v1480 = vsub.s32 4, %v1479
        %v1481 = vrot.slane %v456, %v1480
        %v1482 = vmul.f32 %v1477, %v1481
        %v1483 = vmul.f32 %v1476, %v1481
        %v1484 = vmul.f32 %v1475, %v1481
        %v1485 = vmul.f32 %v1474, %v1481
        %v1486 = vmul.f32 %v1473, %v1481
        %v1487 = vmul.f32 %v1472, %v1481
        %v1488 = vmul.f32 %v1471, %v1481
        %v1489 = vmul.f32 %v1470, %v1481
        %v1490 = vadd.f32 %v1450, %v1482
        %v1491 = vadd.f32 %v1451, %v1483
        %v1492 = vadd.f32 %v1452, %v1484
        %v1493 = vadd.f32 %v1453, %v1485
        %v1494 = vadd.f32 %v1454, %v1486
        %v1495 = vadd.f32 %v1455, %v1487
        %v1496 = vadd.f32 %v1456, %v1488
        %v1497 = vadd.f32 %v1457, %v1489
        %v1498 = vrot.slane %v1306, 5
        %v1499 = vrot.slane %v1307, 5
        %v1500 = vrot.slane %v1308, 5
        %v1501 = vrot.slane %v1309, 5
        %v1502 = vrot.slane %v1310, 5
        %v1503 = vrot.slane %v1311, 5
        %v1504 = vrot.slane %v1312, 5
        %v1505 = vrot.slane %v1313, 5
        %v1506 = vrot.slane %v1314, 5
        %v1507 = vrot.slane %v1315, 5
        %v1508 = vrot.slane %v1316, 5
        %v1509 = vrot.slane %v1317, 5
        %v1510 = vsel %vm683, %v1508, %v1509
        %v1511 = vsel %vm683, %v1507, %v1508
        %v1512 = vsel %vm683, %v1505, %v1506
        %v1513 = vsel %vm683, %v1504, %v1505
        %v1514 = vsel %vm683, %v1502, %v1503
        %v1515 = vsel %vm683, %v1501, %v1502
        %v1516 = vsel %vm683, %v1499, %v1500
        %v1517 = vsel %vm683, %v1498, %v1499
        %v1518 = vlaneseq
        %v1519 = vshrl.u32 %v1518, 7
        %v1520 = vsub.s32 5, %v1519
        %v1521 = vrot.slane %v456, %v1520
        %v1522 = vmul.f32 %v1517, %v1521
        %v1523 = vmul.f32 %v1516, %v1521
        %v1524 = vmul.f32 %v1515, %v1521
        %v1525 = vmul.f32 %v1514, %v1521
        %v1526 = vmul.f32 %v1513, %v1521
        %v1527 = vmul.f32 %v1512, %v1521
        %v1528 = vmul.f32 %v1511, %v1521
        %v1529 = vmul.f32 %v1510, %v1521
        %v1530 = vadd.f32 %v1490, %v1522
        %v1531 = vadd.f32 %v1491, %v1523
        %v1532 = vadd.f32 %v1492, %v1524
        %v1533 = vadd.f32 %v1493, %v1525
        %v1534 = vadd.f32 %v1494, %v1526
        %v1535 = vadd.f32 %v1495, %v1527
        %v1536 = vadd.f32 %v1496, %v1528
        %v1537 = vadd.f32 %v1497, %v1529
        %v1538 = vrot.slane %v1306, 6
        %v1539 = vrot.slane %v1307, 6
        %v1540 = vrot.slane %v1308, 6
        %v1541 = vrot.slane %v1309, 6
        %v1542 = vrot.slane %v1310, 6
        %v1543 = vrot.slane %v1311, 6
        %v1544 = vrot.slane %v1312, 6
        %v1545 = vrot.slane %v1313, 6
        %v1546 = vrot.slane %v1314, 6
        %v1547 = vrot.slane %v1315, 6
        %v1548 = vrot.slane %v1316, 6
        %v1549 = vrot.slane %v1317, 6
        %v1550 = vsel %vm724, %v1548, %v1549
        %v1551 = vsel %vm724, %v1547, %v1548
        %v1552 = vsel %vm724, %v1545, %v1546
        %v1553 = vsel %vm724, %v1544, %v1545
        %v1554 = vsel %vm724, %v1542, %v1543
        %v1555 = vsel %vm724, %v1541, %v1542
        %v1556 = vsel %vm724, %v1539, %v1540
        %v1557 = vsel %vm724, %v1538, %v1539
        %v1558 = vlaneseq
        %v1559 = vshrl.u32 %v1558, 7
        %v1560 = vsub.s32 6, %v1559
        %v1561 = vrot.slane %v456, %v1560
        %v1562 = vmul.f32 %v1557, %v1561
        %v1563 = vmul.f32 %v1556, %v1561
        %v1564 = vmul.f32 %v1555, %v1561
        %v1565 = vmul.f32 %v1554, %v1561
        %v1566 = vmul.f32 %v1553, %v1561
        %v1567 = vmul.f32 %v1552, %v1561
        %v1568 = vmul.f32 %v1551, %v1561
        %v1569 = vmul.f32 %v1550, %v1561
        %v1570 = vadd.f32 %v1530, %v1562
        %v1571 = vadd.f32 %v1531, %v1563
        %v1572 = vadd.f32 %v1532, %v1564
        %v1573 = vadd.f32 %v1533, %v1565
        %v1574 = vadd.f32 %v1534, %v1566
        %v1575 = vadd.f32 %v1535, %v1567
        %v1576 = vadd.f32 %v1536, %v1568
        %v1577 = vadd.f32 %v1537, %v1569
        %s1578 = sadd.s32 %s470, 4
        %s1579 = smul.u32 %s1578, 24
        %s1580 = scalar_lea.vmem [#allocation2], %s1579
        %v1581 = vld [vmem:[%s1580] sm:$0xff]
        %v1582 = vld [vmem:[%s1580 + $0x8] sm:$0xff]
        %v1583 = vld [vmem:[%s1580 + $0x10] sm:$0xff]
        %v1584 = vld [vmem:[%s1580 + $0x18] sm:$0xff]
        %v1585 = vld [vmem:[%s1580 + $0x20] sm:$0xff]
        %v1586 = vld [vmem:[%s1580 + $0x28] sm:$0xff]
        %v1587 = vld [vmem:[%s1580 + $0x30] sm:$0xff]
        %v1588 = vld [vmem:[%s1580 + $0x38] sm:$0xff]
        %v1589 = vld [vmem:[%s1580 + $0x40] sm:$0xff]
        %v1590 = vld [vmem:[%s1580 + $0x48] sm:$0xff]
        %v1591 = vld [vmem:[%s1580 + $0x50] sm:$0xff]
        %v1592 = vld [vmem:[%s1580 + $0x58] sm:$0xff]
        %v1593 = vlaneseq
        %v1594 = vshrl.u32 %v1593, 7
        %v1595 = vsub.s32 0, %v1594
        %v1596 = vrot.slane %v457, %v1595
        %v1597 = vmul.f32 %v1581, %v1596
        %v1598 = vmul.f32 %v1582, %v1596
        %v1599 = vmul.f32 %v1584, %v1596
        %v1600 = vmul.f32 %v1585, %v1596
        %v1601 = vmul.f32 %v1587, %v1596
        %v1602 = vmul.f32 %v1588, %v1596
        %v1603 = vmul.f32 %v1590, %v1596
        %v1604 = vmul.f32 %v1591, %v1596
        %v1605 = vadd.f32 %v1570, %v1597
        %v1606 = vadd.f32 %v1571, %v1598
        %v1607 = vadd.f32 %v1572, %v1599
        %v1608 = vadd.f32 %v1573, %v1600
        %v1609 = vadd.f32 %v1574, %v1601
        %v1610 = vadd.f32 %v1575, %v1602
        %v1611 = vadd.f32 %v1576, %v1603
        %v1612 = vadd.f32 %v1577, %v1604
        %v1613 = vrot.slane %v1581, 1
        %v1614 = vrot.slane %v1582, 1
        %v1615 = vrot.slane %v1583, 1
        %v1616 = vrot.slane %v1584, 1
        %v1617 = vrot.slane %v1585, 1
        %v1618 = vrot.slane %v1586, 1
        %v1619 = vrot.slane %v1587, 1
        %v1620 = vrot.slane %v1588, 1
        %v1621 = vrot.slane %v1589, 1
        %v1622 = vrot.slane %v1590, 1
        %v1623 = vrot.slane %v1591, 1
        %v1624 = vrot.slane %v1592, 1
        %v1625 = vsel %vm519, %v1623, %v1624
        %v1626 = vsel %vm519, %v1622, %v1623
        %v1627 = vsel %vm519, %v1620, %v1621
        %v1628 = vsel %vm519, %v1619, %v1620
        %v1629 = vsel %vm519, %v1617, %v1618
        %v1630 = vsel %vm519, %v1616, %v1617
        %v1631 = vsel %vm519, %v1614, %v1615
        %v1632 = vsel %vm519, %v1613, %v1614
        %v1633 = vlaneseq
        %v1634 = vshrl.u32 %v1633, 7
        %v1635 = vsub.s32 1, %v1634
        %v1636 = vrot.slane %v457, %v1635
        %v1637 = vmul.f32 %v1632, %v1636
        %v1638 = vmul.f32 %v1631, %v1636
        %v1639 = vmul.f32 %v1630, %v1636
        %v1640 = vmul.f32 %v1629, %v1636
        %v1641 = vmul.f32 %v1628, %v1636
        %v1642 = vmul.f32 %v1627, %v1636
        %v1643 = vmul.f32 %v1626, %v1636
        %v1644 = vmul.f32 %v1625, %v1636
        %v1645 = vadd.f32 %v1605, %v1637
        %v1646 = vadd.f32 %v1606, %v1638
        %v1647 = vadd.f32 %v1607, %v1639
        %v1648 = vadd.f32 %v1608, %v1640
        %v1649 = vadd.f32 %v1609, %v1641
        %v1650 = vadd.f32 %v1610, %v1642
        %v1651 = vadd.f32 %v1611, %v1643
        %v1652 = vadd.f32 %v1612, %v1644
        %v1653 = vrot.slane %v1581, 2
        %v1654 = vrot.slane %v1582, 2
        %v1655 = vrot.slane %v1583, 2
        %v1656 = vrot.slane %v1584, 2
        %v1657 = vrot.slane %v1585, 2
        %v1658 = vrot.slane %v1586, 2
        %v1659 = vrot.slane %v1587, 2
        %v1660 = vrot.slane %v1588, 2
        %v1661 = vrot.slane %v1589, 2
        %v1662 = vrot.slane %v1590, 2
        %v1663 = vrot.slane %v1591, 2
        %v1664 = vrot.slane %v1592, 2
        %v1665 = vsel %vm560, %v1663, %v1664
        %v1666 = vsel %vm560, %v1662, %v1663
        %v1667 = vsel %vm560, %v1660, %v1661
        %v1668 = vsel %vm560, %v1659, %v1660
        %v1669 = vsel %vm560, %v1657, %v1658
        %v1670 = vsel %vm560, %v1656, %v1657
        %v1671 = vsel %vm560, %v1654, %v1655
        %v1672 = vsel %vm560, %v1653, %v1654
        %v1673 = vlaneseq
        %v1674 = vshrl.u32 %v1673, 7
        %v1675 = vsub.s32 2, %v1674
        %v1676 = vrot.slane %v457, %v1675
        %v1677 = vmul.f32 %v1672, %v1676
        %v1678 = vmul.f32 %v1671, %v1676
        %v1679 = vmul.f32 %v1670, %v1676
        %v1680 = vmul.f32 %v1669, %v1676
        %v1681 = vmul.f32 %v1668, %v1676
        %v1682 = vmul.f32 %v1667, %v1676
        %v1683 = vmul.f32 %v1666, %v1676
        %v1684 = vmul.f32 %v1665, %v1676
        %v1685 = vadd.f32 %v1645, %v1677
        %v1686 = vadd.f32 %v1646, %v1678
        %v1687 = vadd.f32 %v1647, %v1679
        %v1688 = vadd.f32 %v1648, %v1680
        %v1689 = vadd.f32 %v1649, %v1681
        %v1690 = vadd.f32 %v1650, %v1682
        %v1691 = vadd.f32 %v1651, %v1683
        %v1692 = vadd.f32 %v1652, %v1684
        %v1693 = vrot.slane %v1581, 3
        %v1694 = vrot.slane %v1582, 3
        %v1695 = vrot.slane %v1583, 3
        %v1696 = vrot.slane %v1584, 3
        %v1697 = vrot.slane %v1585, 3
        %v1698 = vrot.slane %v1586, 3
        %v1699 = vrot.slane %v1587, 3
        %v1700 = vrot.slane %v1588, 3
        %v1701 = vrot.slane %v1589, 3
        %v1702 = vrot.slane %v1590, 3
        %v1703 = vrot.slane %v1591, 3
        %v1704 = vrot.slane %v1592, 3
        %v1705 = vsel %vm601, %v1703, %v1704
        %v1706 = vsel %vm601, %v1702, %v1703
        %v1707 = vsel %vm601, %v1700, %v1701
        %v1708 = vsel %vm601, %v1699, %v1700
        %v1709 = vsel %vm601, %v1697, %v1698
        %v1710 = vsel %vm601, %v1696, %v1697
        %v1711 = vsel %vm601, %v1694, %v1695
        %v1712 = vsel %vm601, %v1693, %v1694
        %v1713 = vlaneseq
        %v1714 = vshrl.u32 %v1713, 7
        %v1715 = vsub.s32 3, %v1714
        %v1716 = vrot.slane %v457, %v1715
        %v1717 = vmul.f32 %v1712, %v1716
        %v1718 = vmul.f32 %v1711, %v1716
        %v1719 = vmul.f32 %v1710, %v1716
        %v1720 = vmul.f32 %v1709, %v1716
        %v1721 = vmul.f32 %v1708, %v1716
        %v1722 = vmul.f32 %v1707, %v1716
        %v1723 = vmul.f32 %v1706, %v1716
        %v1724 = vmul.f32 %v1705, %v1716
        %v1725 = vadd.f32 %v1685, %v1717
        %v1726 = vadd.f32 %v1686, %v1718
        %v1727 = vadd.f32 %v1687, %v1719
        %v1728 = vadd.f32 %v1688, %v1720
        %v1729 = vadd.f32 %v1689, %v1721
        %v1730 = vadd.f32 %v1690, %v1722
        %v1731 = vadd.f32 %v1691, %v1723
        %v1732 = vadd.f32 %v1692, %v1724
        %v1733 = vrot.slane %v1581, 4
        %v1734 = vrot.slane %v1582, 4
        %v1735 = vrot.slane %v1583, 4
        %v1736 = vrot.slane %v1584, 4
        %v1737 = vrot.slane %v1585, 4
        %v1738 = vrot.slane %v1586, 4
        %v1739 = vrot.slane %v1587, 4
        %v1740 = vrot.slane %v1588, 4
        %v1741 = vrot.slane %v1589, 4
        %v1742 = vrot.slane %v1590, 4
        %v1743 = vrot.slane %v1591, 4
        %v1744 = vrot.slane %v1592, 4
        %v1745 = vsel %vm642, %v1743, %v1744
        %v1746 = vsel %vm642, %v1742, %v1743
        %v1747 = vsel %vm642, %v1740, %v1741
        %v1748 = vsel %vm642, %v1739, %v1740
        %v1749 = vsel %vm642, %v1737, %v1738
        %v1750 = vsel %vm642, %v1736, %v1737
        %v1751 = vsel %vm642, %v1734, %v1735
        %v1752 = vsel %vm642, %v1733, %v1734
        %v1753 = vlaneseq
        %v1754 = vshrl.u32 %v1753, 7
        %v1755 = vsub.s32 4, %v1754
        %v1756 = vrot.slane %v457, %v1755
        %v1757 = vmul.f32 %v1752, %v1756
        %v1758 = vmul.f32 %v1751, %v1756
        %v1759 = vmul.f32 %v1750, %v1756
        %v1760 = vmul.f32 %v1749, %v1756
        %v1761 = vmul.f32 %v1748, %v1756
        %v1762 = vmul.f32 %v1747, %v1756
        %v1763 = vmul.f32 %v1746, %v1756
        %v1764 = vmul.f32 %v1745, %v1756
        %v1765 = vadd.f32 %v1725, %v1757
        %v1766 = vadd.f32 %v1726, %v1758
        %v1767 = vadd.f32 %v1727, %v1759
        %v1768 = vadd.f32 %v1728, %v1760
        %v1769 = vadd.f32 %v1729, %v1761
        %v1770 = vadd.f32 %v1730, %v1762
        %v1771 = vadd.f32 %v1731, %v1763
        %v1772 = vadd.f32 %v1732, %v1764
        %v1773 = vrot.slane %v1581, 5
        %v1774 = vrot.slane %v1582, 5
        %v1775 = vrot.slane %v1583, 5
        %v1776 = vrot.slane %v1584, 5
        %v1777 = vrot.slane %v1585, 5
        %v1778 = vrot.slane %v1586, 5
        %v1779 = vrot.slane %v1587, 5
        %v1780 = vrot.slane %v1588, 5
        %v1781 = vrot.slane %v1589, 5
        %v1782 = vrot.slane %v1590, 5
        %v1783 = vrot.slane %v1591, 5
        %v1784 = vrot.slane %v1592, 5
        %v1785 = vsel %vm683, %v1783, %v1784
        %v1786 = vsel %vm683, %v1782, %v1783
        %v1787 = vsel %vm683, %v1780, %v1781
        %v1788 = vsel %vm683, %v1779, %v1780
        %v1789 = vsel %vm683, %v1777, %v1778
        %v1790 = vsel %vm683, %v1776, %v1777
        %v1791 = vsel %vm683, %v1774, %v1775
        %v1792 = vsel %vm683, %v1773, %v1774
        %v1793 = vlaneseq
        %v1794 = vshrl.u32 %v1793, 7
        %v1795 = vsub.s32 5, %v1794
        %v1796 = vrot.slane %v457, %v1795
        %v1797 = vmul.f32 %v1792, %v1796
        %v1798 = vmul.f32 %v1791, %v1796
        %v1799 = vmul.f32 %v1790, %v1796
        %v1800 = vmul.f32 %v1789, %v1796
        %v1801 = vmul.f32 %v1788, %v1796
        %v1802 = vmul.f32 %v1787, %v1796
        %v1803 = vmul.f32 %v1786, %v1796
        %v1804 = vmul.f32 %v1785, %v1796
        %v1805 = vadd.f32 %v1765, %v1797
        %v1806 = vadd.f32 %v1766, %v1798
        %v1807 = vadd.f32 %v1767, %v1799
        %v1808 = vadd.f32 %v1768, %v1800
        %v1809 = vadd.f32 %v1769, %v1801
        %v1810 = vadd.f32 %v1770, %v1802
        %v1811 = vadd.f32 %v1771, %v1803
        %v1812 = vadd.f32 %v1772, %v1804
        %v1813 = vrot.slane %v1581, 6
        %v1814 = vrot.slane %v1582, 6
        %v1815 = vrot.slane %v1583, 6
        %v1816 = vrot.slane %v1584, 6
        %v1817 = vrot.slane %v1585, 6
        %v1818 = vrot.slane %v1586, 6
        %v1819 = vrot.slane %v1587, 6
        %v1820 = vrot.slane %v1588, 6
        %v1821 = vrot.slane %v1589, 6
        %v1822 = vrot.slane %v1590, 6
        %v1823 = vrot.slane %v1591, 6
        %v1824 = vrot.slane %v1592, 6
        %v1825 = vsel %vm724, %v1823, %v1824
        %v1826 = vsel %vm724, %v1822, %v1823
        %v1827 = vsel %vm724, %v1820, %v1821
        %v1828 = vsel %vm724, %v1819, %v1820
        %v1829 = vsel %vm724, %v1817, %v1818
        %v1830 = vsel %vm724, %v1816, %v1817
        %v1831 = vsel %vm724, %v1814, %v1815
        %v1832 = vsel %vm724, %v1813, %v1814
        %v1833 = vlaneseq
        %v1834 = vshrl.u32 %v1833, 7
        %v1835 = vsub.s32 6, %v1834
        %v1836 = vrot.slane %v457, %v1835
        %v1837 = vmul.f32 %v1832, %v1836
        %v1838 = vmul.f32 %v1831, %v1836
        %v1839 = vmul.f32 %v1830, %v1836
        %v1840 = vmul.f32 %v1829, %v1836
        %v1841 = vmul.f32 %v1828, %v1836
        %v1842 = vmul.f32 %v1827, %v1836
        %v1843 = vmul.f32 %v1826, %v1836
        %v1844 = vmul.f32 %v1825, %v1836
        %v1845 = vadd.f32 %v1805, %v1837
        %v1846 = vadd.f32 %v1806, %v1838
        %v1847 = vadd.f32 %v1807, %v1839
        %v1848 = vadd.f32 %v1808, %v1840
        %v1849 = vadd.f32 %v1809, %v1841
        %v1850 = vadd.f32 %v1810, %v1842
        %v1851 = vadd.f32 %v1811, %v1843
        %v1852 = vadd.f32 %v1812, %v1844
        %s1853 = sadd.s32 %s470, 5
        %s1854 = smul.u32 %s1853, 24
        %s1855 = scalar_lea.vmem [#allocation2], %s1854
        %v1856 = vld [vmem:[%s1855] sm:$0xff]
        %v1857 = vld [vmem:[%s1855 + $0x8] sm:$0xff]
        %v1858 = vld [vmem:[%s1855 + $0x10] sm:$0xff]
        %v1859 = vld [vmem:[%s1855 + $0x18] sm:$0xff]
        %v1860 = vld [vmem:[%s1855 + $0x20] sm:$0xff]
        %v1861 = vld [vmem:[%s1855 + $0x28] sm:$0xff]
        %v1862 = vld [vmem:[%s1855 + $0x30] sm:$0xff]
        %v1863 = vld [vmem:[%s1855 + $0x38] sm:$0xff]
        %v1864 = vld [vmem:[%s1855 + $0x40] sm:$0xff]
        %v1865 = vld [vmem:[%s1855 + $0x48] sm:$0xff]
        %v1866 = vld [vmem:[%s1855 + $0x50] sm:$0xff]
        %v1867 = vld [vmem:[%s1855 + $0x58] sm:$0xff]
        %v1868 = vlaneseq
        %v1869 = vshrl.u32 %v1868, 7
        %v1870 = vsub.s32 0, %v1869
        %v1871 = vrot.slane %v458, %v1870
        %v1872 = vmul.f32 %v1856, %v1871
        %v1873 = vmul.f32 %v1857, %v1871
        %v1874 = vmul.f32 %v1859, %v1871
        %v1875 = vmul.f32 %v1860, %v1871
        %v1876 = vmul.f32 %v1862, %v1871
        %v1877 = vmul.f32 %v1863, %v1871
        %v1878 = vmul.f32 %v1865, %v1871
        %v1879 = vmul.f32 %v1866, %v1871
        %v1880 = vadd.f32 %v1845, %v1872
        %v1881 = vadd.f32 %v1846, %v1873
        %v1882 = vadd.f32 %v1847, %v1874
        %v1883 = vadd.f32 %v1848, %v1875
        %v1884 = vadd.f32 %v1849, %v1876
        %v1885 = vadd.f32 %v1850, %v1877
        %v1886 = vadd.f32 %v1851, %v1878
        %v1887 = vadd.f32 %v1852, %v1879
        %v1888 = vrot.slane %v1856, 1
        %v1889 = vrot.slane %v1857, 1
        %v1890 = vrot.slane %v1858, 1
        %v1891 = vrot.slane %v1859, 1
        %v1892 = vrot.slane %v1860, 1
        %v1893 = vrot.slane %v1861, 1
        %v1894 = vrot.slane %v1862, 1
        %v1895 = vrot.slane %v1863, 1
        %v1896 = vrot.slane %v1864, 1
        %v1897 = vrot.slane %v1865, 1
        %v1898 = vrot.slane %v1866, 1
        %v1899 = vrot.slane %v1867, 1
        %v1900 = vsel %vm519, %v1898, %v1899
        %v1901 = vsel %vm519, %v1897, %v1898
        %v1902 = vsel %vm519, %v1895, %v1896
        %v1903 = vsel %vm519, %v1894, %v1895
        %v1904 = vsel %vm519, %v1892, %v1893
        %v1905 = vsel %vm519, %v1891, %v1892
        %v1906 = vsel %vm519, %v1889, %v1890
        %v1907 = vsel %vm519, %v1888, %v1889
        %v1908 = vlaneseq
        %v1909 = vshrl.u32 %v1908, 7
        %v1910 = vsub.s32 1, %v1909
        %v1911 = vrot.slane %v458, %v1910
        %v1912 = vmul.f32 %v1907, %v1911
        %v1913 = vmul.f32 %v1906, %v1911
        %v1914 = vmul.f32 %v1905, %v1911
        %v1915 = vmul.f32 %v1904, %v1911
        %v1916 = vmul.f32 %v1903, %v1911
        %v1917 = vmul.f32 %v1902, %v1911
        %v1918 = vmul.f32 %v1901, %v1911
        %v1919 = vmul.f32 %v1900, %v1911
        %v1920 = vadd.f32 %v1880, %v1912
        %v1921 = vadd.f32 %v1881, %v1913
        %v1922 = vadd.f32 %v1882, %v1914
        %v1923 = vadd.f32 %v1883, %v1915
        %v1924 = vadd.f32 %v1884, %v1916
        %v1925 = vadd.f32 %v1885, %v1917
        %v1926 = vadd.f32 %v1886, %v1918
        %v1927 = vadd.f32 %v1887, %v1919
        %v1928 = vrot.slane %v1856, 2
        %v1929 = vrot.slane %v1857, 2
        %v1930 = vrot.slane %v1858, 2
        %v1931 = vrot.slane %v1859, 2
        %v1932 = vrot.slane %v1860, 2
        %v1933 = vrot.slane %v1861, 2
        %v1934 = vrot.slane %v1862, 2
        %v1935 = vrot.slane %v1863, 2
        %v1936 = vrot.slane %v1864, 2
        %v1937 = vrot.slane %v1865, 2
        %v1938 = vrot.slane %v1866, 2
        %v1939 = vrot.slane %v1867, 2
        %v1940 = vsel %vm560, %v1938, %v1939
        %v1941 = vsel %vm560, %v1937, %v1938
        %v1942 = vsel %vm560, %v1935, %v1936
        %v1943 = vsel %vm560, %v1934, %v1935
        %v1944 = vsel %vm560, %v1932, %v1933
        %v1945 = vsel %vm560, %v1931, %v1932
        %v1946 = vsel %vm560, %v1929, %v1930
        %v1947 = vsel %vm560, %v1928, %v1929
        %v1948 = vlaneseq
        %v1949 = vshrl.u32 %v1948, 7
        %v1950 = vsub.s32 2, %v1949
        %v1951 = vrot.slane %v458, %v1950
        %v1952 = vmul.f32 %v1947, %v1951
        %v1953 = vmul.f32 %v1946, %v1951
        %v1954 = vmul.f32 %v1945, %v1951
        %v1955 = vmul.f32 %v1944, %v1951
        %v1956 = vmul.f32 %v1943, %v1951
        %v1957 = vmul.f32 %v1942, %v1951
        %v1958 = vmul.f32 %v1941, %v1951
        %v1959 = vmul.f32 %v1940, %v1951
        %v1960 = vadd.f32 %v1920, %v1952
        %v1961 = vadd.f32 %v1921, %v1953
        %v1962 = vadd.f32 %v1922, %v1954
        %v1963 = vadd.f32 %v1923, %v1955
        %v1964 = vadd.f32 %v1924, %v1956
        %v1965 = vadd.f32 %v1925, %v1957
        %v1966 = vadd.f32 %v1926, %v1958
        %v1967 = vadd.f32 %v1927, %v1959
        %v1968 = vrot.slane %v1856, 3
        %v1969 = vrot.slane %v1857, 3
        %v1970 = vrot.slane %v1858, 3
        %v1971 = vrot.slane %v1859, 3
        %v1972 = vrot.slane %v1860, 3
        %v1973 = vrot.slane %v1861, 3
        %v1974 = vrot.slane %v1862, 3
        %v1975 = vrot.slane %v1863, 3
        %v1976 = vrot.slane %v1864, 3
        %v1977 = vrot.slane %v1865, 3
        %v1978 = vrot.slane %v1866, 3
        %v1979 = vrot.slane %v1867, 3
        %v1980 = vsel %vm601, %v1978, %v1979
        %v1981 = vsel %vm601, %v1977, %v1978
        %v1982 = vsel %vm601, %v1975, %v1976
        %v1983 = vsel %vm601, %v1974, %v1975
        %v1984 = vsel %vm601, %v1972, %v1973
        %v1985 = vsel %vm601, %v1971, %v1972
        %v1986 = vsel %vm601, %v1969, %v1970
        %v1987 = vsel %vm601, %v1968, %v1969
        %v1988 = vlaneseq
        %v1989 = vshrl.u32 %v1988, 7
        %v1990 = vsub.s32 3, %v1989
        %v1991 = vrot.slane %v458, %v1990
        %v1992 = vmul.f32 %v1987, %v1991
        %v1993 = vmul.f32 %v1986, %v1991
        %v1994 = vmul.f32 %v1985, %v1991
        %v1995 = vmul.f32 %v1984, %v1991
        %v1996 = vmul.f32 %v1983, %v1991
        %v1997 = vmul.f32 %v1982, %v1991
        %v1998 = vmul.f32 %v1981, %v1991
        %v1999 = vmul.f32 %v1980, %v1991
        %v2000 = vadd.f32 %v1960, %v1992
        %v2001 = vadd.f32 %v1961, %v1993
        %v2002 = vadd.f32 %v1962, %v1994
        %v2003 = vadd.f32 %v1963, %v1995
        %v2004 = vadd.f32 %v1964, %v1996
        %v2005 = vadd.f32 %v1965, %v1997
        %v2006 = vadd.f32 %v1966, %v1998
        %v2007 = vadd.f32 %v1967, %v1999
        %v2008 = vrot.slane %v1856, 4
        %v2009 = vrot.slane %v1857, 4
        %v2010 = vrot.slane %v1858, 4
        %v2011 = vrot.slane %v1859, 4
        %v2012 = vrot.slane %v1860, 4
        %v2013 = vrot.slane %v1861, 4
        %v2014 = vrot.slane %v1862, 4
        %v2015 = vrot.slane %v1863, 4
        %v2016 = vrot.slane %v1864, 4
        %v2017 = vrot.slane %v1865, 4
        %v2018 = vrot.slane %v1866, 4
        %v2019 = vrot.slane %v1867, 4
        %v2020 = vsel %vm642, %v2018, %v2019
        %v2021 = vsel %vm642, %v2017, %v2018
        %v2022 = vsel %vm642, %v2015, %v2016
        %v2023 = vsel %vm642, %v2014, %v2015
        %v2024 = vsel %vm642, %v2012, %v2013
        %v2025 = vsel %vm642, %v2011, %v2012
        %v2026 = vsel %vm642, %v2009, %v2010
        %v2027 = vsel %vm642, %v2008, %v2009
        %v2028 = vlaneseq
        %v2029 = vshrl.u32 %v2028, 7
        %v2030 = vsub.s32 4, %v2029
        %v2031 = vrot.slane %v458, %v2030
        %v2032 = vmul.f32 %v2027, %v2031
        %v2033 = vmul.f32 %v2026, %v2031
        %v2034 = vmul.f32 %v2025, %v2031
        %v2035 = vmul.f32 %v2024, %v2031
        %v2036 = vmul.f32 %v2023, %v2031
        %v2037 = vmul.f32 %v2022, %v2031
        %v2038 = vmul.f32 %v2021, %v2031
        %v2039 = vmul.f32 %v2020, %v2031
        %v2040 = vadd.f32 %v2000, %v2032
        %v2041 = vadd.f32 %v2001, %v2033
        %v2042 = vadd.f32 %v2002, %v2034
        %v2043 = vadd.f32 %v2003, %v2035
        %v2044 = vadd.f32 %v2004, %v2036
        %v2045 = vadd.f32 %v2005, %v2037
        %v2046 = vadd.f32 %v2006, %v2038
        %v2047 = vadd.f32 %v2007, %v2039
        %v2048 = vrot.slane %v1856, 5
        %v2049 = vrot.slane %v1857, 5
        %v2050 = vrot.slane %v1858, 5
        %v2051 = vrot.slane %v1859, 5
        %v2052 = vrot.slane %v1860, 5
        %v2053 = vrot.slane %v1861, 5
        %v2054 = vrot.slane %v1862, 5
        %v2055 = vrot.slane %v1863, 5
        %v2056 = vrot.slane %v1864, 5
        %v2057 = vrot.slane %v1865, 5
        %v2058 = vrot.slane %v1866, 5
        %v2059 = vrot.slane %v1867, 5
        %v2060 = vsel %vm683, %v2058, %v2059
        %v2061 = vsel %vm683, %v2057, %v2058
        %v2062 = vsel %vm683, %v2055, %v2056
        %v2063 = vsel %vm683, %v2054, %v2055
        %v2064 = vsel %vm683, %v2052, %v2053
        %v2065 = vsel %vm683, %v2051, %v2052
        %v2066 = vsel %vm683, %v2049, %v2050
        %v2067 = vsel %vm683, %v2048, %v2049
        %v2068 = vlaneseq
        %v2069 = vshrl.u32 %v2068, 7
        %v2070 = vsub.s32 5, %v2069
        %v2071 = vrot.slane %v458, %v2070
        %v2072 = vmul.f32 %v2067, %v2071
        %v2073 = vmul.f32 %v2066, %v2071
        %v2074 = vmul.f32 %v2065, %v2071
        %v2075 = vmul.f32 %v2064, %v2071
        %v2076 = vmul.f32 %v2063, %v2071
        %v2077 = vmul.f32 %v2062, %v2071
        %v2078 = vmul.f32 %v2061, %v2071
        %v2079 = vmul.f32 %v2060, %v2071
        %v2080 = vadd.f32 %v2040, %v2072
        %v2081 = vadd.f32 %v2041, %v2073
        %v2082 = vadd.f32 %v2042, %v2074
        %v2083 = vadd.f32 %v2043, %v2075
        %v2084 = vadd.f32 %v2044, %v2076
        %v2085 = vadd.f32 %v2045, %v2077
        %v2086 = vadd.f32 %v2046, %v2078
        %v2087 = vadd.f32 %v2047, %v2079
        %v2088 = vrot.slane %v1856, 6
        %v2089 = vrot.slane %v1857, 6
        %v2090 = vrot.slane %v1858, 6
        %v2091 = vrot.slane %v1859, 6
        %v2092 = vrot.slane %v1860, 6
        %v2093 = vrot.slane %v1861, 6
        %v2094 = vrot.slane %v1862, 6
        %v2095 = vrot.slane %v1863, 6
        %v2096 = vrot.slane %v1864, 6
        %v2097 = vrot.slane %v1865, 6
        %v2098 = vrot.slane %v1866, 6
        %v2099 = vrot.slane %v1867, 6
        %v2100 = vsel %vm724, %v2098, %v2099
        %v2101 = vsel %vm724, %v2097, %v2098
        %v2102 = vsel %vm724, %v2095, %v2096
        %v2103 = vsel %vm724, %v2094, %v2095
        %v2104 = vsel %vm724, %v2092, %v2093
        %v2105 = vsel %vm724, %v2091, %v2092
        %v2106 = vsel %vm724, %v2089, %v2090
        %v2107 = vsel %vm724, %v2088, %v2089
        %v2108 = vlaneseq
        %v2109 = vshrl.u32 %v2108, 7
        %v2110 = vsub.s32 6, %v2109
        %v2111 = vrot.slane %v458, %v2110
        %v2112 = vmul.f32 %v2107, %v2111
        %v2113 = vmul.f32 %v2106, %v2111
        %v2114 = vmul.f32 %v2105, %v2111
        %v2115 = vmul.f32 %v2104, %v2111
        %v2116 = vmul.f32 %v2103, %v2111
        %v2117 = vmul.f32 %v2102, %v2111
        %v2118 = vmul.f32 %v2101, %v2111
        %v2119 = vmul.f32 %v2100, %v2111
        %v2120 = vadd.f32 %v2080, %v2112
        %v2121 = vadd.f32 %v2081, %v2113
        %v2122 = vadd.f32 %v2082, %v2114
        %v2123 = vadd.f32 %v2083, %v2115
        %v2124 = vadd.f32 %v2084, %v2116
        %v2125 = vadd.f32 %v2085, %v2117
        %v2126 = vadd.f32 %v2086, %v2118
        %v2127 = vadd.f32 %v2087, %v2119
        %s2128 = sadd.s32 %s470, 6
        %s2129 = smul.u32 %s2128, 24
        %s2130 = scalar_lea.vmem [#allocation2], %s2129
        %v2131 = vld [vmem:[%s2130] sm:$0xff]
        %v2132 = vld [vmem:[%s2130 + $0x8] sm:$0xff]
        %v2133 = vld [vmem:[%s2130 + $0x10] sm:$0xff]
        %v2134 = vld [vmem:[%s2130 + $0x18] sm:$0xff]
        %v2135 = vld [vmem:[%s2130 + $0x20] sm:$0xff]
        %v2136 = vld [vmem:[%s2130 + $0x28] sm:$0xff]
        %v2137 = vld [vmem:[%s2130 + $0x30] sm:$0xff]
        %v2138 = vld [vmem:[%s2130 + $0x38] sm:$0xff]
        %v2139 = vld [vmem:[%s2130 + $0x40] sm:$0xff]
        %v2140 = vld [vmem:[%s2130 + $0x48] sm:$0xff]
        %v2141 = vld [vmem:[%s2130 + $0x50] sm:$0xff]
        %v2142 = vld [vmem:[%s2130 + $0x58] sm:$0xff]
        %v2143 = vlaneseq
        %v2144 = vshrl.u32 %v2143, 7
        %v2145 = vsub.s32 0, %v2144
        %v2146 = vrot.slane %v459, %v2145
        %v2147 = vmul.f32 %v2131, %v2146
        %v2148 = vmul.f32 %v2132, %v2146
        %v2149 = vmul.f32 %v2134, %v2146
        %v2150 = vmul.f32 %v2135, %v2146
        %v2151 = vmul.f32 %v2137, %v2146
        %v2152 = vmul.f32 %v2138, %v2146
        %v2153 = vmul.f32 %v2140, %v2146
        %v2154 = vmul.f32 %v2141, %v2146
        %v2155 = vadd.f32 %v2120, %v2147
        %v2156 = vadd.f32 %v2121, %v2148
        %v2157 = vadd.f32 %v2122, %v2149
        %v2158 = vadd.f32 %v2123, %v2150
        %v2159 = vadd.f32 %v2124, %v2151
        %v2160 = vadd.f32 %v2125, %v2152
        %v2161 = vadd.f32 %v2126, %v2153
        %v2162 = vadd.f32 %v2127, %v2154
        %v2163 = vrot.slane %v2131, 1
        %v2164 = vrot.slane %v2132, 1
        %v2165 = vrot.slane %v2133, 1
        %v2166 = vrot.slane %v2134, 1
        %v2167 = vrot.slane %v2135, 1
        %v2168 = vrot.slane %v2136, 1
        %v2169 = vrot.slane %v2137, 1
        %v2170 = vrot.slane %v2138, 1
        %v2171 = vrot.slane %v2139, 1
        %v2172 = vrot.slane %v2140, 1
        %v2173 = vrot.slane %v2141, 1
        %v2174 = vrot.slane %v2142, 1
        %v2175 = vsel %vm519, %v2173, %v2174
        %v2176 = vsel %vm519, %v2172, %v2173
        %v2177 = vsel %vm519, %v2170, %v2171
        %v2178 = vsel %vm519, %v2169, %v2170
        %v2179 = vsel %vm519, %v2167, %v2168
        %v2180 = vsel %vm519, %v2166, %v2167
        %v2181 = vsel %vm519, %v2164, %v2165
        %v2182 = vsel %vm519, %v2163, %v2164
        %v2183 = vlaneseq
        %v2184 = vshrl.u32 %v2183, 7
        %v2185 = vsub.s32 1, %v2184
        %v2186 = vrot.slane %v459, %v2185
        %v2187 = vmul.f32 %v2182, %v2186
        %v2188 = vmul.f32 %v2181, %v2186
        %v2189 = vmul.f32 %v2180, %v2186
        %v2190 = vmul.f32 %v2179, %v2186
        %v2191 = vmul.f32 %v2178, %v2186
        %v2192 = vmul.f32 %v2177, %v2186
        %v2193 = vmul.f32 %v2176, %v2186
        %v2194 = vmul.f32 %v2175, %v2186
        %v2195 = vadd.f32 %v2155, %v2187
        %v2196 = vadd.f32 %v2156, %v2188
        %v2197 = vadd.f32 %v2157, %v2189
        %v2198 = vadd.f32 %v2158, %v2190
        %v2199 = vadd.f32 %v2159, %v2191
        %v2200 = vadd.f32 %v2160, %v2192
        %v2201 = vadd.f32 %v2161, %v2193
        %v2202 = vadd.f32 %v2162, %v2194
        %v2203 = vrot.slane %v2131, 2
        %v2204 = vrot.slane %v2132, 2
        %v2205 = vrot.slane %v2133, 2
        %v2206 = vrot.slane %v2134, 2
        %v2207 = vrot.slane %v2135, 2
        %v2208 = vrot.slane %v2136, 2
        %v2209 = vrot.slane %v2137, 2
        %v2210 = vrot.slane %v2138, 2
        %v2211 = vrot.slane %v2139, 2
        %v2212 = vrot.slane %v2140, 2
        %v2213 = vrot.slane %v2141, 2
        %v2214 = vrot.slane %v2142, 2
        %v2215 = vsel %vm560, %v2213, %v2214
        %v2216 = vsel %vm560, %v2212, %v2213
        %v2217 = vsel %vm560, %v2210, %v2211
        %v2218 = vsel %vm560, %v2209, %v2210
        %v2219 = vsel %vm560, %v2207, %v2208
        %v2220 = vsel %vm560, %v2206, %v2207
        %v2221 = vsel %vm560, %v2204, %v2205
        %v2222 = vsel %vm560, %v2203, %v2204
        %v2223 = vlaneseq
        %v2224 = vshrl.u32 %v2223, 7
        %v2225 = vsub.s32 2, %v2224
        %v2226 = vrot.slane %v459, %v2225
        %v2227 = vmul.f32 %v2222, %v2226
        %v2228 = vmul.f32 %v2221, %v2226
        %v2229 = vmul.f32 %v2220, %v2226
        %v2230 = vmul.f32 %v2219, %v2226
        %v2231 = vmul.f32 %v2218, %v2226
        %v2232 = vmul.f32 %v2217, %v2226
        %v2233 = vmul.f32 %v2216, %v2226
        %v2234 = vmul.f32 %v2215, %v2226
        %v2235 = vadd.f32 %v2195, %v2227
        %v2236 = vadd.f32 %v2196, %v2228
        %v2237 = vadd.f32 %v2197, %v2229
        %v2238 = vadd.f32 %v2198, %v2230
        %v2239 = vadd.f32 %v2199, %v2231
        %v2240 = vadd.f32 %v2200, %v2232
        %v2241 = vadd.f32 %v2201, %v2233
        %v2242 = vadd.f32 %v2202, %v2234
        %v2243 = vrot.slane %v2131, 3
        %v2244 = vrot.slane %v2132, 3
        %v2245 = vrot.slane %v2133, 3
        %v2246 = vrot.slane %v2134, 3
        %v2247 = vrot.slane %v2135, 3
        %v2248 = vrot.slane %v2136, 3
        %v2249 = vrot.slane %v2137, 3
        %v2250 = vrot.slane %v2138, 3
        %v2251 = vrot.slane %v2139, 3
        %v2252 = vrot.slane %v2140, 3
        %v2253 = vrot.slane %v2141, 3
        %v2254 = vrot.slane %v2142, 3
        %v2255 = vsel %vm601, %v2253, %v2254
        %v2256 = vsel %vm601, %v2252, %v2253
        %v2257 = vsel %vm601, %v2250, %v2251
        %v2258 = vsel %vm601, %v2249, %v2250
        %v2259 = vsel %vm601, %v2247, %v2248
        %v2260 = vsel %vm601, %v2246, %v2247
        %v2261 = vsel %vm601, %v2244, %v2245
        %v2262 = vsel %vm601, %v2243, %v2244
        %v2263 = vlaneseq
        %v2264 = vshrl.u32 %v2263, 7
        %v2265 = vsub.s32 3, %v2264
        %v2266 = vrot.slane %v459, %v2265
        %v2267 = vmul.f32 %v2262, %v2266
        %v2268 = vmul.f32 %v2261, %v2266
        %v2269 = vmul.f32 %v2260, %v2266
        %v2270 = vmul.f32 %v2259, %v2266
        %v2271 = vmul.f32 %v2258, %v2266
        %v2272 = vmul.f32 %v2257, %v2266
        %v2273 = vmul.f32 %v2256, %v2266
        %v2274 = vmul.f32 %v2255, %v2266
        %v2275 = vadd.f32 %v2235, %v2267
        %v2276 = vadd.f32 %v2236, %v2268
        %v2277 = vadd.f32 %v2237, %v2269
        %v2278 = vadd.f32 %v2238, %v2270
        %v2279 = vadd.f32 %v2239, %v2271
        %v2280 = vadd.f32 %v2240, %v2272
        %v2281 = vadd.f32 %v2241, %v2273
        %v2282 = vadd.f32 %v2242, %v2274
        %v2283 = vrot.slane %v2131, 4
        %v2284 = vrot.slane %v2132, 4
        %v2285 = vrot.slane %v2133, 4
        %v2286 = vrot.slane %v2134, 4
        %v2287 = vrot.slane %v2135, 4
        %v2288 = vrot.slane %v2136, 4
        %v2289 = vrot.slane %v2137, 4
        %v2290 = vrot.slane %v2138, 4
        %v2291 = vrot.slane %v2139, 4
        %v2292 = vrot.slane %v2140, 4
        %v2293 = vrot.slane %v2141, 4
        %v2294 = vrot.slane %v2142, 4
        %v2295 = vsel %vm642, %v2293, %v2294
        %v2296 = vsel %vm642, %v2292, %v2293
        %v2297 = vsel %vm642, %v2290, %v2291
        %v2298 = vsel %vm642, %v2289, %v2290
        %v2299 = vsel %vm642, %v2287, %v2288
        %v2300 = vsel %vm642, %v2286, %v2287
        %v2301 = vsel %vm642, %v2284, %v2285
        %v2302 = vsel %vm642, %v2283, %v2284
        %v2303 = vlaneseq
        %v2304 = vshrl.u32 %v2303, 7
        %v2305 = vsub.s32 4, %v2304
        %v2306 = vrot.slane %v459, %v2305
        %v2307 = vmul.f32 %v2302, %v2306
        %v2308 = vmul.f32 %v2301, %v2306
        %v2309 = vmul.f32 %v2300, %v2306
        %v2310 = vmul.f32 %v2299, %v2306
        %v2311 = vmul.f32 %v2298, %v2306
        %v2312 = vmul.f32 %v2297, %v2306
        %v2313 = vmul.f32 %v2296, %v2306
        %v2314 = vmul.f32 %v2295, %v2306
        %v2315 = vadd.f32 %v2275, %v2307
        %v2316 = vadd.f32 %v2276, %v2308
        %v2317 = vadd.f32 %v2277, %v2309
        %v2318 = vadd.f32 %v2278, %v2310
        %v2319 = vadd.f32 %v2279, %v2311
        %v2320 = vadd.f32 %v2280, %v2312
        %v2321 = vadd.f32 %v2281, %v2313
        %v2322 = vadd.f32 %v2282, %v2314
        %v2323 = vrot.slane %v2131, 5
        %v2324 = vrot.slane %v2132, 5
        %v2325 = vrot.slane %v2133, 5
        %v2326 = vrot.slane %v2134, 5
        %v2327 = vrot.slane %v2135, 5
        %v2328 = vrot.slane %v2136, 5
        %v2329 = vrot.slane %v2137, 5
        %v2330 = vrot.slane %v2138, 5
        %v2331 = vrot.slane %v2139, 5
        %v2332 = vrot.slane %v2140, 5
        %v2333 = vrot.slane %v2141, 5
        %v2334 = vrot.slane %v2142, 5
        %v2335 = vsel %vm683, %v2333, %v2334
        %v2336 = vsel %vm683, %v2332, %v2333
        %v2337 = vsel %vm683, %v2330, %v2331
        %v2338 = vsel %vm683, %v2329, %v2330
        %v2339 = vsel %vm683, %v2327, %v2328
        %v2340 = vsel %vm683, %v2326, %v2327
        %v2341 = vsel %vm683, %v2324, %v2325
        %v2342 = vsel %vm683, %v2323, %v2324
        %v2343 = vlaneseq
        %v2344 = vshrl.u32 %v2343, 7
        %v2345 = vsub.s32 5, %v2344
        %v2346 = vrot.slane %v459, %v2345
        %v2347 = vmul.f32 %v2342, %v2346
        %v2348 = vmul.f32 %v2341, %v2346
        %v2349 = vmul.f32 %v2340, %v2346
        %v2350 = vmul.f32 %v2339, %v2346
        %v2351 = vmul.f32 %v2338, %v2346
        %v2352 = vmul.f32 %v2337, %v2346
        %v2353 = vmul.f32 %v2336, %v2346
        %v2354 = vmul.f32 %v2335, %v2346
        %v2355 = vadd.f32 %v2315, %v2347
        %v2356 = vadd.f32 %v2316, %v2348
        %v2357 = vadd.f32 %v2317, %v2349
        %v2358 = vadd.f32 %v2318, %v2350
        %v2359 = vadd.f32 %v2319, %v2351
        %v2360 = vadd.f32 %v2320, %v2352
        %v2361 = vadd.f32 %v2321, %v2353
        %v2362 = vadd.f32 %v2322, %v2354
        %v2363 = vrot.slane %v2131, 6
        %v2364 = vrot.slane %v2132, 6
        %v2365 = vrot.slane %v2133, 6
        %v2366 = vrot.slane %v2134, 6
        %v2367 = vrot.slane %v2135, 6
        %v2368 = vrot.slane %v2136, 6
        %v2369 = vrot.slane %v2137, 6
        %v2370 = vrot.slane %v2138, 6
        %v2371 = vrot.slane %v2139, 6
        %v2372 = vrot.slane %v2140, 6
        %v2373 = vrot.slane %v2141, 6
        %v2374 = vrot.slane %v2142, 6
        %v2375 = vsel %vm724, %v2373, %v2374
        %v2376 = vsel %vm724, %v2372, %v2373
        %v2377 = vsel %vm724, %v2370, %v2371
        %v2378 = vsel %vm724, %v2369, %v2370
        %v2379 = vsel %vm724, %v2367, %v2368
        %v2380 = vsel %vm724, %v2366, %v2367
        %v2381 = vsel %vm724, %v2364, %v2365
        %v2382 = vsel %vm724, %v2363, %v2364
        %v2383 = vlaneseq
        %v2384 = vshrl.u32 %v2383, 7
        %v2385 = vsub.s32 6, %v2384
        %v2386 = vrot.slane %v459, %v2385
        %v2387 = vmul.f32 %v2382, %v2386
        %v2388 = vmul.f32 %v2381, %v2386
        %v2389 = vmul.f32 %v2380, %v2386
        %v2390 = vmul.f32 %v2379, %v2386
        %v2391 = vmul.f32 %v2378, %v2386
        %v2392 = vmul.f32 %v2377, %v2386
        %v2393 = vmul.f32 %v2376, %v2386
        %v2394 = vmul.f32 %v2375, %v2386
        %v2395 = vadd.f32 %v2355, %v2387
        %v2396 = vadd.f32 %v2356, %v2388
        %v2397 = vadd.f32 %v2357, %v2389
        %v2398 = vadd.f32 %v2358, %v2390
        %v2399 = vadd.f32 %v2359, %v2391
        %v2400 = vadd.f32 %v2360, %v2392
        %v2401 = vadd.f32 %v2361, %v2393
        %v2402 = vadd.f32 %v2362, %v2394
        %v2403 = vpack.c.bf16 %v2396, %v2395
        %v2404 = vpack.c.bf16 %v2398, %v2397
        %v2405 = vpack.c.bf16 %v2400, %v2399
        %v2406 = vpack.c.bf16 %v2402, %v2401
        %s2407 = smul.u32 %s461, 64
        %v2412 = vunpack.c.l.b16 %v2403
        %v2413 = vunpack.c.h.b16 %v2403
        %v2414 = vunpack.c.l.b16 %v2404
        %v2415 = vunpack.c.h.b16 %v2404
        %v2416 = vunpack.c.l.b16 %v2405
        %v2417 = vunpack.c.h.b16 %v2405
        %v2418 = vunpack.c.l.b16 %v2406
        %v2419 = vunpack.c.h.b16 %v2406
        %v2420 = vpack.c.b16 %v2412, %v2412
        %v2421 = vpack.c.b16 %v2413, %v2413
        %v2422 = vpack.c.b16 %v2414, %v2414
        %v2423 = vpack.c.b16 %v2415, %v2415
        %v2424 = vpack.c.b16 %v2416, %v2416
        %v2425 = vpack.c.b16 %v2417, %v2417
        %v2426 = vpack.c.b16 %v2418, %v2418
        %v2427 = vpack.c.b16 %v2419, %v2419
        %s2436 = sshra.s32 %s2407, 3
        %s2437 = sand.u32 %s2407, 7
        %s2438 = smul.addr %s2436, 4
        %s2439 = scalar_lea.vmem [#allocation3], %s2438
        %vm2440 = vcmask 27648
        %2441 = vst.msk [vmem:[%s2439] sm:$0xf] %vm2440, %v2420
        %2442 = vst.msk [vmem:[%s2439 + $0x4] sm:$0xf] %vm2440, %v2421
        %2443 = vst.msk [vmem:[%s2439 + $0x8] sm:$0xf] %vm2440, %v2422
        %2444 = vst.msk [vmem:[%s2439 + $0xc] sm:$0xf] %vm2440, %v2423
        %2445 = vst.msk [vmem:[%s2439 + $0x10] sm:$0xf] %vm2440, %v2424
        %2446 = vst.msk [vmem:[%s2439 + $0x14] sm:$0xf] %vm2440, %v2425
        %2447 = vst.msk [vmem:[%s2439 + $0x18] sm:$0xf] %vm2440, %v2426
        %2448 = vst.msk [vmem:[%s2439 + $0x1c] sm:$0xf] %vm2440, %v2427
        %v2449 = vsel %vm334, %v2395, 0.0
        %v2450 = vsel %vm334, %v2397, 0.0
        %v2451 = vadd.f32 %v2449, %v2450
        %v2452 = vsel %vm334, %v2399, 0.0
        %v2453 = vadd.f32 %v2451, %v2452
        %v2454 = vsel %vm334, %v2401, 0.0
        %v2455 = vadd.f32 %v2453, %v2454
        %v2456 = vsel %vm334, %v2396, 0.0
        %v2457 = vsel %vm334, %v2398, 0.0
        %v2458 = vadd.f32 %v2456, %v2457
        %v2459 = vsel %vm334, %v2400, 0.0
        %v2460 = vadd.f32 %v2458, %v2459
        %v2461 = vsel %vm334, %v2402, 0.0
        %v2462 = vadd.f32 %v2460, %v2461
        %v2463 = vadd.f32 %v466, %v2455
        %v2464 = vadd.f32 %v467, %v2462
        %v2465 = vmul.f32 %v2395, %v2395
        %v2466 = vmul.f32 %v2396, %v2396
        %v2467 = vmul.f32 %v2397, %v2397
        %v2468 = vmul.f32 %v2398, %v2398
        %v2469 = vmul.f32 %v2399, %v2399
        %v2470 = vmul.f32 %v2400, %v2400
        %v2471 = vmul.f32 %v2401, %v2401
        %v2472 = vmul.f32 %v2402, %v2402
        %v2473 = vsel %vm334, %v2465, 0.0
        %v2474 = vsel %vm334, %v2467, 0.0
        %v2475 = vadd.f32 %v2473, %v2474
        %v2476 = vsel %vm334, %v2469, 0.0
        %v2477 = vadd.f32 %v2475, %v2476
        %v2478 = vsel %vm334, %v2471, 0.0
        %v2479 = vadd.f32 %v2477, %v2478
        %v2480 = vsel %vm334, %v2466, 0.0
        %v2481 = vsel %vm334, %v2468, 0.0
        %v2482 = vadd.f32 %v2480, %v2481
        %v2483 = vsel %vm334, %v2470, 0.0
        %v2484 = vadd.f32 %v2482, %v2483
        %v2485 = vsel %vm334, %v2472, 0.0
        %v2486 = vadd.f32 %v2484, %v2485
        %v2487 = vadd.f32 %v468, %v2479
        %v2488 = vadd.f32 %v469, %v2486
      $region61: #{tpu_custom_call.1} parent=55 // loop_footer
        %s465 = sadd.s32 1, %s461
      $region62: #{tpu_custom_call.1} parent=55 // loop_footer_branch
        %460 = sbr.rel target = $region58
      $region63: #{tpu_custom_call.1} parent=55 // loop_exit
        _
      %v2489 = vsel %vm334, %v466, 0.0
      %v2490 = vsel %vm334, %v467, 0.0
      %v2491 = vadd.f32 %v2489, %v2490
      %2492 = vadd.xlane.f32.xlu0 %v2491
      %v2493 = vpop.xlane.xlu0 %2492
      %v2494 = vrot.slane %v2493, 4
      %v2495 = vadd.f32 %v2493, %v2494
      %v2496 = vrot.slane %v2495, 2
      %v2497 = vadd.f32 %v2495, %v2496
      %v2498 = vrot.slane %v2497, 1
      %v2499 = vadd.f32 %v2497, %v2498
      %s2500 = vtos %v2499
      %s2501 = smul.f32 %s2500, 0.0009765625
      %v2502 = vsel %vm334, %v468, 0.0
      %v2503 = vsel %vm334, %v469, 0.0
      %v2504 = vadd.f32 %v2502, %v2503
      %2505 = vadd.xlane.f32.xlu0 %v2504
      %v2506 = vpop.xlane.xlu0 %2505
      %v2507 = vrot.slane %v2506, 4
      %v2508 = vadd.f32 %v2506, %v2507
      %v2509 = vrot.slane %v2508, 2
      %v2510 = vadd.f32 %v2508, %v2509
      %v2511 = vrot.slane %v2510, 1
      %v2512 = vadd.f32 %v2510, %v2511
      %s2513 = vtos %v2512
      %s2514 = smul.f32 %s2513, 0.0009765625
      %s2515 = smul.f32 %s2501, %s2501
      %s2516 = ssub.f32 %s2514, %s2515
      %s2517 = smax.f32 %s2516, 0.0
      %s2518 = sadd.f32 %s2517, 1e-05
      %v2519 = vstv %s2518
      %v2520 = vrsqrt.pop %v2519
      %s2521 = vtos %v2520
      %v2522 = vld [vmem:[%s2] sm:$0x1]
      %v2523 = vld [vmem:[%s3] sm:$0x1]
      %v2524 = vstv %s2521
      %v2525 = vmul.f32 %v2522, %v2524
      %v2526 = vstv %s2501
      %v2527 = vmul.f32 %v2526, %v2525
      %v2528 = vsub.f32 %v2523, %v2527
      %v2529 = vld [vmem:[%s5] sm:$0x1]
      %v2530 = vld [vmem:[%s7] sm:$0x1]
      %v2531 = vld [vmem:[%s8] sm:$0x1]
      %v2532 = vld [vmem:[#allocation3] sm:$0xf]
      %v2533 = vld [vmem:[#allocation3 + $0x4] sm:$0xf]
      %v2534 = vld [vmem:[#allocation3 + $0x8] sm:$0xf]
      %v2535 = vld [vmem:[#allocation3 + $0xc] sm:$0xf]
      %v2536 = vld [vmem:[#allocation3 + $0x10] sm:$0xf]
      %v2537 = vld [vmem:[#allocation3 + $0x14] sm:$0xf]
      %v2538 = vld [vmem:[#allocation3 + $0x18] sm:$0xf]
      %v2539 = vld [vmem:[#allocation3 + $0x1c] sm:$0xf]
      %v2540 = vld [vmem:[#allocation3 + $0x20] sm:$0xf]
      %v2541 = vld [vmem:[#allocation3 + $0x24] sm:$0xf]
      %v2542 = vld [vmem:[#allocation3 + $0x28] sm:$0xf]
      %v2543 = vld [vmem:[#allocation3 + $0x2c] sm:$0xf]
      %v2544 = vld [vmem:[#allocation3 + $0x30] sm:$0xf]
      %v2545 = vld [vmem:[#allocation3 + $0x34] sm:$0xf]
      %v2546 = vld [vmem:[#allocation3 + $0x38] sm:$0xf]
      %v2547 = vld [vmem:[#allocation3 + $0x3c] sm:$0xf]
      %v2548 = vld [vmem:[#allocation3 + $0x40] sm:$0xf]
      %v2549 = vld [vmem:[#allocation3 + $0x44] sm:$0xf]
      %v2550 = vld [vmem:[#allocation3 + $0x48] sm:$0xf]
      %v2551 = vld [vmem:[#allocation3 + $0x4c] sm:$0xf]
      %v2552 = vld [vmem:[#allocation3 + $0x50] sm:$0xf]
      %v2553 = vld [vmem:[#allocation3 + $0x54] sm:$0xf]
      %v2554 = vld [vmem:[#allocation3 + $0x58] sm:$0xf]
      %v2555 = vld [vmem:[#allocation3 + $0x5c] sm:$0xf]
      %v2556 = vld [vmem:[#allocation3 + $0x60] sm:$0xf]
      %v2557 = vld [vmem:[#allocation3 + $0x64] sm:$0xf]
      %v2558 = vld [vmem:[#allocation3 + $0x68] sm:$0xf]
      %v2559 = vld [vmem:[#allocation3 + $0x6c] sm:$0xf]
      %v2560 = vld [vmem:[#allocation3 + $0x70] sm:$0xf]
      %v2561 = vld [vmem:[#allocation3 + $0x74] sm:$0xf]
      %v2562 = vld [vmem:[#allocation3 + $0x78] sm:$0xf]
      %v2563 = vld [vmem:[#allocation3 + $0x7c] sm:$0xf]
      %v2564 = vunpack.c.l.bf16 %v2532
      %v2565 = vunpack.c.l.bf16 %v2533
      %v2566 = vunpack.c.l.bf16 %v2534
      %v2567 = vunpack.c.l.bf16 %v2535
      %v2568 = vunpack.c.l.bf16 %v2536
      %v2569 = vunpack.c.l.bf16 %v2537
      %v2570 = vunpack.c.l.bf16 %v2538
      %v2571 = vunpack.c.l.bf16 %v2539
      %v2572 = vunpack.c.l.bf16 %v2540
      %v2573 = vunpack.c.l.bf16 %v2541
      %v2574 = vunpack.c.l.bf16 %v2542
      %v2575 = vunpack.c.l.bf16 %v2543
      %v2576 = vunpack.c.l.bf16 %v2544
      %v2577 = vunpack.c.l.bf16 %v2545
      %v2578 = vunpack.c.l.bf16 %v2546
      %v2579 = vunpack.c.l.bf16 %v2547
      %v2580 = vunpack.c.l.bf16 %v2548
      %v2581 = vunpack.c.l.bf16 %v2549
      %v2582 = vunpack.c.l.bf16 %v2550
      %v2583 = vunpack.c.l.bf16 %v2551
      %v2584 = vunpack.c.l.bf16 %v2552
      %v2585 = vunpack.c.l.bf16 %v2553
      %v2586 = vunpack.c.l.bf16 %v2554
      %v2587 = vunpack.c.l.bf16 %v2555
      %v2588 = vunpack.c.l.bf16 %v2556
      %v2589 = vunpack.c.l.bf16 %v2557
      %v2590 = vunpack.c.l.bf16 %v2558
      %v2591 = vunpack.c.l.bf16 %v2559
      %v2592 = vunpack.c.l.bf16 %v2560
      %v2593 = vunpack.c.l.bf16 %v2561
      %v2594 = vunpack.c.l.bf16 %v2562
      %v2595 = vunpack.c.l.bf16 %v2563
      %v2597 = vlaneseq
      %v2598 = vshrl.u32 %v2597, 7
      %v2599 = vsub.s32 0, %v2598
      %v2600 = vrot.slane %v2525, %v2599
      %v2602 = vmul.f32 %v2564, %v2600
      %v2603 = vmul.f32 %v2565, %v2600
      %v2604 = vmul.f32 %v2566, %v2600
      %v2605 = vmul.f32 %v2567, %v2600
      %v2606 = vmul.f32 %v2568, %v2600
      %v2607 = vmul.f32 %v2569, %v2600
      %v2608 = vmul.f32 %v2570, %v2600
      %v2609 = vmul.f32 %v2571, %v2600
      %v2610 = vmul.f32 %v2572, %v2600
      %v2611 = vmul.f32 %v2573, %v2600
      %v2612 = vmul.f32 %v2574, %v2600
      %v2613 = vmul.f32 %v2575, %v2600
      %v2614 = vmul.f32 %v2576, %v2600
      %v2615 = vmul.f32 %v2577, %v2600
      %v2616 = vmul.f32 %v2578, %v2600
      %v2617 = vmul.f32 %v2579, %v2600
      %v2618 = vmul.f32 %v2580, %v2600
      %v2619 = vmul.f32 %v2581, %v2600
      %v2620 = vmul.f32 %v2582, %v2600
      %v2621 = vmul.f32 %v2583, %v2600
      %v2622 = vmul.f32 %v2584, %v2600
      %v2623 = vmul.f32 %v2585, %v2600
      %v2624 = vmul.f32 %v2586, %v2600
      %v2625 = vmul.f32 %v2587, %v2600
      %v2626 = vmul.f32 %v2588, %v2600
      %v2627 = vmul.f32 %v2589, %v2600
      %v2628 = vmul.f32 %v2590, %v2600
      %v2629 = vmul.f32 %v2591, %v2600
      %v2630 = vmul.f32 %v2592, %v2600
      %v2631 = vmul.f32 %v2593, %v2600
      %v2632 = vmul.f32 %v2594, %v2600
      %v2633 = vmul.f32 %v2595, %v2600
      %v2635 = vlaneseq
      %v2636 = vshrl.u32 %v2635, 7
      %v2637 = vsub.s32 0, %v2636
      %v2638 = vrot.slane %v2528, %v2637
      %v2640 = vadd.f32 %v2602, %v2638
      %v2641 = vadd.f32 %v2603, %v2638
      %v2642 = vadd.f32 %v2604, %v2638
      %v2643 = vadd.f32 %v2605, %v2638
      %v2644 = vadd.f32 %v2606, %v2638
      %v2645 = vadd.f32 %v2607, %v2638
      %v2646 = vadd.f32 %v2608, %v2638
      %v2647 = vadd.f32 %v2609, %v2638
      %v2648 = vadd.f32 %v2610, %v2638
      %v2649 = vadd.f32 %v2611, %v2638
      %v2650 = vadd.f32 %v2612, %v2638
      %v2651 = vadd.f32 %v2613, %v2638
      %v2652 = vadd.f32 %v2614, %v2638
      %v2653 = vadd.f32 %v2615, %v2638
      %v2654 = vadd.f32 %v2616, %v2638
      %v2655 = vadd.f32 %v2617, %v2638
      %v2656 = vadd.f32 %v2618, %v2638
      %v2657 = vadd.f32 %v2619, %v2638
      %v2658 = vadd.f32 %v2620, %v2638
      %v2659 = vadd.f32 %v2621, %v2638
      %v2660 = vadd.f32 %v2622, %v2638
      %v2661 = vadd.f32 %v2623, %v2638
      %v2662 = vadd.f32 %v2624, %v2638
      %v2663 = vadd.f32 %v2625, %v2638
      %v2664 = vadd.f32 %v2626, %v2638
      %v2665 = vadd.f32 %v2627, %v2638
      %v2666 = vadd.f32 %v2628, %v2638
      %v2667 = vadd.f32 %v2629, %v2638
      %v2668 = vadd.f32 %v2630, %v2638
      %v2669 = vadd.f32 %v2631, %v2638
      %v2670 = vadd.f32 %v2632, %v2638
      %v2671 = vadd.f32 %v2633, %v2638
      %v2672 = vpack.c.bf16 %v2641, %v2640
      %v2673 = vpack.c.bf16 %v2643, %v2642
      %v2674 = vpack.c.bf16 %v2645, %v2644
      %v2675 = vpack.c.bf16 %v2647, %v2646
      %v2676 = vpack.c.bf16 %v2649, %v2648
      %v2677 = vpack.c.bf16 %v2651, %v2650
      %v2678 = vpack.c.bf16 %v2653, %v2652
      %v2679 = vpack.c.bf16 %v2655, %v2654
      %v2680 = vpack.c.bf16 %v2657, %v2656
      %v2681 = vpack.c.bf16 %v2659, %v2658
      %v2682 = vpack.c.bf16 %v2661, %v2660
      %v2683 = vpack.c.bf16 %v2663, %v2662
      %v2684 = vpack.c.bf16 %v2665, %v2664
      %v2685 = vpack.c.bf16 %v2667, %v2666
      %v2686 = vpack.c.bf16 %v2669, %v2668
      %v2687 = vpack.c.bf16 %v2671, %v2670
      %v2688 = vld [vmem:[%s4] sm:$0x3]
      %v2690 = vlaneseq
      %v2691 = vshrl.u32 %v2690, 7
      %v2692 = vsub.s32 0, %v2691
      %v2693 = vrot.slane %v2529, %v2692
      %v2696 = vsel %vm334, %v2672, 0
      %v2699 = vsel %vm334, %v2673, 0
      %v2702 = vsel %vm334, %v2674, 0
      %v2705 = vsel %vm334, %v2675, 0
      %v2708 = vsel %vm334, %v2676, 0
      %v2711 = vsel %vm334, %v2677, 0
      %v2714 = vsel %vm334, %v2678, 0
      %v2717 = vsel %vm334, %v2679, 0
      %v2720 = vsel %vm334, %v2680, 0
      %v2723 = vsel %vm334, %v2681, 0
      %v2726 = vsel %vm334, %v2682, 0
      %v2729 = vsel %vm334, %v2683, 0
      %v2732 = vsel %vm334, %v2684, 0
      %v2735 = vsel %vm334, %v2685, 0
      %v2738 = vsel %vm334, %v2686, 0
      %v2741 = vsel %vm334, %v2687, 0
      %vm2743 = vcmask 1041408
      %v2745 = vsel %vm2743, %v2688, 0
      %2747 = vmatprep.subr.bf16.mxu0 0
      %2748 = vmatpush1.bf16.msra.mxu0 0
      %2749 = vmatprep.subr.bf16.mxu0 0
      %2750 = vmatpush1.bf16.msra.mxu0 0
      %2751 = vmatprep.subr.bf16.mxu0 0
      %2752 = vmatpush1.bf16.msra.mxu0 0
      %2753 = vmatprep.subr.bf16.mxu0 0
      %2754 = vmatpush1.bf16.msra.mxu0 0
      %2755 = vmatprep.subr.bf16.mxu0 0
      %2756 = vmatpush1.bf16.msra.mxu0 0
      %2757 = vmatprep.subr.bf16.mxu0 0
      %2758 = vmatpush1.bf16.msra.mxu0 0
      %2759 = vmatprep.subr.bf16.mxu0 0
      %2760 = vmatpush1.bf16.msra.mxu0 0
      %2761 = vmatprep.subr.bf16.mxu0 0
      %2762 = vmatpush1.bf16.msra.mxu0 %v2745
      %2763 = vmatprep.subr.bf16.mxu0 0
      %2764 = vmatpush2.bf16.msra.mxu0 0
      %2765 = vmatprep.subr.bf16.mxu0 0
      %2766 = vmatpush2.bf16.msra.mxu0 0
      %2767 = vmatprep.subr.bf16.mxu0 0
      %2768 = vmatpush2.bf16.msra.mxu0 0
      %2769 = vmatprep.subr.bf16.mxu0 0
      %2770 = vmatpush2.bf16.msra.mxu0 0
      %2771 = vmatprep.subr.bf16.mxu0 0
      %2772 = vmatpush2.bf16.msra.mxu0 0
      %2773 = vmatprep.subr.bf16.mxu0 0
      %2774 = vmatpush2.bf16.msra.mxu0 0
      %2775 = vmatprep.subr.bf16.mxu0 0
      %2776 = vmatpush2.bf16.msra.mxu0 0
      %2777 = vmatprep.subr.bf16.mxu0 0
      %2778 = vmatpush2.bf16.msra.mxu0 0
      %2779 = vmatprep.mubr.bf16.mxu0 0
      %2780 = vmatmul.mubr.bf16.gmra.mxu0 %v2696
      %v2781 = vpop.f32.mrf.mxu0
      %v2782 = vadd.f32 %v2693, %v2781
      %v2783 = vpop.f32.mrf.mxu0
      %v2784 = vpop.f32.mrf.mxu0
      %v2785 = vadd.f32 %v2693, %v2784
      %v2786 = vpop.f32.mrf.mxu0
      %2787 = vmatprep.mubr.bf16.mxu0 0
      %2788 = vmatmul.mubr.bf16.gmra.mxu0 %v2699
      %v2789 = vpop.f32.mrf.mxu0
      %v2790 = vadd.f32 %v2693, %v2789
      %v2791 = vpop.f32.mrf.mxu0
      %v2792 = vpop.f32.mrf.mxu0
      %v2793 = vadd.f32 %v2693, %v2792
      %v2794 = vpop.f32.mrf.mxu0
      %2795 = vmatprep.mubr.bf16.mxu0 0
      %2796 = vmatmul.mubr.bf16.gmra.mxu0 %v2702
      %v2797 = vpop.f32.mrf.mxu0
      %v2798 = vadd.f32 %v2693, %v2797
      %v2799 = vpop.f32.mrf.mxu0
      %v2800 = vpop.f32.mrf.mxu0
      %v2801 = vadd.f32 %v2693, %v2800
      %v2802 = vpop.f32.mrf.mxu0
      %2803 = vmatprep.mubr.bf16.mxu0 0
      %2804 = vmatmul.mubr.bf16.gmra.mxu0 %v2705
      %v2805 = vpop.f32.mrf.mxu0
      %v2806 = vadd.f32 %v2693, %v2805
      %v2807 = vpop.f32.mrf.mxu0
      %v2808 = vpop.f32.mrf.mxu0
      %v2809 = vadd.f32 %v2693, %v2808
      %v2810 = vpop.f32.mrf.mxu0
      %2811 = vmatprep.mubr.bf16.mxu0 0
      %2812 = vmatmul.mubr.bf16.gmra.mxu0 %v2708
      %v2813 = vpop.f32.mrf.mxu0
      %v2814 = vadd.f32 %v2693, %v2813
      %v2815 = vpop.f32.mrf.mxu0
      %v2816 = vpop.f32.mrf.mxu0
      %v2817 = vadd.f32 %v2693, %v2816
      %v2818 = vpop.f32.mrf.mxu0
      %2819 = vmatprep.mubr.bf16.mxu0 0
      %2820 = vmatmul.mubr.bf16.gmra.mxu0 %v2711
      %v2821 = vpop.f32.mrf.mxu0
      %v2822 = vadd.f32 %v2693, %v2821
      %v2823 = vpop.f32.mrf.mxu0
      %v2824 = vpop.f32.mrf.mxu0
      %v2825 = vadd.f32 %v2693, %v2824
      %v2826 = vpop.f32.mrf.mxu0
      %2827 = vmatprep.mubr.bf16.mxu0 0
      %2828 = vmatmul.mubr.bf16.gmra.mxu0 %v2714
      %v2829 = vpop.f32.mrf.mxu0
      %v2830 = vadd.f32 %v2693, %v2829
      %v2831 = vpop.f32.mrf.mxu0
      %v2832 = vpop.f32.mrf.mxu0
      %v2833 = vadd.f32 %v2693, %v2832
      %v2834 = vpop.f32.mrf.mxu0
      %2835 = vmatprep.mubr.bf16.mxu0 0
      %2836 = vmatmul.mubr.bf16.gmra.mxu0 %v2717
      %v2837 = vpop.f32.mrf.mxu0
      %v2838 = vadd.f32 %v2693, %v2837
      %v2839 = vpop.f32.mrf.mxu0
      %v2840 = vpop.f32.mrf.mxu0
      %v2841 = vadd.f32 %v2693, %v2840
      %v2842 = vpop.f32.mrf.mxu0
      %2843 = vmatprep.mubr.bf16.mxu0 0
      %2844 = vmatmul.mubr.bf16.gmra.mxu0 %v2720
      %v2845 = vpop.f32.mrf.mxu0
      %v2846 = vadd.f32 %v2693, %v2845
      %v2847 = vpop.f32.mrf.mxu0
      %v2848 = vpop.f32.mrf.mxu0
      %v2849 = vadd.f32 %v2693, %v2848
      %v2850 = vpop.f32.mrf.mxu0
      %2851 = vmatprep.mubr.bf16.mxu0 0
      %2852 = vmatmul.mubr.bf16.gmra.mxu0 %v2723
      %v2853 = vpop.f32.mrf.mxu0
      %v2854 = vadd.f32 %v2693, %v2853
      %v2855 = vpop.f32.mrf.mxu0
      %v2856 = vpop.f32.mrf.mxu0
      %v2857 = vadd.f32 %v2693, %v2856
      %v2858 = vpop.f32.mrf.mxu0
      %2859 = vmatprep.mubr.bf16.mxu0 0
      %2860 = vmatmul.mubr.bf16.gmra.mxu0 %v2726
      %v2861 = vpop.f32.mrf.mxu0
      %v2862 = vadd.f32 %v2693, %v2861
      %v2863 = vpop.f32.mrf.mxu0
      %v2864 = vpop.f32.mrf.mxu0
      %v2865 = vadd.f32 %v2693, %v2864
      %v2866 = vpop.f32.mrf.mxu0
      %2867 = vmatprep.mubr.bf16.mxu0 0
      %2868 = vmatmul.mubr.bf16.gmra.mxu0 %v2729
      %v2869 = vpop.f32.mrf.mxu0
      %v2870 = vadd.f32 %v2693, %v2869
      %v2871 = vpop.f32.mrf.mxu0
      %v2872 = vpop.f32.mrf.mxu0
      %v2873 = vadd.f32 %v2693, %v2872
      %v2874 = vpop.f32.mrf.mxu0
      %2875 = vmatprep.mubr.bf16.mxu0 0
      %2876 = vmatmul.mubr.bf16.gmra.mxu0 %v2732
      %v2877 = vpop.f32.mrf.mxu0
      %v2878 = vadd.f32 %v2693, %v2877
      %v2879 = vpop.f32.mrf.mxu0
      %v2880 = vpop.f32.mrf.mxu0
      %v2881 = vadd.f32 %v2693, %v2880
      %v2882 = vpop.f32.mrf.mxu0
      %2883 = vmatprep.mubr.bf16.mxu0 0
      %2884 = vmatmul.mubr.bf16.gmra.mxu0 %v2735
      %v2885 = vpop.f32.mrf.mxu0
      %v2886 = vadd.f32 %v2693, %v2885
      %v2887 = vpop.f32.mrf.mxu0
      %v2888 = vpop.f32.mrf.mxu0
      %v2889 = vadd.f32 %v2693, %v2888
      %v2890 = vpop.f32.mrf.mxu0
      %2891 = vmatprep.mubr.bf16.mxu0 0
      %2892 = vmatmul.mubr.bf16.gmra.mxu0 %v2738
      %v2893 = vpop.f32.mrf.mxu0
      %v2894 = vadd.f32 %v2693, %v2893
      %v2895 = vpop.f32.mrf.mxu0
      %v2896 = vpop.f32.mrf.mxu0
      %v2897 = vadd.f32 %v2693, %v2896
      %v2898 = vpop.f32.mrf.mxu0
      %2899 = vmatprep.mubr.bf16.mxu0 0
      %2900 = vmatmul.mubr.bf16.gmra.mxu0 %v2741
      %v2901 = vpop.f32.mrf.mxu0
      %v2902 = vadd.f32 %v2693, %v2901
      %v2903 = vpop.f32.mrf.mxu0
      %v2904 = vpop.f32.mrf.mxu0
      %v2905 = vadd.f32 %v2693, %v2904
      %v2906 = vpop.f32.mrf.mxu0
      %2907 = vdwg.mxu0
      %v2908 = vmul.f32 %v2782, 0.5
      %v2909 = vmul.f32 %v2785, 0.5
      %v2910 = vmul.f32 %v2790, 0.5
      %v2911 = vmul.f32 %v2793, 0.5
      %v2912 = vmul.f32 %v2798, 0.5
      %v2913 = vmul.f32 %v2801, 0.5
      %v2914 = vmul.f32 %v2806, 0.5
      %v2915 = vmul.f32 %v2809, 0.5
      %v2916 = vmul.f32 %v2814, 0.5
      %v2917 = vmul.f32 %v2817, 0.5
      %v2918 = vmul.f32 %v2822, 0.5
      %v2919 = vmul.f32 %v2825, 0.5
      %v2920 = vmul.f32 %v2830, 0.5
      %v2921 = vmul.f32 %v2833, 0.5
      %v2922 = vmul.f32 %v2838, 0.5
      %v2923 = vmul.f32 %v2841, 0.5
      %v2924 = vmul.f32 %v2846, 0.5
      %v2925 = vmul.f32 %v2849, 0.5
      %v2926 = vmul.f32 %v2854, 0.5
      %v2927 = vmul.f32 %v2857, 0.5
      %v2928 = vmul.f32 %v2862, 0.5
      %v2929 = vmul.f32 %v2865, 0.5
      %v2930 = vmul.f32 %v2870, 0.5
      %v2931 = vmul.f32 %v2873, 0.5
      %v2932 = vmul.f32 %v2878, 0.5
      %v2933 = vmul.f32 %v2881, 0.5
      %v2934 = vmul.f32 %v2886, 0.5
      %v2935 = vmul.f32 %v2889, 0.5
      %v2936 = vmul.f32 %v2894, 0.5
      %v2937 = vmul.f32 %v2897, 0.5
      %v2938 = vmul.f32 %v2902, 0.5
      %v2939 = vmul.f32 %v2905, 0.5
      %v2940 = vmul.f32 %v2782, 0.70710677
      %v2941 = vmul.f32 %v2785, 0.70710677
      %v2942 = vmul.f32 %v2790, 0.70710677
      %v2943 = vmul.f32 %v2793, 0.70710677
      %v2944 = vmul.f32 %v2798, 0.70710677
      %v2945 = vmul.f32 %v2801, 0.70710677
      %v2946 = vmul.f32 %v2806, 0.70710677
      %v2947 = vmul.f32 %v2809, 0.70710677
      %v2948 = vmul.f32 %v2814, 0.70710677
      %v2949 = vmul.f32 %v2817, 0.70710677
      %v2950 = vmul.f32 %v2822, 0.70710677
      %v2951 = vmul.f32 %v2825, 0.70710677
      %v2952 = vmul.f32 %v2830, 0.70710677
      %v2953 = vmul.f32 %v2833, 0.70710677
      %v2954 = vmul.f32 %v2838, 0.70710677
      %v2955 = vmul.f32 %v2841, 0.70710677
      %v2956 = vmul.f32 %v2846, 0.70710677
      %v2957 = vmul.f32 %v2849, 0.70710677
      %v2958 = vmul.f32 %v2854, 0.70710677
      %v2959 = vmul.f32 %v2857, 0.70710677
      %v2960 = vmul.f32 %v2862, 0.70710677
      %v2961 = vmul.f32 %v2865, 0.70710677
      %v2962 = vmul.f32 %v2870, 0.70710677
      %v2963 = vmul.f32 %v2873, 0.70710677
      %v2964 = vmul.f32 %v2878, 0.70710677
      %v2965 = vmul.f32 %v2881, 0.70710677
      %v2966 = vmul.f32 %v2886, 0.70710677
      %v2967 = vmul.f32 %v2889, 0.70710677
      %v2968 = vmul.f32 %v2894, 0.70710677
      %v2969 = vmul.f32 %v2897, 0.70710677
      %v2970 = vmul.f32 %v2902, 0.70710677
      %v2971 = vmul.f32 %v2905, 0.70710677
      %v2972 = verf.f32.pop %v2940
      %v2973 = verf.f32.pop %v2941
      %v2974 = verf.f32.pop %v2942
      %v2975 = verf.f32.pop %v2943
      %v2976 = verf.f32.pop %v2944
      %v2977 = verf.f32.pop %v2945
      %v2978 = verf.f32.pop %v2946
      %v2979 = verf.f32.pop %v2947
      %v2980 = verf.f32.pop %v2948
      %v2981 = verf.f32.pop %v2949
      %v2982 = verf.f32.pop %v2950
      %v2983 = verf.f32.pop %v2951
      %v2984 = verf.f32.pop %v2952
      %v2985 = verf.f32.pop %v2953
      %v2986 = verf.f32.pop %v2954
      %v2987 = verf.f32.pop %v2955
      %v2988 = verf.f32.pop %v2956
      %v2989 = verf.f32.pop %v2957
      %v2990 = verf.f32.pop %v2958
      %v2991 = verf.f32.pop %v2959
      %v2992 = verf.f32.pop %v2960
      %v2993 = verf.f32.pop %v2961
      %v2994 = verf.f32.pop %v2962
      %v2995 = verf.f32.pop %v2963
      %v2996 = verf.f32.pop %v2964
      %v2997 = verf.f32.pop %v2965
      %v2998 = verf.f32.pop %v2966
      %v2999 = verf.f32.pop %v2967
      %v3000 = verf.f32.pop %v2968
      %v3001 = verf.f32.pop %v2969
      %v3002 = verf.f32.pop %v2970
      %v3003 = verf.f32.pop %v2971
      %v3004 = vadd.f32 %v2972, 1.0
      %v3005 = vadd.f32 %v2973, 1.0
      %v3006 = vadd.f32 %v2974, 1.0
      %v3007 = vadd.f32 %v2975, 1.0
      %v3008 = vadd.f32 %v2976, 1.0
      %v3009 = vadd.f32 %v2977, 1.0
      %v3010 = vadd.f32 %v2978, 1.0
      %v3011 = vadd.f32 %v2979, 1.0
      %v3012 = vadd.f32 %v2980, 1.0
      %v3013 = vadd.f32 %v2981, 1.0
      %v3014 = vadd.f32 %v2982, 1.0
      %v3015 = vadd.f32 %v2983, 1.0
      %v3016 = vadd.f32 %v2984, 1.0
      %v3017 = vadd.f32 %v2985, 1.0
      %v3018 = vadd.f32 %v2986, 1.0
      %v3019 = vadd.f32 %v2987, 1.0
      %v3020 = vadd.f32 %v2988, 1.0
      %v3021 = vadd.f32 %v2989, 1.0
      %v3022 = vadd.f32 %v2990, 1.0
      %v3023 = vadd.f32 %v2991, 1.0
      %v3024 = vadd.f32 %v2992, 1.0
      %v3025 = vadd.f32 %v2993, 1.0
      %v3026 = vadd.f32 %v2994, 1.0
      %v3027 = vadd.f32 %v2995, 1.0
      %v3028 = vadd.f32 %v2996, 1.0
      %v3029 = vadd.f32 %v2997, 1.0
      %v3030 = vadd.f32 %v2998, 1.0
      %v3031 = vadd.f32 %v2999, 1.0
      %v3032 = vadd.f32 %v3000, 1.0
      %v3033 = vadd.f32 %v3001, 1.0
      %v3034 = vadd.f32 %v3002, 1.0
      %v3035 = vadd.f32 %v3003, 1.0
      %v3036 = vmul.f32 %v2908, %v3004
      %v3037 = vmul.f32 %v2909, %v3005
      %v3038 = vmul.f32 %v2910, %v3006
      %v3039 = vmul.f32 %v2911, %v3007
      %v3040 = vmul.f32 %v2912, %v3008
      %v3041 = vmul.f32 %v2913, %v3009
      %v3042 = vmul.f32 %v2914, %v3010
      %v3043 = vmul.f32 %v2915, %v3011
      %v3044 = vmul.f32 %v2916, %v3012
      %v3045 = vmul.f32 %v2917, %v3013
      %v3046 = vmul.f32 %v2918, %v3014
      %v3047 = vmul.f32 %v2919, %v3015
      %v3048 = vmul.f32 %v2920, %v3016
      %v3049 = vmul.f32 %v2921, %v3017
      %v3050 = vmul.f32 %v2922, %v3018
      %v3051 = vmul.f32 %v2923, %v3019
      %v3052 = vmul.f32 %v2924, %v3020
      %v3053 = vmul.f32 %v2925, %v3021
      %v3054 = vmul.f32 %v2926, %v3022
      %v3055 = vmul.f32 %v2927, %v3023
      %v3056 = vmul.f32 %v2928, %v3024
      %v3057 = vmul.f32 %v2929, %v3025
      %v3058 = vmul.f32 %v2930, %v3026
      %v3059 = vmul.f32 %v2931, %v3027
      %v3060 = vmul.f32 %v2932, %v3028
      %v3061 = vmul.f32 %v2933, %v3029
      %v3062 = vmul.f32 %v2934, %v3030
      %v3063 = vmul.f32 %v2935, %v3031
      %v3064 = vmul.f32 %v2936, %v3032
      %v3065 = vmul.f32 %v2937, %v3033
      %v3066 = vmul.f32 %v2938, %v3034
      %v3067 = vmul.f32 %v2939, %v3035
      %v3068 = vpack.c.bf16 %v3037, %v3036
      %v3069 = vpack.c.bf16 %v3039, %v3038
      %v3070 = vpack.c.bf16 %v3041, %v3040
      %v3071 = vpack.c.bf16 %v3043, %v3042
      %v3072 = vpack.c.bf16 %v3045, %v3044
      %v3073 = vpack.c.bf16 %v3047, %v3046
      %v3074 = vpack.c.bf16 %v3049, %v3048
      %v3075 = vpack.c.bf16 %v3051, %v3050
      %v3076 = vpack.c.bf16 %v3053, %v3052
      %v3077 = vpack.c.bf16 %v3055, %v3054
      %v3078 = vpack.c.bf16 %v3057, %v3056
      %v3079 = vpack.c.bf16 %v3059, %v3058
      %v3080 = vpack.c.bf16 %v3061, %v3060
      %v3081 = vpack.c.bf16 %v3063, %v3062
      %v3082 = vpack.c.bf16 %v3065, %v3064
      %v3083 = vpack.c.bf16 %v3067, %v3066
      %v3084 = vld [vmem:[%s6] sm:$0xf]
      %v3085 = vld [vmem:[%s6 + $0x4] sm:$0xf]
      %v3087 = vlaneseq
      %v3088 = vshrl.u32 %v3087, 7
      %v3089 = vsub.s32 0, %v3088
      %v3090 = vrot.slane %v2530, %v3089
      %v3094 = vunpack.c.l.b16 %v3084
      %v3095 = vunpack.c.l.b16 %v3085
      %v3096 = vpack.c.b16 %v3095, %v3094
      %vm3098 = vcmask 130048
      %v3100 = vsel %vm3098, %v3068, 0
      %v3103 = vsel %vm3098, %v3069, 0
      %v3106 = vsel %vm3098, %v3070, 0
      %v3109 = vsel %vm3098, %v3071, 0
      %v3112 = vsel %vm3098, %v3072, 0
      %v3115 = vsel %vm3098, %v3073, 0
      %v3118 = vsel %vm3098, %v3074, 0
      %v3121 = vsel %vm3098, %v3075, 0
      %v3124 = vsel %vm3098, %v3076, 0
      %v3127 = vsel %vm3098, %v3077, 0
      %v3130 = vsel %vm3098, %v3078, 0
      %v3133 = vsel %vm3098, %v3079, 0
      %v3136 = vsel %vm3098, %v3080, 0
      %v3139 = vsel %vm3098, %v3081, 0
      %v3142 = vsel %vm3098, %v3082, 0
      %v3145 = vsel %vm3098, %v3083, 0
      %3147 = vmatprep.subr.bf16.mxu0 0
      %3148 = vmatpush1.bf16.msra.mxu0 0
      %3149 = vmatprep.subr.bf16.mxu0 0
      %3150 = vmatpush1.bf16.msra.mxu0 0
      %3151 = vmatprep.subr.bf16.mxu0 0
      %3152 = vmatpush1.bf16.msra.mxu0 0
      %3153 = vmatprep.subr.bf16.mxu0 0
      %3154 = vmatpush1.bf16.msra.mxu0 0
      %3155 = vmatprep.subr.bf16.mxu0 0
      %3156 = vmatpush1.bf16.msra.mxu0 0
      %3157 = vmatprep.subr.bf16.mxu0 0
      %3158 = vmatpush1.bf16.msra.mxu0 0
      %3159 = vmatprep.subr.bf16.mxu0 0
      %3160 = vmatpush1.bf16.msra.mxu0 0
      %3161 = vmatprep.subr.bf16.mxu0 0
      %3162 = vmatpush1.bf16.msra.mxu0 %v3096
      %3163 = vmatprep.subr.bf16.mxu0 0
      %3164 = vmatpush2.bf16.msra.mxu0 0
      %3165 = vmatprep.subr.bf16.mxu0 0
      %3166 = vmatpush2.bf16.msra.mxu0 0
      %3167 = vmatprep.subr.bf16.mxu0 0
      %3168 = vmatpush2.bf16.msra.mxu0 0
      %3169 = vmatprep.subr.bf16.mxu0 0
      %3170 = vmatpush2.bf16.msra.mxu0 0
      %3171 = vmatprep.subr.bf16.mxu0 0
      %3172 = vmatpush2.bf16.msra.mxu0 0
      %3173 = vmatprep.subr.bf16.mxu0 0
      %3174 = vmatpush2.bf16.msra.mxu0 0
      %3175 = vmatprep.subr.bf16.mxu0 0
      %3176 = vmatpush2.bf16.msra.mxu0 0
      %3177 = vmatprep.subr.bf16.mxu0 0
      %3178 = vmatpush2.bf16.msra.mxu0 0
      %3179 = vmatprep.mubr.bf16.mxu0 0
      %3180 = vmatmul.mubr.bf16.gmra.mxu0 %v3100
      %v3181 = vpop.f32.mrf.mxu0
      %v3182 = vadd.f32 %v3090, %v3181
      %v3183 = vpop.f32.mrf.mxu0
      %v3184 = vpop.f32.mrf.mxu0
      %v3185 = vadd.f32 %v3090, %v3184
      %v3186 = vpop.f32.mrf.mxu0
      %3187 = vmatprep.mubr.bf16.mxu0 0
      %3188 = vmatmul.mubr.bf16.gmra.mxu0 %v3103
      %v3189 = vpop.f32.mrf.mxu0
      %v3190 = vadd.f32 %v3090, %v3189
      %v3191 = vpop.f32.mrf.mxu0
      %v3192 = vpop.f32.mrf.mxu0
      %v3193 = vadd.f32 %v3090, %v3192
      %v3194 = vpop.f32.mrf.mxu0
      %3195 = vmatprep.mubr.bf16.mxu0 0
      %3196 = vmatmul.mubr.bf16.gmra.mxu0 %v3106
      %v3197 = vpop.f32.mrf.mxu0
      %v3198 = vadd.f32 %v3090, %v3197
      %v3199 = vpop.f32.mrf.mxu0
      %v3200 = vpop.f32.mrf.mxu0
      %v3201 = vadd.f32 %v3090, %v3200
      %v3202 = vpop.f32.mrf.mxu0
      %3203 = vmatprep.mubr.bf16.mxu0 0
      %3204 = vmatmul.mubr.bf16.gmra.mxu0 %v3109
      %v3205 = vpop.f32.mrf.mxu0
      %v3206 = vadd.f32 %v3090, %v3205
      %v3207 = vpop.f32.mrf.mxu0
      %v3208 = vpop.f32.mrf.mxu0
      %v3209 = vadd.f32 %v3090, %v3208
      %v3210 = vpop.f32.mrf.mxu0
      %3211 = vmatprep.mubr.bf16.mxu0 0
      %3212 = vmatmul.mubr.bf16.gmra.mxu0 %v3112
      %v3213 = vpop.f32.mrf.mxu0
      %v3214 = vadd.f32 %v3090, %v3213
      %v3215 = vpop.f32.mrf.mxu0
      %v3216 = vpop.f32.mrf.mxu0
      %v3217 = vadd.f32 %v3090, %v3216
      %v3218 = vpop.f32.mrf.mxu0
      %3219 = vmatprep.mubr.bf16.mxu0 0
      %3220 = vmatmul.mubr.bf16.gmra.mxu0 %v3115
      %v3221 = vpop.f32.mrf.mxu0
      %v3222 = vadd.f32 %v3090, %v3221
      %v3223 = vpop.f32.mrf.mxu0
      %v3224 = vpop.f32.mrf.mxu0
      %v3225 = vadd.f32 %v3090, %v3224
      %v3226 = vpop.f32.mrf.mxu0
      %3227 = vmatprep.mubr.bf16.mxu0 0
      %3228 = vmatmul.mubr.bf16.gmra.mxu0 %v3118
      %v3229 = vpop.f32.mrf.mxu0
      %v3230 = vadd.f32 %v3090, %v3229
      %v3231 = vpop.f32.mrf.mxu0
      %v3232 = vpop.f32.mrf.mxu0
      %v3233 = vadd.f32 %v3090, %v3232
      %v3234 = vpop.f32.mrf.mxu0
      %3235 = vmatprep.mubr.bf16.mxu0 0
      %3236 = vmatmul.mubr.bf16.gmra.mxu0 %v3121
      %v3237 = vpop.f32.mrf.mxu0
      %v3238 = vadd.f32 %v3090, %v3237
      %v3239 = vpop.f32.mrf.mxu0
      %v3240 = vpop.f32.mrf.mxu0
      %v3241 = vadd.f32 %v3090, %v3240
      %v3242 = vpop.f32.mrf.mxu0
      %3243 = vmatprep.mubr.bf16.mxu0 0
      %3244 = vmatmul.mubr.bf16.gmra.mxu0 %v3124
      %v3245 = vpop.f32.mrf.mxu0
      %v3246 = vadd.f32 %v3090, %v3245
      %v3247 = vpop.f32.mrf.mxu0
      %v3248 = vpop.f32.mrf.mxu0
      %v3249 = vadd.f32 %v3090, %v3248
      %v3250 = vpop.f32.mrf.mxu0
      %3251 = vmatprep.mubr.bf16.mxu0 0
      %3252 = vmatmul.mubr.bf16.gmra.mxu0 %v3127
      %v3253 = vpop.f32.mrf.mxu0
      %v3254 = vadd.f32 %v3090, %v3253
      %v3255 = vpop.f32.mrf.mxu0
      %v3256 = vpop.f32.mrf.mxu0
      %v3257 = vadd.f32 %v3090, %v3256
      %v3258 = vpop.f32.mrf.mxu0
      %3259 = vmatprep.mubr.bf16.mxu0 0
      %3260 = vmatmul.mubr.bf16.gmra.mxu0 %v3130
      %v3261 = vpop.f32.mrf.mxu0
      %v3262 = vadd.f32 %v3090, %v3261
      %v3263 = vpop.f32.mrf.mxu0
      %v3264 = vpop.f32.mrf.mxu0
      %v3265 = vadd.f32 %v3090, %v3264
      %v3266 = vpop.f32.mrf.mxu0
      %3267 = vmatprep.mubr.bf16.mxu0 0
      %3268 = vmatmul.mubr.bf16.gmra.mxu0 %v3133
      %v3269 = vpop.f32.mrf.mxu0
      %v3270 = vadd.f32 %v3090, %v3269
      %v3271 = vpop.f32.mrf.mxu0
      %v3272 = vpop.f32.mrf.mxu0
      %v3273 = vadd.f32 %v3090, %v3272
      %v3274 = vpop.f32.mrf.mxu0
      %3275 = vmatprep.mubr.bf16.mxu0 0
      %3276 = vmatmul.mubr.bf16.gmra.mxu0 %v3136
      %v3277 = vpop.f32.mrf.mxu0
      %v3278 = vadd.f32 %v3090, %v3277
      %v3279 = vpop.f32.mrf.mxu0
      %v3280 = vpop.f32.mrf.mxu0
      %v3281 = vadd.f32 %v3090, %v3280
      %v3282 = vpop.f32.mrf.mxu0
      %3283 = vmatprep.mubr.bf16.mxu0 0
      %3284 = vmatmul.mubr.bf16.gmra.mxu0 %v3139
      %v3285 = vpop.f32.mrf.mxu0
      %v3286 = vadd.f32 %v3090, %v3285
      %v3287 = vpop.f32.mrf.mxu0
      %v3288 = vpop.f32.mrf.mxu0
      %v3289 = vadd.f32 %v3090, %v3288
      %v3290 = vpop.f32.mrf.mxu0
      %3291 = vmatprep.mubr.bf16.mxu0 0
      %3292 = vmatmul.mubr.bf16.gmra.mxu0 %v3142
      %v3293 = vpop.f32.mrf.mxu0
      %v3294 = vadd.f32 %v3090, %v3293
      %v3295 = vpop.f32.mrf.mxu0
      %v3296 = vpop.f32.mrf.mxu0
      %v3297 = vadd.f32 %v3090, %v3296
      %v3298 = vpop.f32.mrf.mxu0
      %3299 = vmatprep.mubr.bf16.mxu0 0
      %3300 = vmatmul.mubr.bf16.gmra.mxu0 %v3145
      %v3301 = vpop.f32.mrf.mxu0
      %v3302 = vadd.f32 %v3090, %v3301
      %v3303 = vpop.f32.mrf.mxu0
      %v3304 = vpop.f32.mrf.mxu0
      %v3305 = vadd.f32 %v3090, %v3304
      %v3306 = vpop.f32.mrf.mxu0
      %3307 = vdwg.mxu0
      %v3308 = vld [vmem:[%s354 + $0x3] sm:$0xff]
      %v3309 = vld [vmem:[%s354 + $0xb] sm:$0xff]
      %v3310 = vld [vmem:[%s354 + $0x1b] sm:$0xff]
      %v3311 = vld [vmem:[%s354 + $0x23] sm:$0xff]
      %v3312 = vld [vmem:[%s354 + $0x33] sm:$0xff]
      %v3313 = vld [vmem:[%s354 + $0x3b] sm:$0xff]
      %v3314 = vld [vmem:[%s354 + $0x4b] sm:$0xff]
      %v3315 = vld [vmem:[%s354 + $0x53] sm:$0xff]
      %v3316 = vld [vmem:[%s354 + $0x63] sm:$0xff]
      %v3317 = vld [vmem:[%s354 + $0x6b] sm:$0xff]
      %v3318 = vld [vmem:[%s354 + $0x7b] sm:$0xff]
      %v3319 = vld [vmem:[%s354 + $0x83] sm:$0xff]
      %v3320 = vld [vmem:[%s354 + $0x93] sm:$0xff]
      %v3321 = vld [vmem:[%s354 + $0x9b] sm:$0xff]
      %v3322 = vld [vmem:[%s354 + $0xab] sm:$0xff]
      %v3323 = vld [vmem:[%s354 + $0xb3] sm:$0xff]
      %v3324 = vld [vmem:[%s354 + $0xc3] sm:$0xff]
      %v3325 = vld [vmem:[%s354 + $0xcb] sm:$0xff]
      %v3326 = vld [vmem:[%s354 + $0xdb] sm:$0xff]
      %v3327 = vld [vmem:[%s354 + $0xe3] sm:$0xff]
      %v3328 = vld [vmem:[%s354 + $0xf3] sm:$0xff]
      %v3329 = vld [vmem:[%s354 + $0xfb] sm:$0xff]
      %v3330 = vld [vmem:[%s354 + $0x10b] sm:$0xff]
      %v3331 = vld [vmem:[%s354 + $0x113] sm:$0xff]
      %v3332 = vld [vmem:[%s354 + $0x123] sm:$0xff]
      %v3333 = vld [vmem:[%s354 + $0x12b] sm:$0xff]
      %v3334 = vld [vmem:[%s354 + $0x13b] sm:$0xff]
      %v3335 = vld [vmem:[%s354 + $0x143] sm:$0xff]
      %v3336 = vld [vmem:[%s354 + $0x153] sm:$0xff]
      %v3337 = vld [vmem:[%s354 + $0x15b] sm:$0xff]
      %v3338 = vld [vmem:[%s354 + $0x16b] sm:$0xff]
      %v3339 = vld [vmem:[%s354 + $0x173] sm:$0xff]
      %v3341 = vlaneseq
      %v3342 = vshrl.u32 %v3341, 7
      %v3343 = vsub.s32 0, %v3342
      %v3344 = vrot.slane %v2531, %v3343
      %v3346 = vmul.f32 %v3344, %v3182
      %v3347 = vmul.f32 %v3344, %v3185
      %v3348 = vmul.f32 %v3344, %v3190
      %v3349 = vmul.f32 %v3344, %v3193
      %v3350 = vmul.f32 %v3344, %v3198
      %v3351 = vmul.f32 %v3344, %v3201
      %v3352 = vmul.f32 %v3344, %v3206
      %v3353 = vmul.f32 %v3344, %v3209
      %v3354 = vmul.f32 %v3344, %v3214
      %v3355 = vmul.f32 %v3344, %v3217
      %v3356 = vmul.f32 %v3344, %v3222
      %v3357 = vmul.f32 %v3344, %v3225
      %v3358 = vmul.f32 %v3344, %v3230
      %v3359 = vmul.f32 %v3344, %v3233
      %v3360 = vmul.f32 %v3344, %v3238
      %v3361 = vmul.f32 %v3344, %v3241
      %v3362 = vmul.f32 %v3344, %v3246
      %v3363 = vmul.f32 %v3344, %v3249
      %v3364 = vmul.f32 %v3344, %v3254
      %v3365 = vmul.f32 %v3344, %v3257
      %v3366 = vmul.f32 %v3344, %v3262
      %v3367 = vmul.f32 %v3344, %v3265
      %v3368 = vmul.f32 %v3344, %v3270
      %v3369 = vmul.f32 %v3344, %v3273
      %v3370 = vmul.f32 %v3344, %v3278
      %v3371 = vmul.f32 %v3344, %v3281
      %v3372 = vmul.f32 %v3344, %v3286
      %v3373 = vmul.f32 %v3344, %v3289
      %v3374 = vmul.f32 %v3344, %v3294
      %v3375 = vmul.f32 %v3344, %v3297
      %v3376 = vmul.f32 %v3344, %v3302
      %v3377 = vmul.f32 %v3344, %v3305
      %v3378 = vadd.f32 %v3346, %v3308
      %v3379 = vadd.f32 %v3347, %v3309
      %v3380 = vadd.f32 %v3348, %v3310
      %v3381 = vadd.f32 %v3349, %v3311
      %v3382 = vadd.f32 %v3350, %v3312
      %v3383 = vadd.f32 %v3351, %v3313
      %v3384 = vadd.f32 %v3352, %v3314
      %v3385 = vadd.f32 %v3353, %v3315
      %v3386 = vadd.f32 %v3354, %v3316
      %v3387 = vadd.f32 %v3355, %v3317
      %v3388 = vadd.f32 %v3356, %v3318
      %v3389 = vadd.f32 %v3357, %v3319
      %v3390 = vadd.f32 %v3358, %v3320
      %v3391 = vadd.f32 %v3359, %v3321
      %v3392 = vadd.f32 %v3360, %v3322
      %v3393 = vadd.f32 %v3361, %v3323
      %v3394 = vadd.f32 %v3362, %v3324
      %v3395 = vadd.f32 %v3363, %v3325
      %v3396 = vadd.f32 %v3364, %v3326
      %v3397 = vadd.f32 %v3365, %v3327
      %v3398 = vadd.f32 %v3366, %v3328
      %v3399 = vadd.f32 %v3367, %v3329
      %v3400 = vadd.f32 %v3368, %v3330
      %v3401 = vadd.f32 %v3369, %v3331
      %v3402 = vadd.f32 %v3370, %v3332
      %v3403 = vadd.f32 %v3371, %v3333
      %v3404 = vadd.f32 %v3372, %v3334
      %v3405 = vadd.f32 %v3373, %v3335
      %v3406 = vadd.f32 %v3374, %v3336
      %v3407 = vadd.f32 %v3375, %v3337
      %v3408 = vadd.f32 %v3376, %v3338
      %v3409 = vadd.f32 %v3377, %v3339
      %3410 = vst.msk [vmem:[%s332] sm:$0xff] %vm334, %v3378
      %3411 = vst.msk [vmem:[%s332 + $0x8] sm:$0xff] %vm334, %v3379
      %3412 = vst.msk [vmem:[%s332 + $0x10] sm:$0xff] %vm334, %v3380
      %3413 = vst.msk [vmem:[%s332 + $0x18] sm:$0xff] %vm334, %v3381
      %3414 = vst.msk [vmem:[%s332 + $0x20] sm:$0xff] %vm334, %v3382
      %3415 = vst.msk [vmem:[%s332 + $0x28] sm:$0xff] %vm334, %v3383
      %3416 = vst.msk [vmem:[%s332 + $0x30] sm:$0xff] %vm334, %v3384
      %3417 = vst.msk [vmem:[%s332 + $0x38] sm:$0xff] %vm334, %v3385
      %3418 = vst.msk [vmem:[%s332 + $0x40] sm:$0xff] %vm334, %v3386
      %3419 = vst.msk [vmem:[%s332 + $0x48] sm:$0xff] %vm334, %v3387
      %3420 = vst.msk [vmem:[%s332 + $0x50] sm:$0xff] %vm334, %v3388
      %3421 = vst.msk [vmem:[%s332 + $0x58] sm:$0xff] %vm334, %v3389
      %3422 = vst.msk [vmem:[%s332 + $0x60] sm:$0xff] %vm334, %v3390
      %3423 = vst.msk [vmem:[%s332 + $0x68] sm:$0xff] %vm334, %v3391
      %3424 = vst.msk [vmem:[%s332 + $0x70] sm:$0xff] %vm334, %v3392
      %3425 = vst.msk [vmem:[%s332 + $0x78] sm:$0xff] %vm334, %v3393
      %3426 = vst.msk [vmem:[%s332 + $0x80] sm:$0xff] %vm334, %v3394
      %3427 = vst.msk [vmem:[%s332 + $0x88] sm:$0xff] %vm334, %v3395
      %3428 = vst.msk [vmem:[%s332 + $0x90] sm:$0xff] %vm334, %v3396
      %3429 = vst.msk [vmem:[%s332 + $0x98] sm:$0xff] %vm334, %v3397
      %3430 = vst.msk [vmem:[%s332 + $0xa0] sm:$0xff] %vm334, %v3398
      %3431 = vst.msk [vmem:[%s332 + $0xa8] sm:$0xff] %vm334, %v3399
      %3432 = vst.msk [vmem:[%s332 + $0xb0] sm:$0xff] %vm334, %v3400
      %3433 = vst.msk [vmem:[%s332 + $0xb8] sm:$0xff] %vm334, %v3401
      %3434 = vst.msk [vmem:[%s332 + $0xc0] sm:$0xff] %vm334, %v3402
      %3435 = vst.msk [vmem:[%s332 + $0xc8] sm:$0xff] %vm334, %v3403
      %3436 = vst.msk [vmem:[%s332 + $0xd0] sm:$0xff] %vm334, %v3404
      %3437 = vst.msk [vmem:[%s332 + $0xd8] sm:$0xff] %vm334, %v3405
      %3438 = vst.msk [vmem:[%s332 + $0xe0] sm:$0xff] %vm334, %v3406
      %3439 = vst.msk [vmem:[%s332 + $0xe8] sm:$0xff] %vm334, %v3407
      %3440 = vst.msk [vmem:[%s332 + $0xf0] sm:$0xff] %vm334, %v3408
      %3441 = vst.msk [vmem:[%s332 + $0xf8] sm:$0xff] %vm334, %v3409
      %p3442 = scmp.lt.s32.totalorder %s20, 1
      %s3443 = scalar_select %p3442, %s20, 1
      %s3444 = smul.addr %s3443, 32
      %s3445 = smul.addr %s3444, 8
      %s3446 = scalar_lea.vmem %s9, %s3445
      // Predicated region
      $region64: #{tpu_custom_call.1} parent=55 // pred_check
        %p3447 = pneg %p232
      $region65: #{tpu_custom_call.1} parent=55 // pred_check_branch
        %3449 = sbr.rel (%p3447) target = $region67
      $region66: #{tpu_custom_call.1} parent=55 // pred_region
        _
      $region67: #{tpu_custom_call.1} parent=55 // pred_fallthru
        _
    $region56: #{tpu_custom_call.1} parent=5 // pred_fallthru
      _
    %p3450 = scmp.le.s32.totalorder 2, %s15
    // Predicated region
    $region68: #{tpu_custom_call.1} parent=5 // pred_check
      %p3451 = pneg %p3450
    $region69: #{tpu_custom_call.1} parent=5 // pred_check_branch
      %3453 = sbr.rel (%p3451) target = $region71
    $region70: #{tpu_custom_call.1} parent=5 // pred_region
      %s3454 = ssub.s32 %s15, 2
      // Predicated region
      $region72: #{tpu_custom_call.1} parent=70 // pred_check
        %p3455 = pneg %p238
      $region73: #{tpu_custom_call.1} parent=70 // pred_check_branch
        %3457 = sbr.rel (%p3455) target = $region75
      $region74: #{tpu_custom_call.1} parent=70 // pred_region
        %p3458 = scmp.lt.s32.totalorder %s21, 1
        %s3459 = scalar_select %p3458, %s21, 1
        %s3460 = smul.addr %s3459, 32
        %s3461 = smul.addr %s3460, 8
        %s3462 = scalar_lea.vmem %s9, %s3461
      $region75: #{tpu_custom_call.1} parent=70 // pred_fallthru
        _
    $region71: #{tpu_custom_call.1} parent=5 // pred_fallthru
      _
  $region6: #{tpu_custom_call.1} parent=0 // loop_footer
    %s19 = sadd.s32 1, %s15
  $region7: #{tpu_custom_call.1} parent=0 // loop_footer_branch
    %14 = sbr.rel target = $region3
  $region8: #{tpu_custom_call.1} parent=0 // loop_exit
    _

</llo_original>
